<compile_context>
chip_gen: v5e
topology: v5e:2x2
jax: 0.10.0
libtpu: 0.0.40
codegen_flags: <defaults>
</compile_context>

<pallas_src>
import functools
import math

import jax
import jax.numpy as jnp
from jax.experimental import pallas as pl
from jax.experimental.pallas import tpu as pltpu


def _silu(x):
    return x * jax.nn.sigmoid(x)


def _default_bf16_eup():
    """bf16 transcendental path exists on v6e/v7x; keep f32 on v5e/v4/older."""
    try:
        kind = jax.devices()[0].device_kind.lower()
    except Exception:
        return True
    return not any(t in kind for t in ("v2", "v3", "v4", "v5 lite", "v5lite", "v5e"))


# ---------------- Kernel 1: fused projection + OffsetScale + RoPE -------------

def proj_rope_kernel(x_ref, w_ref, b_ref, gq_ref, bq_ref, gk_ref, bk_ref,
                     cos_ref, sin_ref,
                     q_ref, k_ref, v_ref, u_ref, *, hidden_dim, d_k, bf16_act):
    x = x_ref[0].astype(jnp.bfloat16)                           # (Tt, F)

    # One wide MXU pass for to_gate | to_v | to_qk (bf16 operands, f32 acc).
    proj = jnp.dot(x, w_ref[...], preferred_element_type=jnp.float32) + b_ref[...]

    # Swish.  On v6e/v7x the EUP has a bf16 path -> halve the transcendental
    # pushes over the full (Tt, 2H+d_k) tile; u/v are stored bf16 anyway.
    if bf16_act:
        act = _silu(proj.astype(jnp.bfloat16))                  # bf16
    else:
        act = _silu(proj)                                       # f32 (v5e path)

    u = act[:, :hidden_dim]                                     # gate     (Tt, H)
    v = act[:, hidden_dim:2 * hidden_dim]                       # value    (Tt, H)
    qk = act[:, 2 * hidden_dim:].astype(jnp.float32)            # shared qk(Tt, d_k)

    # OffsetScale in f32; the q-side gamma/beta already carry 1/sqrt(d_k).
    q = qk * gq_ref[...] + bq_ref[...]
    k = qk * gk_ref[...] + bk_ref[...]

    # Rotate-half RoPE: qk columns were de-interleaved offline (even lanes
    # first), so RoPE is t*cos + roll(t, d_k/2)*sin_signed — one XLU roll,
    # no iota/select.
    cos = cos_ref[...]
    sin = sin_ref[...]

    def rope(t):
        return t * cos + pltpu.roll(t, shift=d_k // 2, axis=1) * sin

    q_ref[0] = rope(q).astype(q_ref.dtype)
    k_ref[0] = rope(k).astype(k_ref.dtype)
    v_ref[0] = v.astype(v_ref.dtype)
    u_ref[0] = u.astype(u_ref.dtype)


# ------- Kernel 2: flash attention + GAU gating + output projection -----------

def flash_gau_kernel(q_ref, k_ref, v_ref, u_ref, wo_ref, bo_ref, o_ref,
                     m_sc, l_sc, acc_sc, *, bf16_exp):
    ki = pl.program_id(2)

    @pl.when(ki == 0)
    def _():
        m_sc[...] = jnp.full_like(m_sc, -jnp.inf)
        l_sc[...] = jnp.zeros_like(l_sc)
        acc_sc[...] = jnp.zeros_like(acc_sc)

    q = q_ref[0]                                                # (Tq, d_k) bf16
    k = k_ref[0]                                                # (Tk, d_k) bf16
    # scores = q @ k.T (f32 acc); 1/sqrt(d_k) is pre-folded into gamma_q/beta_q.
    s = jax.lax.dot_general(q, k, (((1,), (1,)), ((), ())),
                            preferred_element_type=jnp.float32)  # (Tq, Tk)

    m_prev = m_sc[...]
    m_new = jnp.maximum(m_prev, jnp.max(s, axis=-1, keepdims=True))
    alpha = jnp.exp(m_prev - m_new)                              # (Tq, 1) f32

    # exp of the (Tq, Tk) tile: bf16 on v6e/v7x (p feeds a bf16 matmul anyway);
    # the row-sum and the accumulators stay f32 so the denominator cannot drift.
    if bf16_exp:
        p = jnp.exp((s - m_new).astype(jnp.bfloat16))            # bf16
    else:
        p = jnp.exp(s - m_new).astype(jnp.bfloat16)              # f32 exp (v5e)

    l_sc[...] = alpha * l_sc[...] + jnp.sum(p.astype(jnp.float32),
                                            axis=-1, keepdims=True)
    acc_sc[...] = alpha * acc_sc[...] + jnp.dot(
        p, v_ref[0], preferred_element_type=jnp.float32)
    m_sc[...] = m_new

    @pl.when(ki == pl.num_programs(2) - 1)
    def _():
        # Normalize after attn@v: (Tq, H) multiply, reciprocal on the EUP slot.
        ctx = acc_sc[...] * pl.reciprocal(l_sc[...], approx=True)
        gated = u_ref[0].astype(jnp.float32) * ctx               # GAU gate
        out = jnp.dot(gated.astype(jnp.bfloat16), wo_ref[...],
                      preferred_element_type=jnp.float32) + bo_ref[...]
        o_ref[0] = out.astype(o_ref.dtype)


# ---------------------------------- Wrapper -----------------------------------

def rope_gau_pallas(x, pos_emb, params, *, t_proj=256, tq=256, tk=256,
                    bf16_eup=None):
    """x: (B, T, n_feat) f32; pos_emb: (T, d_k) = [sin | cos] halves."""
    B, T, F = x.shape
    H = params["wg"].shape[1]
    d_k = params["wqk"].shape[1]
    t_proj, tq, tk = min(t_proj, T), min(tq, T), min(tk, T)
    assert T % t_proj == 0 and T % tq == 0 and T % tk == 0, "T must tile evenly"
    assert d_k % 2 == 0
    if bf16_eup is None:
        bf16_eup = _default_bf16_eup()

    f32, bf16 = jnp.float32, jnp.bfloat16
    mib = 1024 * 1024

    def vmem_limit(nbytes):
        # Raise the scoped-VMEM limit only as far as the footprint needs, with
        # headroom for compiler temporaries; never request all of v7x's 64 MiB.
        return int(min(max(int(nbytes * 1.5), 32 * mib), 48 * mib))

    # --- host-side parameter prep (plain JAX glue) ---------------------------
    # De-interleave qk columns: P = [0,2,4,...,1,3,5,...].  Since q and k share
    # the permutation, scores = qP (kP)^T == q k^T, so this is exact; it turns
    # interleaved RoPE into rotate-half.  (Not applied to v / output proj.)
    perm = jnp.concatenate([jnp.arange(0, d_k, 2), jnp.arange(1, d_k, 2)])
    inv_scale = 1.0 / math.sqrt(d_k)          # AttentionNormalize: scores/sqrt(d_k)
    wqk_p = params["wqk"][:, perm]
    bqk_p = params["bqk"][:, perm]
    gq = (params["gamma_q"][:, perm] * inv_scale).astype(f32)   # fold scale into q
    bq = (params["beta_q"][:, perm] * inv_scale).astype(f32)
    gk = params["gamma_k"][:, perm].astype(f32)
    bk = params["beta_k"][:, perm].astype(f32)

    # Fused projection weight [to_gate | to_v | to_qk] -> one (F, 2H+d_k) matmul.
    P_out = 2 * H + d_k
    w_fused = jnp.concatenate([params["wg"], params["wv"], wqk_p], axis=1).astype(bf16)
    b_fused = jnp.concatenate([params["bg"], params["bv"], bqk_p], axis=1).astype(f32)
    wo = params["wo"].astype(bf16)
    bo = params["bo"].astype(f32)

    # Rotate-half cos/sin tables in the permuted column order.
    sin, cos = jnp.split(pos_emb.astype(f32), 2, axis=-1)        # (T, d_k//2) each
    cos2 = jnp.concatenate([cos, cos], axis=-1)                  # (T, d_k)
    sin2 = jnp.concatenate([-sin, sin], axis=-1)                 # (T, d_k)

    # --- kernel 1: projections + RoPE ----------------------------------------
    nT = T // t_proj
    proj_cost = pl.CostEstimate(
        flops=int(2 * B * T * F * P_out),
        transcendentals=int(B * T * P_out),
        bytes_accessed=int(B * T * F * 4 + F * P_out * 2
                           + B * T * (2 * d_k + 2 * H) * 2))
    proj_foot = (2 * (t_proj * F * 4                 # x tile (f32, dbl-buffered)
                      + F * P_out * 2 + P_out * 4    # fused W / bias
                      + 4 * d_k * 4                  # gamma/beta
                      + 2 * t_proj * d_k * 4         # cos / sin tiles
                      + 2 * t_proj * d_k * 2         # q, k output tiles
                      + 2 * t_proj * H * 2)          # v, u output tiles
                 + t_proj * P_out * 4)               # activation temporary
    proj_grid = pltpu.PrefetchScalarGridSpec(
        num_scalar_prefetch=0,
        grid=(B, nT),
        in_specs=[
            pl.BlockSpec((1, t_proj, F), lambda b, t: (b, t, 0)),   # x tile
            # Constant-index blocks below are fetched once and stay resident.
            pl.BlockSpec((F, P_out), lambda b, t: (0, 0)),          # fused W (bf16)
            pl.BlockSpec((1, P_out), lambda b, t: (0, 0)),          # fused bias
            pl.BlockSpec((1, d_k), lambda b, t: (0, 0)),            # gamma_q*scale
            pl.BlockSpec((1, d_k), lambda b, t: (0, 0)),            # beta_q*scale
            pl.BlockSpec((1, d_k), lambda b, t: (0, 0)),            # gamma_k
            pl.BlockSpec((1, d_k), lambda b, t: (0, 0)),            # beta_k
            pl.BlockSpec((t_proj, d_k), lambda b, t: (t, 0)),       # cos (rot-half)
            pl.BlockSpec((t_proj, d_k), lambda b, t: (t, 0)),       # sin (signed)
        ],
        out_specs=[
            pl.BlockSpec((1, t_proj, d_k), lambda b, t: (b, t, 0)),  # q (bf16)
            pl.BlockSpec((1, t_proj, d_k), lambda b, t: (b, t, 0)),  # k (bf16)
            pl.BlockSpec((1, t_proj, H), lambda b, t: (b, t, 0)),    # v (bf16)
            pl.BlockSpec((1, t_proj, H), lambda b, t: (b, t, 0)),    # u (bf16 gate)
        ],
    )
    q, k, v, u = pl.pallas_call(
        functools.partial(proj_rope_kernel, hidden_dim=H, d_k=d_k,
                          bf16_act=bf16_eup),
        out_shape=(jax.ShapeDtypeStruct((B, T, d_k), bf16),
                   jax.ShapeDtypeStruct((B, T, d_k), bf16),
                   jax.ShapeDtypeStruct((B, T, H), bf16),
                   jax.ShapeDtypeStruct((B, T, H), bf16)),
        grid_spec=proj_grid,
        compiler_params=pltpu.CompilerParams(
            dimension_semantics=("parallel", "parallel"),
            vmem_limit_bytes=vmem_limit(proj_foot)),
        cost_estimate=proj_cost,
    )(x, w_fused, b_fused, gq, bq, gk, bk, cos2, sin2)

    # --- kernel 2: flash attention + gating + output projection ---------------
    nQ, nK = T // tq, T // tk
    attn_cost = pl.CostEstimate(
        flops=int(B * (2 * T * T * d_k + 2 * T * T * H + 2 * T * H * F)),
        transcendentals=int(B * T * T),
        bytes_accessed=int(B * T * ((2 * d_k + 2 * H) * 2 + F * 4) + H * F * 2))
    attn_foot = (2 * ((tq + tk) * d_k * 2            # q, k tiles
                      + (tk + tq) * H * 2            # v, u tiles
                      + H * F * 2 + F * 4            # wo, bo
                      + tq * F * 4)                  # output tile
                 + tq * H * 4 + 2 * tq * 4           # acc / m / l scratch
                 + 2 * tq * tk * 4)                  # s / p temporaries
    attn_grid = pltpu.PrefetchScalarGridSpec(
        num_scalar_prefetch=0,
        grid=(B, nQ, nK),
        in_specs=[
            pl.BlockSpec((1, tq, d_k), lambda b, qi, ki: (b, qi, 0)),  # q tile
            pl.BlockSpec((1, tk, d_k), lambda b, qi, ki: (b, ki, 0)),  # k tile
            pl.BlockSpec((1, tk, H), lambda b, qi, ki: (b, ki, 0)),    # v tile
            pl.BlockSpec((1, tq, H), lambda b, qi, ki: (b, qi, 0)),    # u (gate)
            pl.BlockSpec((H, F), lambda b, qi, ki: (0, 0)),            # wo (bf16)
            pl.BlockSpec((1, F), lambda b, qi, ki: (0, 0)),            # bo
        ],
        out_specs=pl.BlockSpec((1, tq, F), lambda b, qi, ki: (b, qi, 0)),
        scratch_shapes=[
            pltpu.VMEM((tq, 1), f32),     # running max m
            pltpu.VMEM((tq, 1), f32),     # running denom l
            pltpu.VMEM((tq, H), f32),     # running numerator acc
        ],
    )
    return pl.pallas_call(
        functools.partial(flash_gau_kernel, bf16_exp=bf16_eup),
        out_shape=jax.ShapeDtypeStruct((B, T, F), x.dtype),
        grid_spec=attn_grid,
        compiler_params=pltpu.CompilerParams(
            dimension_semantics=("parallel", "parallel", "arbitrary"),
            vmem_limit_bytes=vmem_limit(attn_foot)),
        cost_estimate=attn_cost,
    )(q, k, v, u, wo, bo)


# --------------------------- Pure-JAX reference --------------------------------

def rope_gau_ref(x, pos_emb, params):
    """Mirrors the PyTorch forward (f32) for verification."""
    def apply_rotary(t, pos):
        sin, cos = jnp.split(pos, 2, axis=-1)
        x1, x2 = t[..., 0::2], t[..., 1::2]
        out = jnp.stack([x1 * cos - x2 * sin, x2 * cos + x1 * sin], axis=-1)
        return out.reshape(t.shape)

    u = jax.nn.silu(x @ params["wg"] + params["bg"])
    v = jax.nn.silu(x @ params["wv"] + params["bv"])
    qk = jax.nn.silu(x @ params["wqk"] + params["bqk"])
    q = qk * params["gamma_q"] + params["beta_q"]
    k = qk * params["gamma_k"] + params["beta_k"]
    q = apply_rotary(q, pos_emb)
    k = apply_rotary(k, pos_emb)
    d_k = q.shape[-1]
    scores = jnp.einsum("btd,bsd->bts", q, k) / math.sqrt(d_k)
    attn = jax.nn.softmax(scores, axis=-1)
    ctx = jnp.einsum("bts,bsh->bth", attn, v)
    return (u * ctx) @ params["wo"] + params["bo"]


def init_params(key, n_feat, hidden_dim, d_k, dtype=jnp.float32):
    keys = jax.random.split(key, 6)

    def linear(k, fin, fout):
        bound = 1.0 / math.sqrt(fin)
        kw, kb = jax.random.split(k)
        w = jax.random.uniform(kw, (fin, fout), dtype, -bound, bound)
        b = jax.random.uniform(kb, (1, fout), dtype, -bound, bound)
        return w, b

    def xavier(k, shape):
        a = math.sqrt(6.0 / (shape[0] + shape[1]))
        return jax.random.uniform(k, shape, dtype, -a, a)

    wg, bg = linear(keys[0], n_feat, hidden_dim)
    wv, bv = linear(keys[1], n_feat, hidden_dim)
    wqk, bqk = linear(keys[2], n_feat, d_k)
    wo, bo = linear(keys[3], hidden_dim, n_feat)
    return dict(
        wg=wg, bg=bg, wv=wv, bv=bv, wqk=wqk, bqk=bqk, wo=wo, bo=bo,
        gamma_q=xavier(keys[4], (1, d_k)), beta_q=jnp.zeros((1, d_k), dtype),
        gamma_k=xavier(keys[5], (1, d_k)), beta_k=jnp.zeros((1, d_k), dtype),
    )


def make_pos_emb(T, d_k, dtype=jnp.float32):
    pos = jnp.arange(T, dtype=dtype)[:, None]
    inv = jnp.power(10000.0, -jnp.arange(0, d_k, 2, dtype=dtype) / d_k)[None, :]
    ang = pos * inv                                                # (T, d_k//2)
    return jnp.concatenate([jnp.sin(ang), jnp.cos(ang)], axis=-1)  # (T, d_k)


if __name__ == "__main__":
    # Lane-dense shapes (multiples of 128); hidden = 2*n_feat per the GAU docs.
    # With tq=tk=t_proj=256 the demo runs nT=nQ=nK=1 and the parallel grid
    # product B*nQ = 2 keeps both v7x TensorCores occupied.
    B, T, n_feat, hidden_dim, d_k = 2, 256, 128, 256, 128
    key = jax.random.PRNGKey(0)
    kx, kp = jax.random.split(key)

    x = jax.random.normal(kx, (B, T, n_feat), jnp.float32)
    params = init_params(kp, n_feat, hidden_dim, d_k)
    pos_emb = make_pos_emb(T, d_k)

    out = jax.block_until_ready(rope_gau_pallas(x, pos_emb, params))
    ref = rope_gau_ref(x, pos_emb, params)

    assert out.shape == (B, T, n_feat)
    # bf16 matmul operands, bf16 swish/exp (on v6e/v7x) and approx reciprocal
    # -> looser tolerance than a pure-f32 pipeline.
    assert jnp.allclose(out, ref, atol=3e-2, rtol=3e-2), \
        float(jnp.max(jnp.abs(out - ref)))
    print("KERNEL_OK")
</pallas_src>

<mosaic_0001>
module attributes {stable_mosaic.version = 11 : i64} {
  func.func @proj_rope_kernel(%arg0: i32, %arg1: i32, %arg2: memref<1x256x128xf32, #tpu.memory_space<vmem>>, %arg3: memref<128x640xbf16, #tpu.memory_space<vmem>>, %arg4: memref<1x640xf32, #tpu.memory_space<vmem>>, %arg5: memref<1x128xf32, #tpu.memory_space<vmem>>, %arg6: memref<1x128xf32, #tpu.memory_space<vmem>>, %arg7: memref<1x128xf32, #tpu.memory_space<vmem>>, %arg8: memref<1x128xf32, #tpu.memory_space<vmem>>, %arg9: memref<256x128xf32, #tpu.memory_space<vmem>>, %arg10: memref<256x128xf32, #tpu.memory_space<vmem>>, %arg11: memref<1x256x128xbf16, #tpu.memory_space<vmem>>, %arg12: memref<1x256x128xbf16, #tpu.memory_space<vmem>>, %arg13: memref<1x256x256xbf16, #tpu.memory_space<vmem>>, %arg14: memref<1x256x256xbf16, #tpu.memory_space<vmem>>) attributes {dimension_semantics = [#tpu.dimension_semantics<parallel>, #tpu.dimension_semantics<parallel>], iteration_bounds = array<i64: 2, 1>, scalar_prefetch = 0 : i64, scratch_operands = 0 : i64, tpu.core_type = #tpu.core_type<tc>, window_params = [{transform_indices = @transform_0, window_bounds = array<i64: 1, 256, 128>}, {pipeline_mode = #tpu.pipeline_mode<synchronous>, transform_indices = @transform_1, window_bounds = array<i64: 128, 640>}, {pipeline_mode = #tpu.pipeline_mode<synchronous>, transform_indices = @transform_2, window_bounds = array<i64: 1, 640>}, {pipeline_mode = #tpu.pipeline_mode<synchronous>, transform_indices = @transform_3, window_bounds = array<i64: 1, 128>}, {pipeline_mode = #tpu.pipeline_mode<synchronous>, transform_indices = @transform_4, window_bounds = array<i64: 1, 128>}, {pipeline_mode = #tpu.pipeline_mode<synchronous>, transform_indices = @transform_5, window_bounds = array<i64: 1, 128>}, {pipeline_mode = #tpu.pipeline_mode<synchronous>, transform_indices = @transform_6, window_bounds = array<i64: 1, 128>}, {transform_indices = @transform_7, window_bounds = array<i64: 256, 128>}, {transform_indices = @transform_8, window_bounds = array<i64: 256, 128>}, {transform_indices = @transform_9, window_bounds = array<i64: 1, 256, 128>}, {transform_indices = @transform_10, window_bounds = array<i64: 1, 256, 128>}, {transform_indices = @transform_11, window_bounds = array<i64: 1, 256, 256>}, {transform_indices = @transform_12, window_bounds = array<i64: 1, 256, 256>}]} {
    %c0 = arith.constant 0 : index
    %c0_0 = arith.constant 0 : index
    %c0_1 = arith.constant 0 : index
    %0 = vector.load %arg2[%c0, %c0_0, %c0_1] : memref<1x256x128xf32, #tpu.memory_space<vmem>>, vector<1x256x128xf32>
    %1 = vector.shape_cast %0 : vector<1x256x128xf32> to vector<256x128xf32>
    %2 = arith.truncf %1 : vector<256x128xf32> to vector<256x128xbf16>
    %c0_2 = arith.constant 0 : index
    %c0_3 = arith.constant 0 : index
    %3 = vector.load %arg3[%c0_2, %c0_3] : memref<128x640xbf16, #tpu.memory_space<vmem>>, vector<128x640xbf16>
    %cst = arith.constant dense<0.000000e+00> : vector<256x640xf32>
    %4 = tpu.matmul %2, %3, %cst {dimension_numbers = #tpu.dot_dimension_numbers<[1], [0], [0], [1], [0, 0, 1, 1], [], []>} : vector<256x128xbf16>, vector<128x640xbf16>, vector<256x640xf32> -> vector<256x640xf32>
    %c0_4 = arith.constant 0 : index
    %c0_5 = arith.constant 0 : index
    %5 = vector.load %arg4[%c0_4, %c0_5] : memref<1x640xf32, #tpu.memory_space<vmem>>, vector<1x640xf32>
    %6 = vector.broadcast %5 : vector<1x640xf32> to vector<256x640xf32>
    %7 = arith.addf %4, %6 : vector<256x640xf32>
    %8 = arith.truncf %7 : vector<256x640xf32> to vector<256x640xbf16>
    %9 = arith.negf %8 : vector<256x640xbf16>
    %10 = math.exp %9 : vector<256x640xbf16>
    %cst_6 = arith.constant 1.000000e+00 : bf16
    %11 = vector.broadcast %cst_6 : bf16 to vector<256x640xbf16>
    %12 = arith.addf %11, %10 : vector<256x640xbf16>
    %13 = arith.divf %11, %12 : vector<256x640xbf16>
    %14 = arith.mulf %8, %13 : vector<256x640xbf16>
    %15 = vector.extract_strided_slice %14 {offsets = [0, 0], sizes = [256, 256], strides = [1, 1]} : vector<256x640xbf16> to vector<256x256xbf16>
    %16 = vector.extract_strided_slice %14 {offsets = [0, 256], sizes = [256, 256], strides = [1, 1]} : vector<256x640xbf16> to vector<256x256xbf16>
    %17 = vector.extract_strided_slice %14 {offsets = [0, 512], sizes = [256, 128], strides = [1, 1]} : vector<256x640xbf16> to vector<256x128xbf16>
    %18 = arith.extf %17 : vector<256x128xbf16> to vector<256x128xf32>
    %c0_7 = arith.constant 0 : index
    %c0_8 = arith.constant 0 : index
    %19 = vector.load %arg5[%c0_7, %c0_8] : memref<1x128xf32, #tpu.memory_space<vmem>>, vector<1x128xf32>
    %20 = vector.broadcast %19 : vector<1x128xf32> to vector<256x128xf32>
    %21 = arith.mulf %18, %20 : vector<256x128xf32>
    %c0_9 = arith.constant 0 : index
    %c0_10 = arith.constant 0 : index
    %22 = vector.load %arg6[%c0_9, %c0_10] : memref<1x128xf32, #tpu.memory_space<vmem>>, vector<1x128xf32>
    %23 = vector.broadcast %22 : vector<1x128xf32> to vector<256x128xf32>
    %24 = arith.addf %21, %23 : vector<256x128xf32>
    %c0_11 = arith.constant 0 : index
    %c0_12 = arith.constant 0 : index
    %25 = vector.load %arg7[%c0_11, %c0_12] : memref<1x128xf32, #tpu.memory_space<vmem>>, vector<1x128xf32>
    %26 = vector.broadcast %25 : vector<1x128xf32> to vector<256x128xf32>
    %27 = arith.mulf %18, %26 : vector<256x128xf32>
    %c0_13 = arith.constant 0 : index
    %c0_14 = arith.constant 0 : index
    %28 = vector.load %arg8[%c0_13, %c0_14] : memref<1x128xf32, #tpu.memory_space<vmem>>, vector<1x128xf32>
    %29 = vector.broadcast %28 : vector<1x128xf32> to vector<256x128xf32>
    %30 = arith.addf %27, %29 : vector<256x128xf32>
    %c0_15 = arith.constant 0 : index
    %c0_16 = arith.constant 0 : index
    %31 = vector.load %arg9[%c0_15, %c0_16] : memref<256x128xf32, #tpu.memory_space<vmem>>, vector<256x128xf32>
    %c0_17 = arith.constant 0 : index
    %c0_18 = arith.constant 0 : index
    %32 = vector.load %arg10[%c0_17, %c0_18] : memref<256x128xf32, #tpu.memory_space<vmem>>, vector<256x128xf32>
    %33 = arith.mulf %24, %31 : vector<256x128xf32>
    %c64_i32 = arith.constant 64 : i32
    %34 = tpu.dynamic_rotate %24 by %c64_i32 dim 1 : vector<256x128xf32>, i32 -> vector<256x128xf32>
    %35 = arith.mulf %34, %32 : vector<256x128xf32>
    %36 = arith.addf %33, %35 : vector<256x128xf32>
    %37 = arith.truncf %36 : vector<256x128xf32> to vector<256x128xbf16>
    %c0_19 = arith.constant 0 : index
    %c0_20 = arith.constant 0 : index
    %c0_21 = arith.constant 0 : index
    %38 = vector.load %arg11[%c0_19, %c0_20, %c0_21] : memref<1x256x128xbf16, #tpu.memory_space<vmem>>, vector<1x256x128xbf16>
    %39 = vector.shape_cast %38 : vector<1x256x128xbf16> to vector<256x128xbf16>
    %40 = vector.shape_cast %37 : vector<256x128xbf16> to vector<1x256x128xbf16>
    tpu.vector_store %arg11[%c0_19, %c0_20, %c0_21], %40 {strides = array<i32>} : memref<1x256x128xbf16, #tpu.memory_space<vmem>>, vector<1x256x128xbf16>,
    %41 = arith.mulf %30, %31 : vector<256x128xf32>
    %c64_i32_22 = arith.constant 64 : i32
    %42 = tpu.dynamic_rotate %30 by %c64_i32_22 dim 1 : vector<256x128xf32>, i32 -> vector<256x128xf32>
    %43 = arith.mulf %42, %32 : vector<256x128xf32>
    %44 = arith.addf %41, %43 : vector<256x128xf32>
    %45 = arith.truncf %44 : vector<256x128xf32> to vector<256x128xbf16>
    %c0_23 = arith.constant 0 : index
    %c0_24 = arith.constant 0 : index
    %c0_25 = arith.constant 0 : index
    %46 = vector.load %arg12[%c0_23, %c0_24, %c0_25] : memref<1x256x128xbf16, #tpu.memory_space<vmem>>, vector<1x256x128xbf16>
    %47 = vector.shape_cast %46 : vector<1x256x128xbf16> to vector<256x128xbf16>
    %48 = vector.shape_cast %45 : vector<256x128xbf16> to vector<1x256x128xbf16>
    tpu.vector_store %arg12[%c0_23, %c0_24, %c0_25], %48 {strides = array<i32>} : memref<1x256x128xbf16, #tpu.memory_space<vmem>>, vector<1x256x128xbf16>,
    %c0_26 = arith.constant 0 : index
    %c0_27 = arith.constant 0 : index
    %c0_28 = arith.constant 0 : index
    %49 = vector.load %arg13[%c0_26, %c0_27, %c0_28] : memref<1x256x256xbf16, #tpu.memory_space<vmem>>, vector<1x256x256xbf16>
    %50 = vector.shape_cast %49 : vector<1x256x256xbf16> to vector<256x256xbf16>
    %51 = vector.shape_cast %16 : vector<256x256xbf16> to vector<1x256x256xbf16>
    tpu.vector_store %arg13[%c0_26, %c0_27, %c0_28], %51 {strides = array<i32>} : memref<1x256x256xbf16, #tpu.memory_space<vmem>>, vector<1x256x256xbf16>,
    %c0_29 = arith.constant 0 : index
    %c0_30 = arith.constant 0 : index
    %c0_31 = arith.constant 0 : index
    %52 = vector.load %arg14[%c0_29, %c0_30, %c0_31] : memref<1x256x256xbf16, #tpu.memory_space<vmem>>, vector<1x256x256xbf16>
    %53 = vector.shape_cast %52 : vector<1x256x256xbf16> to vector<256x256xbf16>
    %54 = vector.shape_cast %15 : vector<256x256xbf16> to vector<1x256x256xbf16>
    tpu.vector_store %arg14[%c0_29, %c0_30, %c0_31], %54 {strides = array<i32>} : memref<1x256x256xbf16, #tpu.memory_space<vmem>>, vector<1x256x256xbf16>,
    return
  }
  func.func @transform_0(%arg0: i32, %arg1: i32) -> (i32, i32, i32) {
    %c0_i32 = arith.constant 0 : i32
    %c0_i32_0 = arith.constant 0 : i32
    return %arg0, %arg1, %c0_i32 : i32, i32, i32
  }
  func.func @transform_1(%arg0: i32, %arg1: i32) -> (i32, i32) {
    %c0_i32 = arith.constant 0 : i32
    %c0_i32_0 = arith.constant 0 : i32
    %c0_i32_1 = arith.constant 0 : i32
    return %c0_i32, %c0_i32_0 : i32, i32
  }
  func.func @transform_2(%arg0: i32, %arg1: i32) -> (i32, i32) {
    %c0_i32 = arith.constant 0 : i32
    %c0_i32_0 = arith.constant 0 : i32
    %c0_i32_1 = arith.constant 0 : i32
    return %c0_i32, %c0_i32_0 : i32, i32
  }
  func.func @transform_3(%arg0: i32, %arg1: i32) -> (i32, i32) {
    %c0_i32 = arith.constant 0 : i32
    %c0_i32_0 = arith.constant 0 : i32
    %c0_i32_1 = arith.constant 0 : i32
    return %c0_i32, %c0_i32_0 : i32, i32
  }
  func.func @transform_4(%arg0: i32, %arg1: i32) -> (i32, i32) {
    %c0_i32 = arith.constant 0 : i32
    %c0_i32_0 = arith.constant 0 : i32
    %c0_i32_1 = arith.constant 0 : i32
    return %c0_i32, %c0_i32_0 : i32, i32
  }
  func.func @transform_5(%arg0: i32, %arg1: i32) -> (i32, i32) {
    %c0_i32 = arith.constant 0 : i32
    %c0_i32_0 = arith.constant 0 : i32
    %c0_i32_1 = arith.constant 0 : i32
    return %c0_i32, %c0_i32_0 : i32, i32
  }
  func.func @transform_6(%arg0: i32, %arg1: i32) -> (i32, i32) {
    %c0_i32 = arith.constant 0 : i32
    %c0_i32_0 = arith.constant 0 : i32
    %c0_i32_1 = arith.constant 0 : i32
    return %c0_i32, %c0_i32_0 : i32, i32
  }
  func.func @transform_7(%arg0: i32, %arg1: i32) -> (i32, i32) {
    %c0_i32 = arith.constant 0 : i32
    %c0_i32_0 = arith.constant 0 : i32
    return %arg1, %c0_i32 : i32, i32
  }
  func.func @transform_8(%arg0: i32, %arg1: i32) -> (i32, i32) {
    %c0_i32 = arith.constant 0 : i32
    %c0_i32_0 = arith.constant 0 : i32
    return %arg1, %c0_i32 : i32, i32
  }
  func.func @transform_9(%arg0: i32, %arg1: i32) -> (i32, i32, i32) {
    %c0_i32 = arith.constant 0 : i32
    %c0_i32_0 = arith.constant 0 : i32
    return %arg0, %arg1, %c0_i32 : i32, i32, i32
  }
  func.func @transform_10(%arg0: i32, %arg1: i32) -> (i32, i32, i32) {
    %c0_i32 = arith.constant 0 : i32
    %c0_i32_0 = arith.constant 0 : i32
    return %arg0, %arg1, %c0_i32 : i32, i32, i32
  }
  func.func @transform_11(%arg0: i32, %arg1: i32) -> (i32, i32, i32) {
    %c0_i32 = arith.constant 0 : i32
    %c0_i32_0 = arith.constant 0 : i32
    return %arg0, %arg1, %c0_i32 : i32, i32, i32
  }
  func.func @transform_12(%arg0: i32, %arg1: i32) -> (i32, i32, i32) {
    %c0_i32 = arith.constant 0 : i32
    %c0_i32_0 = arith.constant 0 : i32
    return %arg0, %arg1, %c0_i32 : i32, i32, i32
  }
}

</mosaic_0001>

<llo_original>
// kernel: tpu_custom_call.1
$region0: #{tpu_custom_call.1}
  #allocation0 [shape = 'u32[]', space=smem, size = 0x4, offset = 0x4, fixed_abs, tag = 'smem constant byte address 0x4 - core index']
  #allocation1 [shape = 'u32[72,128]{1,0:T(1,128)}', space=vmem, size = 0x9000, scoped, tag = 'internal scratch']
  %s0 = inlined_call_operand.hbm [shape: f32[2,256,128], index: 0, kind: input, shape index: {}]
  %s1 = inlined_call_operand.hbm [shape: bf16[128,640], index: 1, kind: input, shape index: {}]
  %s2 = inlined_call_operand.hbm [shape: f32[1,640], index: 2, kind: input, shape index: {}]
  %s3 = inlined_call_operand.vmem [shape: f32[1,128], index: 3, kind: input, shape index: {}]
  %s4 = inlined_call_operand.vmem [shape: f32[1,128], index: 4, kind: input, shape index: {}]
  %s5 = inlined_call_operand.vmem [shape: f32[1,128], index: 5, kind: input, shape index: {}]
  %s6 = inlined_call_operand.vmem [shape: f32[1,128], index: 6, kind: input, shape index: {}]
  %s7 = inlined_call_operand.hbm [shape: f32[256,128], index: 7, kind: input, shape index: {}]
  %s8 = inlined_call_operand.hbm [shape: f32[256,128], index: 8, kind: input, shape index: {}]
  %s9 = inlined_call_operand.hbm [shape: bf16[2,256,128], index: 9, kind: output, shape index: {0}]
  %s10 = inlined_call_operand.hbm [shape: bf16[2,256,128], index: 10, kind: output, shape index: {1}]
  %s11 = inlined_call_operand.hbm [shape: bf16[2,256,256], index: 11, kind: output, shape index: {2}]
  %s12 = inlined_call_operand.hbm [shape: bf16[2,256,256], index: 12, kind: output, shape index: {3}]
  %13 = xla_tuple %s9, %s10, %s11, %s12
  %s14 = sld [smem:[#allocation0]]
  $region113: #{tpu_custom_call.1} parent=0
    _
  %s16 = ssub.s32 1, %s14
  %s17 = scalar_select 0, %s16, %s14
  $region1: #{tpu_custom_call.1} parent=0
    #allocation2 [shape = 'u8[262144]{0}', space=vmem, size = 0x40000, scoped, tag = 'input window, operand 0']
    #allocation3 [shape = 's32[2]{0}', space=sflag, size = 0x8, scoped, tag = 'scoped memory for tpu_custom_call.1']
    #allocation4 [shape = 's32[2]{0}', space=sflag, size = 0x8, scoped, tag = 'scoped memory for tpu_custom_call.1']
    #allocation5 [shape = 'u8[163840]{0}', space=vmem, size = 0x28000, scoped, tag = 'input window, operand 1, single buffered']
    #allocation6 [shape = 's32[1]{0}', space=sflag, size = 0x4, scoped, tag = 'scoped memory for tpu_custom_call.1']
    #allocation7 [shape = 'u8[2560]{0}', space=vmem, size = 0xc00, scoped, tag = 'input window, operand 2, single buffered']
    #allocation8 [shape = 'u8[131072]{0}', space=vmem, size = 0x20000, scoped, tag = 'input window, operand 7, single buffered']
    #allocation9 [shape = 's32[1]{0}', space=sflag, size = 0x4, scoped, tag = 'scoped memory for tpu_custom_call.1']
    #allocation10 [shape = 'u8[131072]{0}', space=vmem, size = 0x20000, scoped, tag = 'input window, operand 8, single buffered']
    #allocation11 [shape = 'u8[131072]{0}', space=vmem, size = 0x20000, scoped, tag = 'output window, operand 0']
    #allocation12 [shape = 'u8[131072]{0}', space=vmem, size = 0x20000, scoped, tag = 'output window, operand 1']
    #allocation13 [shape = 's32[2]{0}', space=sflag, size = 0x8, scoped, tag = 'scoped memory for tpu_custom_call.1']
    #allocation14 [shape = 'u8[262144]{0}', space=vmem, size = 0x40000, scoped, tag = 'output window, operand 2']
    #allocation15 [shape = 'u8[262144]{0}', space=vmem, size = 0x40000, scoped, tag = 'output window, operand 3']
    #allocation16 [shape = 's32[2]{0}', space=sflag, size = 0x8, scoped, tag = 'scoped memory for tpu_custom_call.1']
    %18 = vsyncpa [#allocation3], 0
    %s19 = scalar_lea.sflag [#allocation3], 1
    %20 = vsyncpa %s19, 0
    %21 = vsyncpa [#allocation6], 0
    %22 = vsyncpa [#allocation9], 0
    %23 = vsyncpa [#allocation4], 0
    %s24 = scalar_lea.sflag [#allocation4], 1
    %25 = vsyncpa %s24, 0
    %26 = vsyncpa [#allocation13], 0
    %s27 = scalar_lea.sflag [#allocation13], 1
    %28 = vsyncpa %s27, 0
    %29 = vsyncpa [#allocation16], 0
    %s30 = scalar_lea.sflag [#allocation16], 1
    %31 = vsyncpa %s30, 0
    loop: start=0, step=1, limit=4
    $region2: #{tpu_custom_call.1} parent=1 // loop_pre_header
      _
    $region3: #{tpu_custom_call.1} parent=1 // loop_header
      %s33 = sphi 0, %s37
      %p34 = scmp.ge.s32.totalorder %s33, 4
      %s40 = sphi 0, %s52
      %s41 = sphi 0, %s48
      %s42 = sphi 0, %s40
      %s43 = sphi 0, %s41
      %s44 = sphi 0, %s42
      %s45 = sphi 0, %s43
      %s57 = sphi 0, %s59
      %s60 = sphi 0, %s57
      %s61 = sphi 0, %s60
      %s77 = sphi 0, %s61
      %s81 = sphi 0, %s81
      %s83 = sphi 0, %s81
      %s84 = sphi 0, %s83
      %s98 = sphi 0, %s84
      %s102 = sphi 0, %s102
      %s104 = sphi 0, %s102
      %s105 = sphi 0, %s104
      %s119 = sphi 0, %s105
      %s123 = sphi 0, %s123
      %s125 = sphi 0, %s123
      %s126 = sphi 0, %s125
      %s140 = sphi 0, %s126
      %s144 = sphi 0, %s144
      %s146 = sphi 0, %s144
      %s147 = sphi 0, %s146
      %s161 = sphi 0, %s147
      %s165 = sphi 0, %s165
      %s167 = sphi 0, %s165
      %s168 = sphi 0, %s167
      %s182 = sphi 0, %s168
      %s186 = sphi 0, %s186
      %s188 = sphi 0, %s186
      %s189 = sphi 0, %s188
      %s203 = sphi 0, %s189
      %s209 = sphi 0, %s211
      %s212 = sphi 0, %s209
      %s213 = sphi 0, %s212
      %s229 = sphi 0, %s213
      %s235 = sphi 0, %s237
      %s238 = sphi 0, %s235
      %s239 = sphi 0, %s238
      %s255 = sphi 0, %s239
      %s263 = sphi 0, %s265
      %s266 = sphi 0, %s263
      %s267 = sphi 0, %s266
      %s283 = sphi 0, %s267
      %s291 = sphi 0, %s293
      %s294 = sphi 0, %s291
      %s295 = sphi 0, %s294
      %s311 = sphi 0, %s295
      %s319 = sphi 0, %s321
      %s322 = sphi 0, %s319
      %s323 = sphi 0, %s322
      %s339 = sphi 0, %s323
      %s347 = sphi 0, %s349
      %s350 = sphi 0, %s347
      %s351 = sphi 0, %s350
      %s367 = sphi 0, %s351
    $region4: #{tpu_custom_call.1} parent=1 // loop_header_branch
      %36 = sbr.rel (%p34) target = $region8
    $region5: #{tpu_custom_call.1} parent=1 // loop_body
      %s38 = ssub.s32 %s33, 1
      %s39 = ssub.s32 %s33, 2
      %s46 = sadd.s32 1, %s41
      %p47 = scmp.ge.s32.totalorder %s46, 1
      %s48 = scalar_select %p47, 0, %s46
      %s49 = sadd.s32 1, %s40
      %s50 = scalar_select %p47, %s49, %s40
      %p51 = scmp.ge.s32.totalorder %s50, 2
      %s52 = scalar_select %p51, 0, %s50
      %s53 = ssub.s32 %s40, %s52
      %s54 = ssub.s32 %s41, %s48
      %s55 = sor.u32 %s53, %s54
      %p56 = scmp.eq.s32.totalorder %s55, 0
      %s58 = sadd.s32 %s57, 1
      %s59 = scalar_select %p56, %s57, %s58
      %p62 = pneg %p56
      %p63 = scmp.eq.s32.totalorder %s33, 1
      %p64 = por %p62, %p63
      %p65 = scmp.ne.s32.totalorder %s57, %s60
      %p66 = scmp.eq.s32.totalorder %s33, 0
      %p67 = por %p65, %p66
      %p68 = scmp.ne.s32.totalorder %s57, %s60
      %p69 = scmp.eq.s32.totalorder %s38, 1
      %p70 = por %p68, %p69
      %p71 = scmp.ne.s32.totalorder %s60, %s61
      %p72 = scmp.eq.s32.totalorder %s38, 0
      %p73 = por %p71, %p72
      %p74 = scmp.ne.s32.totalorder %s60, %s61
      %p75 = scmp.eq.s32.totalorder %s39, 1
      %p76 = por %p74, %p75
      %p78 = scmp.ne.s32.totalorder %s61, %s77
      %p79 = scmp.eq.s32.totalorder %s39, 0
      %p80 = por %p78, %p79
      %s82 = sadd.s32 %s81, 1
      %p85 = scmp.eq.s32.totalorder %s33, 1
      %p86 = scmp.ne.s32.totalorder %s81, %s83
      %p87 = scmp.eq.s32.totalorder %s33, 0
      %p88 = por %p86, %p87
      %p89 = scmp.ne.s32.totalorder %s81, %s83
      %p90 = scmp.eq.s32.totalorder %s38, 1
      %p91 = por %p89, %p90
      %p92 = scmp.ne.s32.totalorder %s83, %s84
      %p93 = scmp.eq.s32.totalorder %s38, 0
      %p94 = por %p92, %p93
      %p95 = scmp.ne.s32.totalorder %s83, %s84
      %p96 = scmp.eq.s32.totalorder %s39, 1
      %p97 = por %p95, %p96
      %p99 = scmp.ne.s32.totalorder %s84, %s98
      %p100 = scmp.eq.s32.totalorder %s39, 0
      %p101 = por %p99, %p100
      %s103 = sadd.s32 %s102, 1
      %p106 = scmp.eq.s32.totalorder %s33, 1
      %p107 = scmp.ne.s32.totalorder %s102, %s104
      %p108 = scmp.eq.s32.totalorder %s33, 0
      %p109 = por %p107, %p108
      %p110 = scmp.ne.s32.totalorder %s102, %s104
      %p111 = scmp.eq.s32.totalorder %s38, 1
      %p112 = por %p110, %p111
      %p113 = scmp.ne.s32.totalorder %s104, %s105
      %p114 = scmp.eq.s32.totalorder %s38, 0
      %p115 = por %p113, %p114
      %p116 = scmp.ne.s32.totalorder %s104, %s105
      %p117 = scmp.eq.s32.totalorder %s39, 1
      %p118 = por %p116, %p117
      %p120 = scmp.ne.s32.totalorder %s105, %s119
      %p121 = scmp.eq.s32.totalorder %s39, 0
      %p122 = por %p120, %p121
      %s124 = sadd.s32 %s123, 1
      %p127 = scmp.eq.s32.totalorder %s33, 1
      %p128 = scmp.ne.s32.totalorder %s123, %s125
      %p129 = scmp.eq.s32.totalorder %s33, 0
      %p130 = por %p128, %p129
      %p131 = scmp.ne.s32.totalorder %s123, %s125
      %p132 = scmp.eq.s32.totalorder %s38, 1
      %p133 = por %p131, %p132
      %p134 = scmp.ne.s32.totalorder %s125, %s126
      %p135 = scmp.eq.s32.totalorder %s38, 0
      %p136 = por %p134, %p135
      %p137 = scmp.ne.s32.totalorder %s125, %s126
      %p138 = scmp.eq.s32.totalorder %s39, 1
      %p139 = por %p137, %p138
      %p141 = scmp.ne.s32.totalorder %s126, %s140
      %p142 = scmp.eq.s32.totalorder %s39, 0
      %p143 = por %p141, %p142
      %s145 = sadd.s32 %s144, 1
      %p148 = scmp.eq.s32.totalorder %s33, 1
      %p149 = scmp.ne.s32.totalorder %s144, %s146
      %p150 = scmp.eq.s32.totalorder %s33, 0
      %p151 = por %p149, %p150
      %p152 = scmp.ne.s32.totalorder %s144, %s146
      %p153 = scmp.eq.s32.totalorder %s38, 1
      %p154 = por %p152, %p153
      %p155 = scmp.ne.s32.totalorder %s146, %s147
      %p156 = scmp.eq.s32.totalorder %s38, 0
      %p157 = por %p155, %p156
      %p158 = scmp.ne.s32.totalorder %s146, %s147
      %p159 = scmp.eq.s32.totalorder %s39, 1
      %p160 = por %p158, %p159
      %p162 = scmp.ne.s32.totalorder %s147, %s161
      %p163 = scmp.eq.s32.totalorder %s39, 0
      %p164 = por %p162, %p163
      %s166 = sadd.s32 %s165, 1
      %p169 = scmp.eq.s32.totalorder %s33, 1
      %p170 = scmp.ne.s32.totalorder %s165, %s167
      %p171 = scmp.eq.s32.totalorder %s33, 0
      %p172 = por %p170, %p171
      %p173 = scmp.ne.s32.totalorder %s165, %s167
      %p174 = scmp.eq.s32.totalorder %s38, 1
      %p175 = por %p173, %p174
      %p176 = scmp.ne.s32.totalorder %s167, %s168
      %p177 = scmp.eq.s32.totalorder %s38, 0
      %p178 = por %p176, %p177
      %p179 = scmp.ne.s32.totalorder %s167, %s168
      %p180 = scmp.eq.s32.totalorder %s39, 1
      %p181 = por %p179, %p180
      %p183 = scmp.ne.s32.totalorder %s168, %s182
      %p184 = scmp.eq.s32.totalorder %s39, 0
      %p185 = por %p183, %p184
      %s187 = sadd.s32 %s186, 1
      %p190 = scmp.eq.s32.totalorder %s33, 1
      %p191 = scmp.ne.s32.totalorder %s186, %s188
      %p192 = scmp.eq.s32.totalorder %s33, 0
      %p193 = por %p191, %p192
      %p194 = scmp.ne.s32.totalorder %s186, %s188
      %p195 = scmp.eq.s32.totalorder %s38, 1
      %p196 = por %p194, %p195
      %p197 = scmp.ne.s32.totalorder %s188, %s189
      %p198 = scmp.eq.s32.totalorder %s38, 0
      %p199 = por %p197, %p198
      %p200 = scmp.ne.s32.totalorder %s188, %s189
      %p201 = scmp.eq.s32.totalorder %s39, 1
      %p202 = por %p200, %p201
      %p204 = scmp.ne.s32.totalorder %s189, %s203
      %p205 = scmp.eq.s32.totalorder %s39, 0
      %p206 = por %p204, %p205
      %s207 = ssub.s32 %s41, %s48
      %p208 = scmp.eq.s32.totalorder %s207, 0
      %s210 = sadd.s32 %s209, 1
      %s211 = scalar_select %p208, %s209, %s210
      %p214 = pneg %p208
      %p215 = scmp.eq.s32.totalorder %s33, 1
      %p216 = por %p214, %p215
      %p217 = scmp.ne.s32.totalorder %s209, %s212
      %p218 = scmp.eq.s32.totalorder %s33, 0
      %p219 = por %p217, %p218
      %p220 = scmp.ne.s32.totalorder %s209, %s212
      %p221 = scmp.eq.s32.totalorder %s38, 1
      %p222 = por %p220, %p221
      %p223 = scmp.ne.s32.totalorder %s212, %s213
      %p224 = scmp.eq.s32.totalorder %s38, 0
      %p225 = por %p223, %p224
      %p226 = scmp.ne.s32.totalorder %s212, %s213
      %p227 = scmp.eq.s32.totalorder %s39, 1
      %p228 = por %p226, %p227
      %p230 = scmp.ne.s32.totalorder %s213, %s229
      %p231 = scmp.eq.s32.totalorder %s39, 0
      %p232 = por %p230, %p231
      %s233 = ssub.s32 %s41, %s48
      %p234 = scmp.eq.s32.totalorder %s233, 0
      %s236 = sadd.s32 %s235, 1
      %s237 = scalar_select %p234, %s235, %s236
      %p240 = pneg %p234
      %p241 = scmp.eq.s32.totalorder %s33, 1
      %p242 = por %p240, %p241
      %p243 = scmp.ne.s32.totalorder %s235, %s238
      %p244 = scmp.eq.s32.totalorder %s33, 0
      %p245 = por %p243, %p244
      %p246 = scmp.ne.s32.totalorder %s235, %s238
      %p247 = scmp.eq.s32.totalorder %s38, 1
      %p248 = por %p246, %p247
      %p249 = scmp.ne.s32.totalorder %s238, %s239
      %p250 = scmp.eq.s32.totalorder %s38, 0
      %p251 = por %p249, %p250
      %p252 = scmp.ne.s32.totalorder %s238, %s239
      %p253 = scmp.eq.s32.totalorder %s39, 1
      %p254 = por %p252, %p253
      %p256 = scmp.ne.s32.totalorder %s239, %s255
      %p257 = scmp.eq.s32.totalorder %s39, 0
      %p258 = por %p256, %p257
      %s259 = ssub.s32 %s40, %s52
      %s260 = ssub.s32 %s41, %s48
      %s261 = sor.u32 %s259, %s260
      %p262 = scmp.eq.s32.totalorder %s261, 0
      %s264 = sadd.s32 %s263, 1
      %s265 = scalar_select %p262, %s263, %s264
      %p268 = pneg %p262
      %p269 = scmp.eq.s32.totalorder %s33, 1
      %p270 = por %p268, %p269
      %p271 = scmp.ne.s32.totalorder %s263, %s266
      %p272 = scmp.eq.s32.totalorder %s33, 0
      %p273 = por %p271, %p272
      %p274 = scmp.ne.s32.totalorder %s263, %s266
      %p275 = scmp.eq.s32.totalorder %s38, 1
      %p276 = por %p274, %p275
      %p277 = scmp.ne.s32.totalorder %s266, %s267
      %p278 = scmp.eq.s32.totalorder %s38, 0
      %p279 = por %p277, %p278
      %p280 = scmp.ne.s32.totalorder %s266, %s267
      %p281 = scmp.eq.s32.totalorder %s39, 1
      %p282 = por %p280, %p281
      %p284 = scmp.ne.s32.totalorder %s267, %s283
      %p285 = scmp.eq.s32.totalorder %s39, 0
      %p286 = por %p284, %p285
      %s287 = ssub.s32 %s40, %s52
      %s288 = ssub.s32 %s41, %s48
      %s289 = sor.u32 %s287, %s288
      %p290 = scmp.eq.s32.totalorder %s289, 0
      %s292 = sadd.s32 %s291, 1
      %s293 = scalar_select %p290, %s291, %s292
      %p296 = pneg %p290
      %p297 = scmp.eq.s32.totalorder %s33, 1
      %p298 = por %p296, %p297
      %p299 = scmp.ne.s32.totalorder %s291, %s294
      %p300 = scmp.eq.s32.totalorder %s33, 0
      %p301 = por %p299, %p300
      %p302 = scmp.ne.s32.totalorder %s291, %s294
      %p303 = scmp.eq.s32.totalorder %s38, 1
      %p304 = por %p302, %p303
      %p305 = scmp.ne.s32.totalorder %s294, %s295
      %p306 = scmp.eq.s32.totalorder %s38, 0
      %p307 = por %p305, %p306
      %p308 = scmp.ne.s32.totalorder %s294, %s295
      %p309 = scmp.eq.s32.totalorder %s39, 1
      %p310 = por %p308, %p309
      %p312 = scmp.ne.s32.totalorder %s295, %s311
      %p313 = scmp.eq.s32.totalorder %s39, 0
      %p314 = por %p312, %p313
      %s315 = ssub.s32 %s40, %s52
      %s316 = ssub.s32 %s41, %s48
      %s317 = sor.u32 %s315, %s316
      %p318 = scmp.eq.s32.totalorder %s317, 0
      %s320 = sadd.s32 %s319, 1
      %s321 = scalar_select %p318, %s319, %s320
      %p324 = pneg %p318
      %p325 = scmp.eq.s32.totalorder %s33, 1
      %p326 = por %p324, %p325
      %p327 = scmp.ne.s32.totalorder %s319, %s322
      %p328 = scmp.eq.s32.totalorder %s33, 0
      %p329 = por %p327, %p328
      %p330 = scmp.ne.s32.totalorder %s319, %s322
      %p331 = scmp.eq.s32.totalorder %s38, 1
      %p332 = por %p330, %p331
      %p333 = scmp.ne.s32.totalorder %s322, %s323
      %p334 = scmp.eq.s32.totalorder %s38, 0
      %p335 = por %p333, %p334
      %p336 = scmp.ne.s32.totalorder %s322, %s323
      %p337 = scmp.eq.s32.totalorder %s39, 1
      %p338 = por %p336, %p337
      %p340 = scmp.ne.s32.totalorder %s323, %s339
      %p341 = scmp.eq.s32.totalorder %s39, 0
      %p342 = por %p340, %p341
      %s343 = ssub.s32 %s40, %s52
      %s344 = ssub.s32 %s41, %s48
      %s345 = sor.u32 %s343, %s344
      %p346 = scmp.eq.s32.totalorder %s345, 0
      %s348 = sadd.s32 %s347, 1
      %s349 = scalar_select %p346, %s347, %s348
      %p352 = pneg %p346
      %p353 = scmp.eq.s32.totalorder %s33, 1
      %p354 = por %p352, %p353
      %p355 = scmp.ne.s32.totalorder %s347, %s350
      %p356 = scmp.eq.s32.totalorder %s33, 0
      %p357 = por %p355, %p356
      %p358 = scmp.ne.s32.totalorder %s347, %s350
      %p359 = scmp.eq.s32.totalorder %s38, 1
      %p360 = por %p358, %p359
      %p361 = scmp.ne.s32.totalorder %s350, %s351
      %p362 = scmp.eq.s32.totalorder %s38, 0
      %p363 = por %p361, %p362
      %p364 = scmp.ne.s32.totalorder %s350, %s351
      %p365 = scmp.eq.s32.totalorder %s39, 1
      %p366 = por %p364, %p365
      %p368 = scmp.ne.s32.totalorder %s351, %s367
      %p369 = scmp.eq.s32.totalorder %s39, 0
      %p370 = por %p368, %p369
      %p371 = scmp.le.s32.totalorder 1, %s33
      %p372 = scmp.lt.s32.totalorder %s33, 3
      %p373 = pnand %p371, %p372
      %p374 = pneg %p373
      // Predicated region
      $region9: #{tpu_custom_call.1} parent=5 // pred_check
        _
      $region10: #{tpu_custom_call.1} parent=5 // pred_check_branch
        %376 = sbr.rel (%p373) target = $region12
      $region11: #{tpu_custom_call.1} parent=5 // pred_region
        %s377 = ssub.s32 %s33, 1
        // Predicated region
        $region13: #{tpu_custom_call.1} parent=11 // pred_check
          %p378 = pneg %p94
        $region14: #{tpu_custom_call.1} parent=11 // pred_check_branch
          %380 = sbr.rel (%p378) target = $region16
        $region15: #{tpu_custom_call.1} parent=11 // pred_region
          %382 = vsyncadd [#allocation6], 0
          %s383 = sshll.u32 %s1, 4
          %s384 = int_to_ptr.hbm [resolvable:$true] %s383
          %s385 = sshll.u32 [#allocation5], 4
          %s386 = int_to_ptr.vmem [resolvable:$true] %s385
          %391 = dma.hbm_to_vmem [thread:$0]  %s384, 5120, %s386, [#allocation6], 320, 320, 20
        $region16: #{tpu_custom_call.1} parent=11 // pred_fallthru
          _
        // Predicated region
        $region17: #{tpu_custom_call.1} parent=11 // pred_check
          %p392 = pneg %p115
        $region18: #{tpu_custom_call.1} parent=11 // pred_check_branch
          %394 = sbr.rel (%p392) target = $region20
        $region19: #{tpu_custom_call.1} parent=11 // pred_region
          %396 = vsyncadd [#allocation6], 0
          %s398 = sshll.u32 %s2, 4
          %s399 = int_to_ptr.hbm [resolvable:$true] %s398
          %s400 = sshll.u32 [#allocation7], 4
          %s401 = int_to_ptr.vmem [resolvable:$true] %s400
          %403 = dma.hbm_to_vmem [thread:$0]  %s399, 80, %s401, [#allocation6]
        $region20: #{tpu_custom_call.1} parent=11 // pred_fallthru
          _
        // Predicated region
        $region21: #{tpu_custom_call.1} parent=11 // pred_check
          %p404 = pneg %p136
        $region22: #{tpu_custom_call.1} parent=11 // pred_check_branch
          %406 = sbr.rel (%p404) target = $region24
        $region23: #{tpu_custom_call.1} parent=11 // pred_region
          _
        $region24: #{tpu_custom_call.1} parent=11 // pred_fallthru
          _
        // Predicated region
        $region25: #{tpu_custom_call.1} parent=11 // pred_check
          %p407 = pneg %p157
        $region26: #{tpu_custom_call.1} parent=11 // pred_check_branch
          %409 = sbr.rel (%p407) target = $region28
        $region27: #{tpu_custom_call.1} parent=11 // pred_region
          _
        $region28: #{tpu_custom_call.1} parent=11 // pred_fallthru
          _
        // Predicated region
        $region29: #{tpu_custom_call.1} parent=11 // pred_check
          %p410 = pneg %p178
        $region30: #{tpu_custom_call.1} parent=11 // pred_check_branch
          %412 = sbr.rel (%p410) target = $region32
        $region31: #{tpu_custom_call.1} parent=11 // pred_region
          _
        $region32: #{tpu_custom_call.1} parent=11 // pred_fallthru
          _
        // Predicated region
        $region33: #{tpu_custom_call.1} parent=11 // pred_check
          %p413 = pneg %p199
        $region34: #{tpu_custom_call.1} parent=11 // pred_check_branch
          %415 = sbr.rel (%p413) target = $region36
        $region35: #{tpu_custom_call.1} parent=11 // pred_region
          _
        $region36: #{tpu_custom_call.1} parent=11 // pred_fallthru
          _
        // Predicated region
        $region37: #{tpu_custom_call.1} parent=11 // pred_check
          %p416 = pneg %p225
        $region38: #{tpu_custom_call.1} parent=11 // pred_check_branch
          %418 = sbr.rel (%p416) target = $region40
        $region39: #{tpu_custom_call.1} parent=11 // pred_region
          %s419 = smul.u32 32, %s43
          %421 = vsyncadd [#allocation9], 0
          %s422 = smul.addr %s419, 8
          %s423 = scalar_lea.hbm %s7, %s422
          %s424 = sshll.u32 %s423, 4
          %s425 = int_to_ptr.hbm [resolvable:$true] %s424
          %s426 = sshll.u32 [#allocation8], 4
          %s427 = int_to_ptr.vmem [resolvable:$true] %s426
          %432 = dma.hbm_to_vmem [thread:$0]  %s425, 4096, %s427, [#allocation9], 128, 128, 8
        $region40: #{tpu_custom_call.1} parent=11 // pred_fallthru
          _
        // Predicated region
        $region41: #{tpu_custom_call.1} parent=11 // pred_check
          %p433 = pneg %p251
        $region42: #{tpu_custom_call.1} parent=11 // pred_check_branch
          %435 = sbr.rel (%p433) target = $region44
        $region43: #{tpu_custom_call.1} parent=11 // pred_region
          %s436 = smul.u32 32, %s43
          %438 = vsyncadd [#allocation9], 0
          %s439 = smul.addr %s436, 8
          %s440 = scalar_lea.hbm %s8, %s439
          %s441 = sshll.u32 %s440, 4
          %s442 = int_to_ptr.hbm [resolvable:$true] %s441
          %s443 = sshll.u32 [#allocation10], 4
          %s444 = int_to_ptr.vmem [resolvable:$true] %s443
          %449 = dma.hbm_to_vmem [thread:$0]  %s442, 4096, %s444, [#allocation9], 128, 128, 8
        $region44: #{tpu_custom_call.1} parent=11 // pred_fallthru
          _
      $region12: #{tpu_custom_call.1} parent=5 // pred_fallthru
        _
      %p450 = scmp.lt.s32.totalorder %s33, 2
      // Predicated region
      $region45: #{tpu_custom_call.1} parent=5 // pred_check
        %p451 = pneg %p450
      $region46: #{tpu_custom_call.1} parent=5 // pred_check_branch
        %453 = sbr.rel (%p451) target = $region48
      $region47: #{tpu_custom_call.1} parent=5 // pred_region
        // Predicated region
        $region49: #{tpu_custom_call.1} parent=47 // pred_check
          %p454 = pneg %p67
        $region50: #{tpu_custom_call.1} parent=47 // pred_check_branch
          %456 = sbr.rel (%p454) target = $region52
        $region51: #{tpu_custom_call.1} parent=47 // pred_region
          %s457 = sand.u32 %s57, 1
          %s458 = scalar_lea.sflag [#allocation3], %s457
          %s459 = sand.u32 %s57, 1
          %s460 = smul.addr %s459, 256
          %s461 = scalar_lea.vmem [#allocation2], %s460
          %s462 = smul.u32 32, %s41
          %464 = vsyncadd %s458, 0
          %s465 = smul.addr %s40, 32
          %s466 = sadd.s32 %s462, %s465
          %s467 = smul.addr %s466, 8
          %s468 = scalar_lea.hbm %s0, %s467
          %s469 = sshll.u32 %s468, 4
          %s470 = int_to_ptr.hbm [resolvable:$true] %s469
          %s471 = sshll.u32 %s461, 4
          %s472 = int_to_ptr.vmem [resolvable:$true] %s471
          %477 = dma.hbm_to_vmem [thread:$0]  %s470, 4096, %s472, %s458, 128, 128, 8
        $region52: #{tpu_custom_call.1} parent=47 // pred_fallthru
          _
      $region48: #{tpu_custom_call.1} parent=5 // pred_fallthru
        _
      %p478 = scmp.le.s32.totalorder 1, %s33
      %p479 = scmp.lt.s32.totalorder %s33, 3
      %p480 = pnand %p478, %p479
      %p481 = pneg %p480
      // Predicated region
      $region53: #{tpu_custom_call.1} parent=5 // pred_check
        _
      $region54: #{tpu_custom_call.1} parent=5 // pred_check_branch
        %483 = sbr.rel (%p480) target = $region56
      $region55: #{tpu_custom_call.1} parent=5 // pred_region
        %s484 = ssub.s32 %s33, 1
        %s485 = sand.u32 %s60, 1
        %s486 = scalar_lea.sflag [#allocation3], %s485
        %s487 = sand.u32 %s60, 1
        %s488 = smul.addr %s487, 256
        %s489 = scalar_lea.vmem [#allocation2], %s488
        // Predicated region
        $region57: #{tpu_custom_call.1} parent=55 // pred_check
          %p490 = pneg %p73
        $region58: #{tpu_custom_call.1} parent=55 // pred_check_branch
          %492 = sbr.rel (%p490) target = $region60
        $region59: #{tpu_custom_call.1} parent=55 // pred_region
          %494 = dma.done %s486, 4096
        $region60: #{tpu_custom_call.1} parent=55 // pred_fallthru
          _
        // Predicated region
        $region61: #{tpu_custom_call.1} parent=55 // pred_check
          %p495 = pneg %p94
        $region62: #{tpu_custom_call.1} parent=55 // pred_check_branch
          %497 = sbr.rel (%p495) target = $region64
        $region63: #{tpu_custom_call.1} parent=55 // pred_region
          %499 = dma.done [#allocation6], 5120
        $region64: #{tpu_custom_call.1} parent=55 // pred_fallthru
          _
        // Predicated region
        $region65: #{tpu_custom_call.1} parent=55 // pred_check
          %p500 = pneg %p115
        $region66: #{tpu_custom_call.1} parent=55 // pred_check_branch
          %502 = sbr.rel (%p500) target = $region68
        $region67: #{tpu_custom_call.1} parent=55 // pred_region
          %504 = dma.done [#allocation6], 80
        $region68: #{tpu_custom_call.1} parent=55 // pred_fallthru
          _
        // Predicated region
        $region69: #{tpu_custom_call.1} parent=55 // pred_check
          %p505 = pneg %p225
        $region70: #{tpu_custom_call.1} parent=55 // pred_check_branch
          %507 = sbr.rel (%p505) target = $region72
        $region71: #{tpu_custom_call.1} parent=55 // pred_region
          %509 = dma.done [#allocation9], 4096
        $region72: #{tpu_custom_call.1} parent=55 // pred_fallthru
          _
        // Predicated region
        $region73: #{tpu_custom_call.1} parent=55 // pred_check
          %p510 = pneg %p251
        $region74: #{tpu_custom_call.1} parent=55 // pred_check_branch
          %512 = sbr.rel (%p510) target = $region76
        $region75: #{tpu_custom_call.1} parent=55 // pred_region
          %514 = dma.done [#allocation9], 4096
        $region76: #{tpu_custom_call.1} parent=55 // pred_fallthru
          _
        %s515 = sand.u32 %s60, 1
        %s516 = scalar_lea.sflag [#allocation3], %s515
        %s517 = sand.u32 %s60, 1
        %s518 = smul.addr %s517, 256
        %s519 = scalar_lea.vmem [#allocation2], %s518
        %p520 = pneg %p73
        %p521 = pneg %p70
        %p522 = pneg %p94
        %p523 = pneg %p91
        %p524 = pneg %p115
        %p525 = pneg %p112
        %p526 = pneg %p136
        %p527 = pneg %p133
        %p528 = pneg %p157
        %p529 = pneg %p154
        %p530 = pneg %p178
        %p531 = pneg %p175
        %p532 = pneg %p199
        %p533 = pneg %p196
        %p534 = pneg %p225
        %p535 = pneg %p222
        %p536 = pneg %p251
        %p537 = pneg %p248
        %p538 = pneg %p279
        %p539 = pneg %p276
        %s540 = sand.u32 %s266, 1
        %s541 = scalar_lea.sflag [#allocation4], %s540
        %s542 = sand.u32 %s266, 1
        %s543 = smul.addr %s542, 128
        %s544 = scalar_lea.vmem [#allocation11], %s543
        %p545 = pneg %p307
        %p546 = pneg %p304
        %s547 = sand.u32 %s38, 1
        %s548 = scalar_lea.sflag [#allocation13], %s547
        %s549 = sand.u32 %s294, 1
        %s550 = smul.addr %s549, 128
        %s551 = scalar_lea.vmem [#allocation12], %s550
        %p552 = pneg %p335
        %p553 = pneg %p332
        %s554 = sand.u32 %s38, 1
        %s555 = scalar_lea.sflag [#allocation13], %s554
        %s556 = sand.u32 %s322, 1
        %s557 = smul.addr %s556, 256
        %s558 = scalar_lea.vmem [#allocation14], %s557
        %p559 = pneg %p363
        %p560 = pneg %p360
        %s561 = sand.u32 %s350, 1
        %s562 = scalar_lea.sflag [#allocation16], %s561
        %s563 = sand.u32 %s350, 1
        %s564 = smul.addr %s563, 256
        %s565 = scalar_lea.vmem [#allocation15], %s564
        %s566 = smul.u32 32, %s43
        %s567 = smul.u32 32, %s43
        %s568 = smul.u32 32, %s43
        %s569 = smul.u32 32, %s43
        %s570 = smul.u32 32, %s43
        %s571 = smul.u32 32, %s43
        %s572 = smul.u32 32, %s43
        %v574 = vld [vmem:[%s489] sm:$0xff]
        %v575 = vld [vmem:[%s489 + $0x8] sm:$0xff]
        %v576 = vld [vmem:[%s489 + $0x10] sm:$0xff]
        %v577 = vld [vmem:[%s489 + $0x18] sm:$0xff]
        %v578 = vld [vmem:[%s489 + $0x20] sm:$0xff]
        %v579 = vld [vmem:[%s489 + $0x28] sm:$0xff]
        %v580 = vld [vmem:[%s489 + $0x30] sm:$0xff]
        %v581 = vld [vmem:[%s489 + $0x38] sm:$0xff]
        %v582 = vld [vmem:[%s489 + $0x40] sm:$0xff]
        %v583 = vld [vmem:[%s489 + $0x48] sm:$0xff]
        %v584 = vld [vmem:[%s489 + $0x50] sm:$0xff]
        %v585 = vld [vmem:[%s489 + $0x58] sm:$0xff]
        %v586 = vld [vmem:[%s489 + $0x60] sm:$0xff]
        %v587 = vld [vmem:[%s489 + $0x68] sm:$0xff]
        %v588 = vld [vmem:[%s489 + $0x70] sm:$0xff]
        %v589 = vld [vmem:[%s489 + $0x78] sm:$0xff]
        %v590 = vld [vmem:[%s489 + $0x80] sm:$0xff]
        %v591 = vld [vmem:[%s489 + $0x88] sm:$0xff]
        %v592 = vld [vmem:[%s489 + $0x90] sm:$0xff]
        %v593 = vld [vmem:[%s489 + $0x98] sm:$0xff]
        %v594 = vld [vmem:[%s489 + $0xa0] sm:$0xff]
        %v595 = vld [vmem:[%s489 + $0xa8] sm:$0xff]
        %v596 = vld [vmem:[%s489 + $0xb0] sm:$0xff]
        %v597 = vld [vmem:[%s489 + $0xb8] sm:$0xff]
        %v598 = vld [vmem:[%s489 + $0xc0] sm:$0xff]
        %v599 = vld [vmem:[%s489 + $0xc8] sm:$0xff]
        %v600 = vld [vmem:[%s489 + $0xd0] sm:$0xff]
        %v601 = vld [vmem:[%s489 + $0xd8] sm:$0xff]
        %v602 = vld [vmem:[%s489 + $0xe0] sm:$0xff]
        %v603 = vld [vmem:[%s489 + $0xe8] sm:$0xff]
        %v604 = vld [vmem:[%s489 + $0xf0] sm:$0xff]
        %v605 = vld [vmem:[%s489 + $0xf8] sm:$0xff]
        %v606 = vpack.c.bf16 %v575, %v574
        %v607 = vpack.c.bf16 %v577, %v576
        %v608 = vpack.c.bf16 %v579, %v578
        %v609 = vpack.c.bf16 %v581, %v580
        %v610 = vpack.c.bf16 %v583, %v582
        %v611 = vpack.c.bf16 %v585, %v584
        %v612 = vpack.c.bf16 %v587, %v586
        %v613 = vpack.c.bf16 %v589, %v588
        %v614 = vpack.c.bf16 %v591, %v590
        %v615 = vpack.c.bf16 %v593, %v592
        %v616 = vpack.c.bf16 %v595, %v594
        %v617 = vpack.c.bf16 %v597, %v596
        %v618 = vpack.c.bf16 %v599, %v598
        %v619 = vpack.c.bf16 %v601, %v600
        %v620 = vpack.c.bf16 %v603, %v602
        %v621 = vpack.c.bf16 %v605, %v604
        %v622 = vld [vmem:[#allocation5] sm:$0xff]
        %v623 = vld [vmem:[#allocation5 + $0x8] sm:$0xff]
        %v624 = vld [vmem:[#allocation5 + $0x10] sm:$0xf]
        %v625 = vld [vmem:[#allocation5 + $0x14] sm:$0xff]
        %v626 = vld [vmem:[#allocation5 + $0x1c] sm:$0xff]
        %v627 = vld [vmem:[#allocation5 + $0x24] sm:$0xf]
        %v628 = vld [vmem:[#allocation5 + $0x28] sm:$0xff]
        %v629 = vld [vmem:[#allocation5 + $0x30] sm:$0xff]
        %v630 = vld [vmem:[#allocation5 + $0x38] sm:$0xf]
        %v631 = vld [vmem:[#allocation5 + $0x3c] sm:$0xff]
        %v632 = vld [vmem:[#allocation5 + $0x44] sm:$0xff]
        %v633 = vld [vmem:[#allocation5 + $0x4c] sm:$0xf]
        %v634 = vld [vmem:[#allocation5 + $0x50] sm:$0xff]
        %v635 = vld [vmem:[#allocation5 + $0x58] sm:$0xff]
        %v636 = vld [vmem:[#allocation5 + $0x60] sm:$0xf]
        %v637 = vld [vmem:[#allocation5 + $0x64] sm:$0xff]
        %v638 = vld [vmem:[#allocation5 + $0x6c] sm:$0xff]
        %v639 = vld [vmem:[#allocation5 + $0x74] sm:$0xf]
        %v640 = vld [vmem:[#allocation5 + $0x78] sm:$0xff]
        %v641 = vld [vmem:[#allocation5 + $0x80] sm:$0xff]
        %v642 = vld [vmem:[#allocation5 + $0x88] sm:$0xf]
        %v643 = vld [vmem:[#allocation5 + $0x8c] sm:$0xff]
        %v644 = vld [vmem:[#allocation5 + $0x94] sm:$0xff]
        %v645 = vld [vmem:[#allocation5 + $0x9c] sm:$0xf]
        %v646 = vld [vmem:[#allocation5 + $0xa0] sm:$0xff]
        %v647 = vld [vmem:[#allocation5 + $0xa8] sm:$0xff]
        %v648 = vld [vmem:[#allocation5 + $0xb0] sm:$0xf]
        %v649 = vld [vmem:[#allocation5 + $0xb4] sm:$0xff]
        %v650 = vld [vmem:[#allocation5 + $0xbc] sm:$0xff]
        %v651 = vld [vmem:[#allocation5 + $0xc4] sm:$0xf]
        %v652 = vld [vmem:[#allocation5 + $0xc8] sm:$0xff]
        %v653 = vld [vmem:[#allocation5 + $0xd0] sm:$0xff]
        %v654 = vld [vmem:[#allocation5 + $0xd8] sm:$0xf]
        %v655 = vld [vmem:[#allocation5 + $0xdc] sm:$0xff]
        %v656 = vld [vmem:[#allocation5 + $0xe4] sm:$0xff]
        %v657 = vld [vmem:[#allocation5 + $0xec] sm:$0xf]
        %v658 = vld [vmem:[#allocation5 + $0xf0] sm:$0xff]
        %v659 = vld [vmem:[#allocation5 + $0xf8] sm:$0xff]
        %v660 = vld [vmem:[#allocation5 + $0x100] sm:$0xf]
        %v661 = vld [vmem:[#allocation5 + $0x104] sm:$0xff]
        %v662 = vld [vmem:[#allocation5 + $0x10c] sm:$0xff]
        %v663 = vld [vmem:[#allocation5 + $0x114] sm:$0xf]
        %v664 = vld [vmem:[#allocation5 + $0x118] sm:$0xff]
        %v665 = vld [vmem:[#allocation5 + $0x120] sm:$0xff]
        %v666 = vld [vmem:[#allocation5 + $0x128] sm:$0xf]
        %v667 = vld [vmem:[#allocation5 + $0x12c] sm:$0xff]
        %v668 = vld [vmem:[#allocation5 + $0x134] sm:$0xff]
        %v669 = vld [vmem:[#allocation5 + $0x13c] sm:$0xf]
        %v670 = vld [vmem:[#allocation7] sm:$0x1f]
        %v672 = vperm.slane %v670, 0
        %v673 = vperm.slane %v670, 1
        %v674 = vperm.slane %v670, 2
        %v675 = vperm.slane %v670, 3
        %v676 = vperm.slane %v670, 4
        %v730 = vunpack.c.l.b16 %v622
        %v731 = vunpack.c.h.b16 %v622
        %v732 = vunpack.c.l.b16 %v623
        %v733 = vunpack.c.h.b16 %v623
        %v734 = vunpack.c.l.b16 %v624
        %v735 = vunpack.c.l.b16 %v625
        %v736 = vunpack.c.h.b16 %v625
        %v737 = vunpack.c.l.b16 %v626
        %v738 = vunpack.c.h.b16 %v626
        %v739 = vunpack.c.l.b16 %v627
        %v740 = vunpack.c.l.b16 %v628
        %v741 = vunpack.c.h.b16 %v628
        %v742 = vunpack.c.l.b16 %v629
        %v743 = vunpack.c.h.b16 %v629
        %v744 = vunpack.c.l.b16 %v630
        %v745 = vunpack.c.l.b16 %v631
        %v746 = vunpack.c.h.b16 %v631
        %v747 = vunpack.c.l.b16 %v632
        %v748 = vunpack.c.h.b16 %v632
        %v749 = vunpack.c.l.b16 %v633
        %v750 = vunpack.c.l.b16 %v634
        %v751 = vunpack.c.h.b16 %v634
        %v752 = vunpack.c.l.b16 %v635
        %v753 = vunpack.c.h.b16 %v635
        %v754 = vunpack.c.l.b16 %v636
        %v755 = vunpack.c.l.b16 %v637
        %v756 = vunpack.c.h.b16 %v637
        %v757 = vunpack.c.l.b16 %v638
        %v758 = vunpack.c.h.b16 %v638
        %v759 = vunpack.c.l.b16 %v639
        %v760 = vunpack.c.l.b16 %v640
        %v761 = vunpack.c.h.b16 %v640
        %v762 = vunpack.c.l.b16 %v641
        %v763 = vunpack.c.h.b16 %v641
        %v764 = vunpack.c.l.b16 %v642
        %v765 = vunpack.c.l.b16 %v643
        %v766 = vunpack.c.h.b16 %v643
        %v767 = vunpack.c.l.b16 %v644
        %v768 = vunpack.c.h.b16 %v644
        %v769 = vunpack.c.l.b16 %v645
        %v770 = vunpack.c.l.b16 %v646
        %v771 = vunpack.c.h.b16 %v646
        %v772 = vunpack.c.l.b16 %v647
        %v773 = vunpack.c.h.b16 %v647
        %v774 = vunpack.c.l.b16 %v648
        %v775 = vunpack.c.l.b16 %v649
        %v776 = vunpack.c.h.b16 %v649
        %v777 = vunpack.c.l.b16 %v650
        %v778 = vunpack.c.h.b16 %v650
        %v779 = vunpack.c.l.b16 %v651
        %v780 = vunpack.c.l.b16 %v652
        %v781 = vunpack.c.h.b16 %v652
        %v782 = vunpack.c.l.b16 %v653
        %v783 = vunpack.c.h.b16 %v653
        %v784 = vunpack.c.l.b16 %v654
        %v785 = vunpack.c.l.b16 %v655
        %v786 = vunpack.c.h.b16 %v655
        %v787 = vunpack.c.l.b16 %v656
        %v788 = vunpack.c.h.b16 %v656
        %v789 = vunpack.c.l.b16 %v657
        %v790 = vunpack.c.l.b16 %v658
        %v791 = vunpack.c.h.b16 %v658
        %v792 = vunpack.c.l.b16 %v659
        %v793 = vunpack.c.h.b16 %v659
        %v794 = vunpack.c.l.b16 %v660
        %v795 = vunpack.c.l.b16 %v661
        %v796 = vunpack.c.h.b16 %v661
        %v797 = vunpack.c.l.b16 %v662
        %v798 = vunpack.c.h.b16 %v662
        %v799 = vunpack.c.l.b16 %v663
        %v800 = vunpack.c.l.b16 %v664
        %v801 = vunpack.c.h.b16 %v664
        %v802 = vunpack.c.l.b16 %v665
        %v803 = vunpack.c.h.b16 %v665
        %v804 = vunpack.c.l.b16 %v666
        %v805 = vunpack.c.l.b16 %v667
        %v806 = vunpack.c.h.b16 %v667
        %v807 = vunpack.c.l.b16 %v668
        %v808 = vunpack.c.h.b16 %v668
        %v809 = vunpack.c.l.b16 %v669
        %v810 = vpack.c.b16 %v735, %v730
        %v811 = vpack.c.b16 %v736, %v731
        %v812 = vpack.c.b16 %v737, %v732
        %v813 = vpack.c.b16 %v738, %v733
        %v814 = vpack.c.b16 %v739, %v734
        %v815 = vpack.c.b16 %v745, %v740
        %v816 = vpack.c.b16 %v746, %v741
        %v817 = vpack.c.b16 %v747, %v742
        %v818 = vpack.c.b16 %v748, %v743
        %v819 = vpack.c.b16 %v749, %v744
        %v820 = vpack.c.b16 %v755, %v750
        %v821 = vpack.c.b16 %v756, %v751
        %v822 = vpack.c.b16 %v757, %v752
        %v823 = vpack.c.b16 %v758, %v753
        %v824 = vpack.c.b16 %v759, %v754
        %v825 = vpack.c.b16 %v765, %v760
        %v826 = vpack.c.b16 %v766, %v761
        %v827 = vpack.c.b16 %v767, %v762
        %v828 = vpack.c.b16 %v768, %v763
        %v829 = vpack.c.b16 %v769, %v764
        %v830 = vpack.c.b16 %v775, %v770
        %v831 = vpack.c.b16 %v776, %v771
        %v832 = vpack.c.b16 %v777, %v772
        %v833 = vpack.c.b16 %v778, %v773
        %v834 = vpack.c.b16 %v779, %v774
        %v835 = vpack.c.b16 %v785, %v780
        %v836 = vpack.c.b16 %v786, %v781
        %v837 = vpack.c.b16 %v787, %v782
        %v838 = vpack.c.b16 %v788, %v783
        %v839 = vpack.c.b16 %v789, %v784
        %v840 = vpack.c.b16 %v795, %v790
        %v841 = vpack.c.b16 %v796, %v791
        %v842 = vpack.c.b16 %v797, %v792
        %v843 = vpack.c.b16 %v798, %v793
        %v844 = vpack.c.b16 %v799, %v794
        %v845 = vpack.c.b16 %v805, %v800
        %v846 = vpack.c.b16 %v806, %v801
        %v847 = vpack.c.b16 %v807, %v802
        %v848 = vpack.c.b16 %v808, %v803
        %v849 = vpack.c.b16 %v809, %v804
        %890 = vmatpush.bf16.msra.mxu0 %v845
        %891 = vmatpush.bf16.msra.mxu0 %v840
        %892 = vmatpush.bf16.msra.mxu0 %v835
        %893 = vmatpush.bf16.msra.mxu0 %v830
        %894 = vmatpush.bf16.msra.mxu0 %v825
        %895 = vmatpush.bf16.msra.mxu0 %v820
        %896 = vmatpush.bf16.msra.mxu0 %v815
        %897 = vmatpush.bf16.msra.mxu0 %v810
        %898 = vmatmul.bf16.gmra.mxu0 %v606
        %v899 = vpop.f32.mrf.mxu0
        %v900 = vadd.f32 %v672, %v899
        %v901 = vpop.f32.mrf.mxu0
        %v902 = vadd.f32 %v672, %v901
        %903 = vmatmul.bf16.gmra.mxu0 %v607
        %v904 = vpop.f32.mrf.mxu0
        %v905 = vadd.f32 %v672, %v904
        %v906 = vpop.f32.mrf.mxu0
        %v907 = vadd.f32 %v672, %v906
        %908 = vmatmul.bf16.gmra.mxu0 %v608
        %v909 = vpop.f32.mrf.mxu0
        %v910 = vadd.f32 %v672, %v909
        %v911 = vpop.f32.mrf.mxu0
        %v912 = vadd.f32 %v672, %v911
        %913 = vmatmul.bf16.gmra.mxu0 %v609
        %v914 = vpop.f32.mrf.mxu0
        %v915 = vadd.f32 %v672, %v914
        %v916 = vpop.f32.mrf.mxu0
        %v917 = vadd.f32 %v672, %v916
        %918 = vmatmul.bf16.gmra.mxu0 %v610
        %v919 = vpop.f32.mrf.mxu0
        %v920 = vadd.f32 %v672, %v919
        %v921 = vpop.f32.mrf.mxu0
        %v922 = vadd.f32 %v672, %v921
        %923 = vmatmul.bf16.gmra.mxu0 %v611
        %v924 = vpop.f32.mrf.mxu0
        %v925 = vadd.f32 %v672, %v924
        %v926 = vpop.f32.mrf.mxu0
        %v927 = vadd.f32 %v672, %v926
        %928 = vmatmul.bf16.gmra.mxu0 %v612
        %v929 = vpop.f32.mrf.mxu0
        %v930 = vadd.f32 %v672, %v929
        %v931 = vpop.f32.mrf.mxu0
        %v932 = vadd.f32 %v672, %v931
        %933 = vmatmul.bf16.gmra.mxu0 %v613
        %v934 = vpop.f32.mrf.mxu0
        %v935 = vadd.f32 %v672, %v934
        %v936 = vpop.f32.mrf.mxu0
        %v937 = vadd.f32 %v672, %v936
        %938 = vmatmul.bf16.gmra.mxu0 %v614
        %v939 = vpop.f32.mrf.mxu0
        %v940 = vadd.f32 %v672, %v939
        %v941 = vpop.f32.mrf.mxu0
        %v942 = vadd.f32 %v672, %v941
        %943 = vmatmul.bf16.gmra.mxu0 %v615
        %v944 = vpop.f32.mrf.mxu0
        %v945 = vadd.f32 %v672, %v944
        %v946 = vpop.f32.mrf.mxu0
        %v947 = vadd.f32 %v672, %v946
        %948 = vmatmul.bf16.gmra.mxu0 %v616
        %v949 = vpop.f32.mrf.mxu0
        %v950 = vadd.f32 %v672, %v949
        %v951 = vpop.f32.mrf.mxu0
        %v952 = vadd.f32 %v672, %v951
        %953 = vmatmul.bf16.gmra.mxu0 %v617
        %v954 = vpop.f32.mrf.mxu0
        %v955 = vadd.f32 %v672, %v954
        %v956 = vpop.f32.mrf.mxu0
        %v957 = vadd.f32 %v672, %v956
        %958 = vmatmul.bf16.gmra.mxu0 %v618
        %v959 = vpop.f32.mrf.mxu0
        %v960 = vadd.f32 %v672, %v959
        %v961 = vpop.f32.mrf.mxu0
        %v962 = vadd.f32 %v672, %v961
        %963 = vmatmul.bf16.gmra.mxu0 %v619
        %v964 = vpop.f32.mrf.mxu0
        %v965 = vadd.f32 %v672, %v964
        %v966 = vpop.f32.mrf.mxu0
        %v967 = vadd.f32 %v672, %v966
        %968 = vmatmul.bf16.gmra.mxu0 %v620
        %v969 = vpop.f32.mrf.mxu0
        %v970 = vadd.f32 %v672, %v969
        %v971 = vpop.f32.mrf.mxu0
        %v972 = vadd.f32 %v672, %v971
        %973 = vmatmul.bf16.gmra.mxu0 %v621
        %v974 = vpop.f32.mrf.mxu0
        %v975 = vadd.f32 %v672, %v974
        %v976 = vpop.f32.mrf.mxu0
        %v977 = vadd.f32 %v672, %v976
        %978 = vdwg.mxu0
        %979 = vmatpush.bf16.msra.mxu0 %v846
        %980 = vmatpush.bf16.msra.mxu0 %v841
        %981 = vmatpush.bf16.msra.mxu0 %v836
        %982 = vmatpush.bf16.msra.mxu0 %v831
        %983 = vmatpush.bf16.msra.mxu0 %v826
        %984 = vmatpush.bf16.msra.mxu0 %v821
        %985 = vmatpush.bf16.msra.mxu0 %v816
        %986 = vmatpush.bf16.msra.mxu0 %v811
        %987 = vmatmul.bf16.gmra.mxu0 %v606
        %v988 = vpop.f32.mrf.mxu0
        %v989 = vadd.f32 %v673, %v988
        %v990 = vpop.f32.mrf.mxu0
        %v991 = vadd.f32 %v673, %v990
        %992 = vmatmul.bf16.gmra.mxu0 %v607
        %v993 = vpop.f32.mrf.mxu0
        %v994 = vadd.f32 %v673, %v993
        %v995 = vpop.f32.mrf.mxu0
        %v996 = vadd.f32 %v673, %v995
        %997 = vmatmul.bf16.gmra.mxu0 %v608
        %v998 = vpop.f32.mrf.mxu0
        %v999 = vadd.f32 %v673, %v998
        %v1000 = vpop.f32.mrf.mxu0
        %v1001 = vadd.f32 %v673, %v1000
        %1002 = vmatmul.bf16.gmra.mxu0 %v609
        %v1003 = vpop.f32.mrf.mxu0
        %v1004 = vadd.f32 %v673, %v1003
        %v1005 = vpop.f32.mrf.mxu0
        %v1006 = vadd.f32 %v673, %v1005
        %1007 = vmatmul.bf16.gmra.mxu0 %v610
        %v1008 = vpop.f32.mrf.mxu0
        %v1009 = vadd.f32 %v673, %v1008
        %v1010 = vpop.f32.mrf.mxu0
        %v1011 = vadd.f32 %v673, %v1010
        %1012 = vmatmul.bf16.gmra.mxu0 %v611
        %v1013 = vpop.f32.mrf.mxu0
        %v1014 = vadd.f32 %v673, %v1013
        %v1015 = vpop.f32.mrf.mxu0
        %v1016 = vadd.f32 %v673, %v1015
        %1017 = vmatmul.bf16.gmra.mxu0 %v612
        %v1018 = vpop.f32.mrf.mxu0
        %v1019 = vadd.f32 %v673, %v1018
        %v1020 = vpop.f32.mrf.mxu0
        %v1021 = vadd.f32 %v673, %v1020
        %1022 = vmatmul.bf16.gmra.mxu0 %v613
        %v1023 = vpop.f32.mrf.mxu0
        %v1024 = vadd.f32 %v673, %v1023
        %v1025 = vpop.f32.mrf.mxu0
        %v1026 = vadd.f32 %v673, %v1025
        %1027 = vmatmul.bf16.gmra.mxu0 %v614
        %v1028 = vpop.f32.mrf.mxu0
        %v1029 = vadd.f32 %v673, %v1028
        %v1030 = vpop.f32.mrf.mxu0
        %v1031 = vadd.f32 %v673, %v1030
        %1032 = vmatmul.bf16.gmra.mxu0 %v615
        %v1033 = vpop.f32.mrf.mxu0
        %v1034 = vadd.f32 %v673, %v1033
        %v1035 = vpop.f32.mrf.mxu0
        %v1036 = vadd.f32 %v673, %v1035
        %1037 = vmatmul.bf16.gmra.mxu0 %v616
        %v1038 = vpop.f32.mrf.mxu0
        %v1039 = vadd.f32 %v673, %v1038
        %v1040 = vpop.f32.mrf.mxu0
        %v1041 = vadd.f32 %v673, %v1040
        %1042 = vmatmul.bf16.gmra.mxu0 %v617
        %v1043 = vpop.f32.mrf.mxu0
        %v1044 = vadd.f32 %v673, %v1043
        %v1045 = vpop.f32.mrf.mxu0
        %v1046 = vadd.f32 %v673, %v1045
        %1047 = vmatmul.bf16.gmra.mxu0 %v618
        %v1048 = vpop.f32.mrf.mxu0
        %v1049 = vadd.f32 %v673, %v1048
        %v1050 = vpop.f32.mrf.mxu0
        %v1051 = vadd.f32 %v673, %v1050
        %1052 = vmatmul.bf16.gmra.mxu0 %v619
        %v1053 = vpop.f32.mrf.mxu0
        %v1054 = vadd.f32 %v673, %v1053
        %v1055 = vpop.f32.mrf.mxu0
        %v1056 = vadd.f32 %v673, %v1055
        %1057 = vmatmul.bf16.gmra.mxu0 %v620
        %v1058 = vpop.f32.mrf.mxu0
        %v1059 = vadd.f32 %v673, %v1058
        %v1060 = vpop.f32.mrf.mxu0
        %v1061 = vadd.f32 %v673, %v1060
        %1062 = vmatmul.bf16.gmra.mxu0 %v621
        %v1063 = vpop.f32.mrf.mxu0
        %v1064 = vadd.f32 %v673, %v1063
        %v1065 = vpop.f32.mrf.mxu0
        %v1066 = vadd.f32 %v673, %v1065
        %1067 = vdwg.mxu0
        %1068 = vmatpush.bf16.msra.mxu0 %v847
        %1069 = vmatpush.bf16.msra.mxu0 %v842
        %1070 = vmatpush.bf16.msra.mxu0 %v837
        %1071 = vmatpush.bf16.msra.mxu0 %v832
        %1072 = vmatpush.bf16.msra.mxu0 %v827
        %1073 = vmatpush.bf16.msra.mxu0 %v822
        %1074 = vmatpush.bf16.msra.mxu0 %v817
        %1075 = vmatpush.bf16.msra.mxu0 %v812
        %1076 = vmatmul.bf16.gmra.mxu0 %v606
        %v1077 = vpop.f32.mrf.mxu0
        %v1078 = vadd.f32 %v674, %v1077
        %v1079 = vpop.f32.mrf.mxu0
        %v1080 = vadd.f32 %v674, %v1079
        %1081 = vmatmul.bf16.gmra.mxu0 %v607
        %v1082 = vpop.f32.mrf.mxu0
        %v1083 = vadd.f32 %v674, %v1082
        %v1084 = vpop.f32.mrf.mxu0
        %v1085 = vadd.f32 %v674, %v1084
        %1086 = vmatmul.bf16.gmra.mxu0 %v608
        %v1087 = vpop.f32.mrf.mxu0
        %v1088 = vadd.f32 %v674, %v1087
        %v1089 = vpop.f32.mrf.mxu0
        %v1090 = vadd.f32 %v674, %v1089
        %1091 = vmatmul.bf16.gmra.mxu0 %v609
        %v1092 = vpop.f32.mrf.mxu0
        %v1093 = vadd.f32 %v674, %v1092
        %v1094 = vpop.f32.mrf.mxu0
        %v1095 = vadd.f32 %v674, %v1094
        %1096 = vmatmul.bf16.gmra.mxu0 %v610
        %v1097 = vpop.f32.mrf.mxu0
        %v1098 = vadd.f32 %v674, %v1097
        %v1099 = vpop.f32.mrf.mxu0
        %v1100 = vadd.f32 %v674, %v1099
        %1101 = vmatmul.bf16.gmra.mxu0 %v611
        %v1102 = vpop.f32.mrf.mxu0
        %v1103 = vadd.f32 %v674, %v1102
        %v1104 = vpop.f32.mrf.mxu0
        %v1105 = vadd.f32 %v674, %v1104
        %1106 = vmatmul.bf16.gmra.mxu0 %v612
        %v1107 = vpop.f32.mrf.mxu0
        %v1108 = vadd.f32 %v674, %v1107
        %v1109 = vpop.f32.mrf.mxu0
        %v1110 = vadd.f32 %v674, %v1109
        %1111 = vmatmul.bf16.gmra.mxu0 %v613
        %v1112 = vpop.f32.mrf.mxu0
        %v1113 = vadd.f32 %v674, %v1112
        %v1114 = vpop.f32.mrf.mxu0
        %v1115 = vadd.f32 %v674, %v1114
        %1116 = vmatmul.bf16.gmra.mxu0 %v614
        %v1117 = vpop.f32.mrf.mxu0
        %v1118 = vadd.f32 %v674, %v1117
        %v1119 = vpop.f32.mrf.mxu0
        %v1120 = vadd.f32 %v674, %v1119
        %1121 = vmatmul.bf16.gmra.mxu0 %v615
        %v1122 = vpop.f32.mrf.mxu0
        %v1123 = vadd.f32 %v674, %v1122
        %v1124 = vpop.f32.mrf.mxu0
        %v1125 = vadd.f32 %v674, %v1124
        %1126 = vmatmul.bf16.gmra.mxu0 %v616
        %v1127 = vpop.f32.mrf.mxu0
        %v1128 = vadd.f32 %v674, %v1127
        %v1129 = vpop.f32.mrf.mxu0
        %v1130 = vadd.f32 %v674, %v1129
        %1131 = vmatmul.bf16.gmra.mxu0 %v617
        %v1132 = vpop.f32.mrf.mxu0
        %v1133 = vadd.f32 %v674, %v1132
        %v1134 = vpop.f32.mrf.mxu0
        %v1135 = vadd.f32 %v674, %v1134
        %1136 = vmatmul.bf16.gmra.mxu0 %v618
        %v1137 = vpop.f32.mrf.mxu0
        %v1138 = vadd.f32 %v674, %v1137
        %v1139 = vpop.f32.mrf.mxu0
        %v1140 = vadd.f32 %v674, %v1139
        %1141 = vmatmul.bf16.gmra.mxu0 %v619
        %v1142 = vpop.f32.mrf.mxu0
        %v1143 = vadd.f32 %v674, %v1142
        %v1144 = vpop.f32.mrf.mxu0
        %v1145 = vadd.f32 %v674, %v1144
        %1146 = vmatmul.bf16.gmra.mxu0 %v620
        %v1147 = vpop.f32.mrf.mxu0
        %v1148 = vadd.f32 %v674, %v1147
        %v1149 = vpop.f32.mrf.mxu0
        %v1150 = vadd.f32 %v674, %v1149
        %1151 = vmatmul.bf16.gmra.mxu0 %v621
        %v1152 = vpop.f32.mrf.mxu0
        %v1153 = vadd.f32 %v674, %v1152
        %v1154 = vpop.f32.mrf.mxu0
        %v1155 = vadd.f32 %v674, %v1154
        %1156 = vdwg.mxu0
        %1157 = vmatpush.bf16.msra.mxu0 %v848
        %1158 = vmatpush.bf16.msra.mxu0 %v843
        %1159 = vmatpush.bf16.msra.mxu0 %v838
        %1160 = vmatpush.bf16.msra.mxu0 %v833
        %1161 = vmatpush.bf16.msra.mxu0 %v828
        %1162 = vmatpush.bf16.msra.mxu0 %v823
        %1163 = vmatpush.bf16.msra.mxu0 %v818
        %1164 = vmatpush.bf16.msra.mxu0 %v813
        %1165 = vmatmul.bf16.gmra.mxu0 %v606
        %v1166 = vpop.f32.mrf.mxu0
        %v1167 = vadd.f32 %v675, %v1166
        %v1168 = vpop.f32.mrf.mxu0
        %v1169 = vadd.f32 %v675, %v1168
        %1170 = vmatmul.bf16.gmra.mxu0 %v607
        %v1171 = vpop.f32.mrf.mxu0
        %v1172 = vadd.f32 %v675, %v1171
        %v1173 = vpop.f32.mrf.mxu0
        %v1174 = vadd.f32 %v675, %v1173
        %1175 = vmatmul.bf16.gmra.mxu0 %v608
        %v1176 = vpop.f32.mrf.mxu0
        %v1177 = vadd.f32 %v675, %v1176
        %v1178 = vpop.f32.mrf.mxu0
        %v1179 = vadd.f32 %v675, %v1178
        %1180 = vmatmul.bf16.gmra.mxu0 %v609
        %v1181 = vpop.f32.mrf.mxu0
        %v1182 = vadd.f32 %v675, %v1181
        %v1183 = vpop.f32.mrf.mxu0
        %v1184 = vadd.f32 %v675, %v1183
        %1185 = vmatmul.bf16.gmra.mxu0 %v610
        %v1186 = vpop.f32.mrf.mxu0
        %v1187 = vadd.f32 %v675, %v1186
        %v1188 = vpop.f32.mrf.mxu0
        %v1189 = vadd.f32 %v675, %v1188
        %1190 = vmatmul.bf16.gmra.mxu0 %v611
        %v1191 = vpop.f32.mrf.mxu0
        %v1192 = vadd.f32 %v675, %v1191
        %v1193 = vpop.f32.mrf.mxu0
        %v1194 = vadd.f32 %v675, %v1193
        %1195 = vmatmul.bf16.gmra.mxu0 %v612
        %v1196 = vpop.f32.mrf.mxu0
        %v1197 = vadd.f32 %v675, %v1196
        %v1198 = vpop.f32.mrf.mxu0
        %v1199 = vadd.f32 %v675, %v1198
        %1200 = vmatmul.bf16.gmra.mxu0 %v613
        %v1201 = vpop.f32.mrf.mxu0
        %v1202 = vadd.f32 %v675, %v1201
        %v1203 = vpop.f32.mrf.mxu0
        %v1204 = vadd.f32 %v675, %v1203
        %1205 = vmatmul.bf16.gmra.mxu0 %v614
        %v1206 = vpop.f32.mrf.mxu0
        %v1207 = vadd.f32 %v675, %v1206
        %v1208 = vpop.f32.mrf.mxu0
        %v1209 = vadd.f32 %v675, %v1208
        %1210 = vmatmul.bf16.gmra.mxu0 %v615
        %v1211 = vpop.f32.mrf.mxu0
        %v1212 = vadd.f32 %v675, %v1211
        %v1213 = vpop.f32.mrf.mxu0
        %v1214 = vadd.f32 %v675, %v1213
        %1215 = vmatmul.bf16.gmra.mxu0 %v616
        %v1216 = vpop.f32.mrf.mxu0
        %v1217 = vadd.f32 %v675, %v1216
        %v1218 = vpop.f32.mrf.mxu0
        %v1219 = vadd.f32 %v675, %v1218
        %1220 = vmatmul.bf16.gmra.mxu0 %v617
        %v1221 = vpop.f32.mrf.mxu0
        %v1222 = vadd.f32 %v675, %v1221
        %v1223 = vpop.f32.mrf.mxu0
        %v1224 = vadd.f32 %v675, %v1223
        %1225 = vmatmul.bf16.gmra.mxu0 %v618
        %v1226 = vpop.f32.mrf.mxu0
        %v1227 = vadd.f32 %v675, %v1226
        %v1228 = vpop.f32.mrf.mxu0
        %v1229 = vadd.f32 %v675, %v1228
        %1230 = vmatmul.bf16.gmra.mxu0 %v619
        %v1231 = vpop.f32.mrf.mxu0
        %v1232 = vadd.f32 %v675, %v1231
        %v1233 = vpop.f32.mrf.mxu0
        %v1234 = vadd.f32 %v675, %v1233
        %1235 = vmatmul.bf16.gmra.mxu0 %v620
        %v1236 = vpop.f32.mrf.mxu0
        %v1237 = vadd.f32 %v675, %v1236
        %v1238 = vpop.f32.mrf.mxu0
        %v1239 = vadd.f32 %v675, %v1238
        %1240 = vmatmul.bf16.gmra.mxu0 %v621
        %v1241 = vpop.f32.mrf.mxu0
        %v1242 = vadd.f32 %v675, %v1241
        %v1243 = vpop.f32.mrf.mxu0
        %v1244 = vadd.f32 %v675, %v1243
        %1245 = vdwg.mxu0
        %1246 = vmatpush.bf16.msra.mxu0 %v849
        %1247 = vmatpush.bf16.msra.mxu0 %v844
        %1248 = vmatpush.bf16.msra.mxu0 %v839
        %1249 = vmatpush.bf16.msra.mxu0 %v834
        %1250 = vmatpush.bf16.msra.mxu0 %v829
        %1251 = vmatpush.bf16.msra.mxu0 %v824
        %1252 = vmatpush.bf16.msra.mxu0 %v819
        %1253 = vmatpush.bf16.msra.mxu0 %v814
        %1254 = vmatmul.bf16.gmra.mxu0 %v606
        %v1255 = vpop.f32.mrf.mxu0
        %v1256 = vadd.f32 %v676, %v1255
        %v1257 = vpop.f32.mrf.mxu0
        %v1258 = vadd.f32 %v676, %v1257
        %1259 = vmatmul.bf16.gmra.mxu0 %v607
        %v1260 = vpop.f32.mrf.mxu0
        %v1261 = vadd.f32 %v676, %v1260
        %v1262 = vpop.f32.mrf.mxu0
        %v1263 = vadd.f32 %v676, %v1262
        %1264 = vmatmul.bf16.gmra.mxu0 %v608
        %v1265 = vpop.f32.mrf.mxu0
        %v1266 = vadd.f32 %v676, %v1265
        %v1267 = vpop.f32.mrf.mxu0
        %v1268 = vadd.f32 %v676, %v1267
        %1269 = vmatmul.bf16.gmra.mxu0 %v609
        %v1270 = vpop.f32.mrf.mxu0
        %v1271 = vadd.f32 %v676, %v1270
        %v1272 = vpop.f32.mrf.mxu0
        %v1273 = vadd.f32 %v676, %v1272
        %1274 = vmatmul.bf16.gmra.mxu0 %v610
        %v1275 = vpop.f32.mrf.mxu0
        %v1276 = vadd.f32 %v676, %v1275
        %v1277 = vpop.f32.mrf.mxu0
        %v1278 = vadd.f32 %v676, %v1277
        %1279 = vmatmul.bf16.gmra.mxu0 %v611
        %v1280 = vpop.f32.mrf.mxu0
        %v1281 = vadd.f32 %v676, %v1280
        %v1282 = vpop.f32.mrf.mxu0
        %v1283 = vadd.f32 %v676, %v1282
        %1284 = vmatmul.bf16.gmra.mxu0 %v612
        %v1285 = vpop.f32.mrf.mxu0
        %v1286 = vadd.f32 %v676, %v1285
        %v1287 = vpop.f32.mrf.mxu0
        %v1288 = vadd.f32 %v676, %v1287
        %1289 = vmatmul.bf16.gmra.mxu0 %v613
        %v1290 = vpop.f32.mrf.mxu0
        %v1291 = vadd.f32 %v676, %v1290
        %v1292 = vpop.f32.mrf.mxu0
        %v1293 = vadd.f32 %v676, %v1292
        %1294 = vmatmul.bf16.gmra.mxu0 %v614
        %v1295 = vpop.f32.mrf.mxu0
        %v1296 = vadd.f32 %v676, %v1295
        %v1297 = vpop.f32.mrf.mxu0
        %v1298 = vadd.f32 %v676, %v1297
        %1299 = vmatmul.bf16.gmra.mxu0 %v615
        %v1300 = vpop.f32.mrf.mxu0
        %v1301 = vadd.f32 %v676, %v1300
        %v1302 = vpop.f32.mrf.mxu0
        %v1303 = vadd.f32 %v676, %v1302
        %1304 = vmatmul.bf16.gmra.mxu0 %v616
        %v1305 = vpop.f32.mrf.mxu0
        %v1306 = vadd.f32 %v676, %v1305
        %v1307 = vpop.f32.mrf.mxu0
        %v1308 = vadd.f32 %v676, %v1307
        %1309 = vmatmul.bf16.gmra.mxu0 %v617
        %v1310 = vpop.f32.mrf.mxu0
        %v1311 = vadd.f32 %v676, %v1310
        %v1312 = vpop.f32.mrf.mxu0
        %v1313 = vadd.f32 %v676, %v1312
        %1314 = vmatmul.bf16.gmra.mxu0 %v618
        %v1315 = vpop.f32.mrf.mxu0
        %v1316 = vadd.f32 %v676, %v1315
        %v1317 = vpop.f32.mrf.mxu0
        %v1318 = vadd.f32 %v676, %v1317
        %1319 = vmatmul.bf16.gmra.mxu0 %v619
        %v1320 = vpop.f32.mrf.mxu0
        %v1321 = vadd.f32 %v676, %v1320
        %v1322 = vpop.f32.mrf.mxu0
        %v1323 = vadd.f32 %v676, %v1322
        %1324 = vmatmul.bf16.gmra.mxu0 %v620
        %v1325 = vpop.f32.mrf.mxu0
        %v1326 = vadd.f32 %v676, %v1325
        %v1327 = vpop.f32.mrf.mxu0
        %v1328 = vadd.f32 %v676, %v1327
        %1329 = vmatmul.bf16.gmra.mxu0 %v621
        %v1330 = vpop.f32.mrf.mxu0
        %v1331 = vadd.f32 %v676, %v1330
        %v1332 = vpop.f32.mrf.mxu0
        %v1333 = vadd.f32 %v676, %v1332
        %1334 = vdwg.mxu0
        %v1335 = vpack.c.bf16 %v989, %v900
        %v1336 = vpack.c.bf16 %v1167, %v1078
        %v1337 = vpack.c.bf16 %v1256, %v1256
        %v1338 = vpack.c.bf16 %v991, %v902
        %v1339 = vpack.c.bf16 %v1169, %v1080
        %v1340 = vpack.c.bf16 %v1258, %v1258
        %v1341 = vpack.c.bf16 %v994, %v905
        %v1342 = vpack.c.bf16 %v1172, %v1083
        %v1343 = vpack.c.bf16 %v1261, %v1261
        %v1344 = vpack.c.bf16 %v996, %v907
        %v1345 = vpack.c.bf16 %v1174, %v1085
        %v1346 = vpack.c.bf16 %v1263, %v1263
        %v1347 = vpack.c.bf16 %v999, %v910
        %v1348 = vpack.c.bf16 %v1177, %v1088
        %v1349 = vpack.c.bf16 %v1266, %v1266
        %v1350 = vpack.c.bf16 %v1001, %v912
        %v1351 = vpack.c.bf16 %v1179, %v1090
        %v1352 = vpack.c.bf16 %v1268, %v1268
        %v1353 = vpack.c.bf16 %v1004, %v915
        %v1354 = vpack.c.bf16 %v1182, %v1093
        %v1355 = vpack.c.bf16 %v1271, %v1271
        %v1356 = vpack.c.bf16 %v1006, %v917
        %v1357 = vpack.c.bf16 %v1184, %v1095
        %v1358 = vpack.c.bf16 %v1273, %v1273
        %v1359 = vpack.c.bf16 %v1009, %v920
        %v1360 = vpack.c.bf16 %v1187, %v1098
        %v1361 = vpack.c.bf16 %v1276, %v1276
        %v1362 = vpack.c.bf16 %v1011, %v922
        %v1363 = vpack.c.bf16 %v1189, %v1100
        %v1364 = vpack.c.bf16 %v1278, %v1278
        %v1365 = vpack.c.bf16 %v1014, %v925
        %v1366 = vpack.c.bf16 %v1192, %v1103
        %v1367 = vpack.c.bf16 %v1281, %v1281
        %v1368 = vpack.c.bf16 %v1016, %v927
        %v1369 = vpack.c.bf16 %v1194, %v1105
        %v1370 = vpack.c.bf16 %v1283, %v1283
        %v1371 = vpack.c.bf16 %v1019, %v930
        %v1372 = vpack.c.bf16 %v1197, %v1108
        %v1373 = vpack.c.bf16 %v1286, %v1286
        %v1374 = vpack.c.bf16 %v1021, %v932
        %v1375 = vpack.c.bf16 %v1199, %v1110
        %v1376 = vpack.c.bf16 %v1288, %v1288
        %v1377 = vpack.c.bf16 %v1024, %v935
        %v1378 = vpack.c.bf16 %v1202, %v1113
        %v1379 = vpack.c.bf16 %v1291, %v1291
        %v1380 = vpack.c.bf16 %v1026, %v937
        %v1381 = vpack.c.bf16 %v1204, %v1115
        %v1382 = vpack.c.bf16 %v1293, %v1293
        %v1383 = vpack.c.bf16 %v1029, %v940
        %v1384 = vpack.c.bf16 %v1207, %v1118
        %v1385 = vpack.c.bf16 %v1296, %v1296
        %v1386 = vpack.c.bf16 %v1031, %v942
        %v1387 = vpack.c.bf16 %v1209, %v1120
        %v1388 = vpack.c.bf16 %v1298, %v1298
        %v1389 = vpack.c.bf16 %v1034, %v945
        %v1390 = vpack.c.bf16 %v1212, %v1123
        %v1391 = vpack.c.bf16 %v1301, %v1301
        %v1392 = vpack.c.bf16 %v1036, %v947
        %v1393 = vpack.c.bf16 %v1214, %v1125
        %v1394 = vpack.c.bf16 %v1303, %v1303
        %v1395 = vpack.c.bf16 %v1039, %v950
        %v1396 = vpack.c.bf16 %v1217, %v1128
        %v1397 = vpack.c.bf16 %v1306, %v1306
        %v1398 = vpack.c.bf16 %v1041, %v952
        %v1399 = vpack.c.bf16 %v1219, %v1130
        %v1400 = vpack.c.bf16 %v1308, %v1308
        %v1401 = vpack.c.bf16 %v1044, %v955
        %v1402 = vpack.c.bf16 %v1222, %v1133
        %v1403 = vpack.c.bf16 %v1311, %v1311
        %v1404 = vpack.c.bf16 %v1046, %v957
        %v1405 = vpack.c.bf16 %v1224, %v1135
        %v1406 = vpack.c.bf16 %v1313, %v1313
        %v1407 = vpack.c.bf16 %v1049, %v960
        %v1408 = vpack.c.bf16 %v1227, %v1138
        %v1409 = vpack.c.bf16 %v1316, %v1316
        %v1410 = vpack.c.bf16 %v1051, %v962
        %v1411 = vpack.c.bf16 %v1229, %v1140
        %v1412 = vpack.c.bf16 %v1318, %v1318
        %v1413 = vpack.c.bf16 %v1054, %v965
        %v1414 = vpack.c.bf16 %v1232, %v1143
        %v1415 = vpack.c.bf16 %v1321, %v1321
        %v1416 = vpack.c.bf16 %v1056, %v967
        %v1417 = vpack.c.bf16 %v1234, %v1145
        %v1418 = vpack.c.bf16 %v1323, %v1323
        %v1419 = vpack.c.bf16 %v1059, %v970
        %v1420 = vpack.c.bf16 %v1237, %v1148
        %v1421 = vpack.c.bf16 %v1326, %v1326
        %v1422 = vpack.c.bf16 %v1061, %v972
        %v1423 = vpack.c.bf16 %v1239, %v1150
        %v1424 = vpack.c.bf16 %v1328, %v1328
        %v1425 = vpack.c.bf16 %v1064, %v975
        %v1426 = vpack.c.bf16 %v1242, %v1153
        %v1427 = vpack.c.bf16 %v1331, %v1331
        %v1428 = vpack.c.bf16 %v1066, %v977
        %v1429 = vpack.c.bf16 %v1244, %v1155
        %v1430 = vpack.c.bf16 %v1333, %v1333
        %v1431 = vxor.u32 %v1335, 2147516416
        %v1432 = vxor.u32 %v1336, 2147516416
        %v1433 = vxor.u32 %v1337, 2147516416
        %v1434 = vxor.u32 %v1338, 2147516416
        %v1435 = vxor.u32 %v1339, 2147516416
        %v1436 = vxor.u32 %v1340, 2147516416
        %v1437 = vxor.u32 %v1341, 2147516416
        %v1438 = vxor.u32 %v1342, 2147516416
        %v1439 = vxor.u32 %v1343, 2147516416
        %v1440 = vxor.u32 %v1344, 2147516416
        %v1441 = vxor.u32 %v1345, 2147516416
        %v1442 = vxor.u32 %v1346, 2147516416
        %v1443 = vxor.u32 %v1347, 2147516416
        %v1444 = vxor.u32 %v1348, 2147516416
        %v1445 = vxor.u32 %v1349, 2147516416
        %v1446 = vxor.u32 %v1350, 2147516416
        %v1447 = vxor.u32 %v1351, 2147516416
        %v1448 = vxor.u32 %v1352, 2147516416
        %v1449 = vxor.u32 %v1353, 2147516416
        %v1450 = vxor.u32 %v1354, 2147516416
        %v1451 = vxor.u32 %v1355, 2147516416
        %v1452 = vxor.u32 %v1356, 2147516416
        %v1453 = vxor.u32 %v1357, 2147516416
        %v1454 = vxor.u32 %v1358, 2147516416
        %v1455 = vxor.u32 %v1359, 2147516416
        %v1456 = vxor.u32 %v1360, 2147516416
        %v1457 = vxor.u32 %v1361, 2147516416
        %v1458 = vxor.u32 %v1362, 2147516416
        %v1459 = vxor.u32 %v1363, 2147516416
        %v1460 = vxor.u32 %v1364, 2147516416
        %v1461 = vxor.u32 %v1365, 2147516416
        %v1462 = vxor.u32 %v1366, 2147516416
        %v1463 = vxor.u32 %v1367, 2147516416
        %v1464 = vxor.u32 %v1368, 2147516416
        %v1465 = vxor.u32 %v1369, 2147516416
        %v1466 = vxor.u32 %v1370, 2147516416
        %v1467 = vxor.u32 %v1371, 2147516416
        %v1468 = vxor.u32 %v1372, 2147516416
        %v1469 = vxor.u32 %v1373, 2147516416
        %v1470 = vxor.u32 %v1374, 2147516416
        %v1471 = vxor.u32 %v1375, 2147516416
        %v1472 = vxor.u32 %v1376, 2147516416
        %v1473 = vxor.u32 %v1377, 2147516416
        %v1474 = vxor.u32 %v1378, 2147516416
        %v1475 = vxor.u32 %v1379, 2147516416
        %v1476 = vxor.u32 %v1380, 2147516416
        %v1477 = vxor.u32 %v1381, 2147516416
        %v1478 = vxor.u32 %v1382, 2147516416
        %v1479 = vxor.u32 %v1383, 2147516416
        %v1480 = vxor.u32 %v1384, 2147516416
        %v1481 = vxor.u32 %v1385, 2147516416
        %v1482 = vxor.u32 %v1386, 2147516416
        %v1483 = vxor.u32 %v1387, 2147516416
        %v1484 = vxor.u32 %v1388, 2147516416
        %v1485 = vxor.u32 %v1389, 2147516416
        %v1486 = vxor.u32 %v1390, 2147516416
        %v1487 = vxor.u32 %v1391, 2147516416
        %v1488 = vxor.u32 %v1392, 2147516416
        %v1489 = vxor.u32 %v1393, 2147516416
        %v1490 = vxor.u32 %v1394, 2147516416
        %v1491 = vxor.u32 %v1395, 2147516416
        %v1492 = vxor.u32 %v1396, 2147516416
        %v1493 = vxor.u32 %v1397, 2147516416
        %v1494 = vxor.u32 %v1398, 2147516416
        %v1495 = vxor.u32 %v1399, 2147516416
        %v1496 = vxor.u32 %v1400, 2147516416
        %v1497 = vxor.u32 %v1401, 2147516416
        %v1498 = vxor.u32 %v1402, 2147516416
        %v1499 = vxor.u32 %v1403, 2147516416
        %v1500 = vxor.u32 %v1404, 2147516416
        %v1501 = vxor.u32 %v1405, 2147516416
        %v1502 = vxor.u32 %v1406, 2147516416
        %v1503 = vxor.u32 %v1407, 2147516416
        %v1504 = vxor.u32 %v1408, 2147516416
        %v1505 = vxor.u32 %v1409, 2147516416
        %v1506 = vxor.u32 %v1410, 2147516416
        %v1507 = vxor.u32 %v1411, 2147516416
        %v1508 = vxor.u32 %v1412, 2147516416
        %v1509 = vxor.u32 %v1413, 2147516416
        %v1510 = vxor.u32 %v1414, 2147516416
        %v1511 = vxor.u32 %v1415, 2147516416
        %v1512 = vxor.u32 %v1416, 2147516416
        %v1513 = vxor.u32 %v1417, 2147516416
        %v1514 = vxor.u32 %v1418, 2147516416
        %v1515 = vxor.u32 %v1419, 2147516416
        %v1516 = vxor.u32 %v1420, 2147516416
        %v1517 = vxor.u32 %v1421, 2147516416
        %v1518 = vxor.u32 %v1422, 2147516416
        %v1519 = vxor.u32 %v1423, 2147516416
        %v1520 = vxor.u32 %v1424, 2147516416
        %v1521 = vxor.u32 %v1425, 2147516416
        %v1522 = vxor.u32 %v1426, 2147516416
        %v1523 = vxor.u32 %v1427, 2147516416
        %v1524 = vxor.u32 %v1428, 2147516416
        %v1525 = vxor.u32 %v1429, 2147516416
        %v1526 = vxor.u32 %v1430, 2147516416
        %v1527 = vunpack.c.l.bf16 %v1431
        %v1528 = vunpack.c.h.bf16 %v1431
        %v1529 = vunpack.c.l.bf16 %v1432
        %v1530 = vunpack.c.h.bf16 %v1432
        %v1531 = vunpack.c.l.bf16 %v1433
        %v1532 = vunpack.c.l.bf16 %v1434
        %v1533 = vunpack.c.h.bf16 %v1434
        %v1534 = vunpack.c.l.bf16 %v1435
        %v1535 = vunpack.c.h.bf16 %v1435
        %v1536 = vunpack.c.l.bf16 %v1436
        %v1537 = vunpack.c.l.bf16 %v1437
        %v1538 = vunpack.c.h.bf16 %v1437
        %v1539 = vunpack.c.l.bf16 %v1438
        %v1540 = vunpack.c.h.bf16 %v1438
        %v1541 = vunpack.c.l.bf16 %v1439
        %v1542 = vunpack.c.l.bf16 %v1440
        %v1543 = vunpack.c.h.bf16 %v1440
        %v1544 = vunpack.c.l.bf16 %v1441
        %v1545 = vunpack.c.h.bf16 %v1441
        %v1546 = vunpack.c.l.bf16 %v1442
        %v1547 = vunpack.c.l.bf16 %v1443
        %v1548 = vunpack.c.h.bf16 %v1443
        %v1549 = vunpack.c.l.bf16 %v1444
        %v1550 = vunpack.c.h.bf16 %v1444
        %v1551 = vunpack.c.l.bf16 %v1445
        %v1552 = vunpack.c.l.bf16 %v1446
        %v1553 = vunpack.c.h.bf16 %v1446
        %v1554 = vunpack.c.l.bf16 %v1447
        %v1555 = vunpack.c.h.bf16 %v1447
        %v1556 = vunpack.c.l.bf16 %v1448
        %v1557 = vunpack.c.l.bf16 %v1449
        %v1558 = vunpack.c.h.bf16 %v1449
        %v1559 = vunpack.c.l.bf16 %v1450
        %v1560 = vunpack.c.h.bf16 %v1450
        %v1561 = vunpack.c.l.bf16 %v1451
        %v1562 = vunpack.c.l.bf16 %v1452
        %v1563 = vunpack.c.h.bf16 %v1452
        %v1564 = vunpack.c.l.bf16 %v1453
        %v1565 = vunpack.c.h.bf16 %v1453
        %v1566 = vunpack.c.l.bf16 %v1454
        %v1567 = vunpack.c.l.bf16 %v1455
        %v1568 = vunpack.c.h.bf16 %v1455
        %v1569 = vunpack.c.l.bf16 %v1456
        %v1570 = vunpack.c.h.bf16 %v1456
        %v1571 = vunpack.c.l.bf16 %v1457
        %v1572 = vunpack.c.l.bf16 %v1458
        %v1573 = vunpack.c.h.bf16 %v1458
        %v1574 = vunpack.c.l.bf16 %v1459
        %v1575 = vunpack.c.h.bf16 %v1459
        %v1576 = vunpack.c.l.bf16 %v1460
        %v1577 = vunpack.c.l.bf16 %v1461
        %v1578 = vunpack.c.h.bf16 %v1461
        %v1579 = vunpack.c.l.bf16 %v1462
        %v1580 = vunpack.c.h.bf16 %v1462
        %v1581 = vunpack.c.l.bf16 %v1463
        %v1582 = vunpack.c.l.bf16 %v1464
        %v1583 = vunpack.c.h.bf16 %v1464
        %v1584 = vunpack.c.l.bf16 %v1465
        %v1585 = vunpack.c.h.bf16 %v1465
        %v1586 = vunpack.c.l.bf16 %v1466
        %v1587 = vunpack.c.l.bf16 %v1467
        %v1588 = vunpack.c.h.bf16 %v1467
        %v1589 = vunpack.c.l.bf16 %v1468
        %v1590 = vunpack.c.h.bf16 %v1468
        %v1591 = vunpack.c.l.bf16 %v1469
        %v1592 = vunpack.c.l.bf16 %v1470
        %v1593 = vunpack.c.h.bf16 %v1470
        %v1594 = vunpack.c.l.bf16 %v1471
        %v1595 = vunpack.c.h.bf16 %v1471
        %v1596 = vunpack.c.l.bf16 %v1472
        %v1597 = vunpack.c.l.bf16 %v1473
        %v1598 = vunpack.c.h.bf16 %v1473
        %v1599 = vunpack.c.l.bf16 %v1474
        %v1600 = vunpack.c.h.bf16 %v1474
        %v1601 = vunpack.c.l.bf16 %v1475
        %v1602 = vunpack.c.l.bf16 %v1476
        %v1603 = vunpack.c.h.bf16 %v1476
        %v1604 = vunpack.c.l.bf16 %v1477
        %v1605 = vunpack.c.h.bf16 %v1477
        %v1606 = vunpack.c.l.bf16 %v1478
        %v1607 = vunpack.c.l.bf16 %v1479
        %v1608 = vunpack.c.h.bf16 %v1479
        %v1609 = vunpack.c.l.bf16 %v1480
        %v1610 = vunpack.c.h.bf16 %v1480
        %v1611 = vunpack.c.l.bf16 %v1481
        %v1612 = vunpack.c.l.bf16 %v1482
        %v1613 = vunpack.c.h.bf16 %v1482
        %v1614 = vunpack.c.l.bf16 %v1483
        %v1615 = vunpack.c.h.bf16 %v1483
        %v1616 = vunpack.c.l.bf16 %v1484
        %v1617 = vunpack.c.l.bf16 %v1485
        %v1618 = vunpack.c.h.bf16 %v1485
        %v1619 = vunpack.c.l.bf16 %v1486
        %v1620 = vunpack.c.h.bf16 %v1486
        %v1621 = vunpack.c.l.bf16 %v1487
        %v1622 = vunpack.c.l.bf16 %v1488
        %v1623 = vunpack.c.h.bf16 %v1488
        %v1624 = vunpack.c.l.bf16 %v1489
        %v1625 = vunpack.c.h.bf16 %v1489
        %v1626 = vunpack.c.l.bf16 %v1490
        %v1627 = vunpack.c.l.bf16 %v1491
        %v1628 = vunpack.c.h.bf16 %v1491
        %v1629 = vunpack.c.l.bf16 %v1492
        %v1630 = vunpack.c.h.bf16 %v1492
        %v1631 = vunpack.c.l.bf16 %v1493
        %v1632 = vunpack.c.l.bf16 %v1494
        %v1633 = vunpack.c.h.bf16 %v1494
        %v1634 = vunpack.c.l.bf16 %v1495
        %v1635 = vunpack.c.h.bf16 %v1495
        %v1636 = vunpack.c.l.bf16 %v1496
        %v1637 = vunpack.c.l.bf16 %v1497
        %v1638 = vunpack.c.h.bf16 %v1497
        %v1639 = vunpack.c.l.bf16 %v1498
        %v1640 = vunpack.c.h.bf16 %v1498
        %v1641 = vunpack.c.l.bf16 %v1499
        %v1642 = vunpack.c.l.bf16 %v1500
        %v1643 = vunpack.c.h.bf16 %v1500
        %v1644 = vunpack.c.l.bf16 %v1501
        %v1645 = vunpack.c.h.bf16 %v1501
        %v1646 = vunpack.c.l.bf16 %v1502
        %v1647 = vunpack.c.l.bf16 %v1503
        %v1648 = vunpack.c.h.bf16 %v1503
        %v1649 = vunpack.c.l.bf16 %v1504
        %v1650 = vunpack.c.h.bf16 %v1504
        %v1651 = vunpack.c.l.bf16 %v1505
        %v1652 = vunpack.c.l.bf16 %v1506
        %v1653 = vunpack.c.h.bf16 %v1506
        %v1654 = vunpack.c.l.bf16 %v1507
        %v1655 = vunpack.c.h.bf16 %v1507
        %v1656 = vunpack.c.l.bf16 %v1508
        %v1657 = vunpack.c.l.bf16 %v1509
        %v1658 = vunpack.c.h.bf16 %v1509
        %v1659 = vunpack.c.l.bf16 %v1510
        %v1660 = vunpack.c.h.bf16 %v1510
        %v1661 = vunpack.c.l.bf16 %v1511
        %v1662 = vunpack.c.l.bf16 %v1512
        %v1663 = vunpack.c.h.bf16 %v1512
        %v1664 = vunpack.c.l.bf16 %v1513
        %v1665 = vunpack.c.h.bf16 %v1513
        %v1666 = vunpack.c.l.bf16 %v1514
        %v1667 = vunpack.c.l.bf16 %v1515
        %v1668 = vunpack.c.h.bf16 %v1515
        %v1669 = vunpack.c.l.bf16 %v1516
        %v1670 = vunpack.c.h.bf16 %v1516
        %v1671 = vunpack.c.l.bf16 %v1517
        %v1672 = vunpack.c.l.bf16 %v1518
        %v1673 = vunpack.c.h.bf16 %v1518
        %v1674 = vunpack.c.l.bf16 %v1519
        %v1675 = vunpack.c.h.bf16 %v1519
        %v1676 = vunpack.c.l.bf16 %v1520
        %v1677 = vunpack.c.l.bf16 %v1521
        %v1678 = vunpack.c.h.bf16 %v1521
        %v1679 = vunpack.c.l.bf16 %v1522
        %v1680 = vunpack.c.h.bf16 %v1522
        %v1681 = vunpack.c.l.bf16 %v1523
        %v1682 = vunpack.c.l.bf16 %v1524
        %v1683 = vunpack.c.h.bf16 %v1524
        %v1684 = vunpack.c.l.bf16 %v1525
        %v1685 = vunpack.c.h.bf16 %v1525
        %v1686 = vunpack.c.l.bf16 %v1526
        %v1687 = vmul.f32 %v1527, 1.442695
        %v1688 = vpow.pop %v1687
        %v1689 = vmul.f32 %v1528, 1.442695
        %v1690 = vpow.pop %v1689
        %v1691 = vmul.f32 %v1529, 1.442695
        %v1692 = vpow.pop %v1691
        %v1693 = vmul.f32 %v1530, 1.442695
        %v1694 = vpow.pop %v1693
        %v1695 = vmul.f32 %v1531, 1.442695
        %v1696 = vpow.pop %v1695
        %v1697 = vmul.f32 %v1532, 1.442695
        %v1698 = vpow.pop %v1697
        %v1699 = vmul.f32 %v1533, 1.442695
        %v1700 = vpow.pop %v1699
        %v1701 = vmul.f32 %v1534, 1.442695
        %v1702 = vpow.pop %v1701
        %v1703 = vmul.f32 %v1535, 1.442695
        %v1704 = vpow.pop %v1703
        %v1705 = vmul.f32 %v1536, 1.442695
        %v1706 = vpow.pop %v1705
        %v1707 = vmul.f32 %v1537, 1.442695
        %v1708 = vpow.pop %v1707
        %v1709 = vmul.f32 %v1538, 1.442695
        %v1710 = vpow.pop %v1709
        %v1711 = vmul.f32 %v1539, 1.442695
        %v1712 = vpow.pop %v1711
        %v1713 = vmul.f32 %v1540, 1.442695
        %v1714 = vpow.pop %v1713
        %v1715 = vmul.f32 %v1541, 1.442695
        %v1716 = vpow.pop %v1715
        %v1717 = vmul.f32 %v1542, 1.442695
        %v1718 = vpow.pop %v1717
        %v1719 = vmul.f32 %v1543, 1.442695
        %v1720 = vpow.pop %v1719
        %v1721 = vmul.f32 %v1544, 1.442695
        %v1722 = vpow.pop %v1721
        %v1723 = vmul.f32 %v1545, 1.442695
        %v1724 = vpow.pop %v1723
        %v1725 = vmul.f32 %v1546, 1.442695
        %v1726 = vpow.pop %v1725
        %v1727 = vmul.f32 %v1547, 1.442695
        %v1728 = vpow.pop %v1727
        %v1729 = vmul.f32 %v1548, 1.442695
        %v1730 = vpow.pop %v1729
        %v1731 = vmul.f32 %v1549, 1.442695
        %v1732 = vpow.pop %v1731
        %v1733 = vmul.f32 %v1550, 1.442695
        %v1734 = vpow.pop %v1733
        %v1735 = vmul.f32 %v1551, 1.442695
        %v1736 = vpow.pop %v1735
        %v1737 = vmul.f32 %v1552, 1.442695
        %v1738 = vpow.pop %v1737
        %v1739 = vmul.f32 %v1553, 1.442695
        %v1740 = vpow.pop %v1739
        %v1741 = vmul.f32 %v1554, 1.442695
        %v1742 = vpow.pop %v1741
        %v1743 = vmul.f32 %v1555, 1.442695
        %v1744 = vpow.pop %v1743
        %v1745 = vmul.f32 %v1556, 1.442695
        %v1746 = vpow.pop %v1745
        %v1747 = vmul.f32 %v1557, 1.442695
        %v1748 = vpow.pop %v1747
        %v1749 = vmul.f32 %v1558, 1.442695
        %v1750 = vpow.pop %v1749
        %v1751 = vmul.f32 %v1559, 1.442695
        %v1752 = vpow.pop %v1751
        %v1753 = vmul.f32 %v1560, 1.442695
        %v1754 = vpow.pop %v1753
        %v1755 = vmul.f32 %v1561, 1.442695
        %v1756 = vpow.pop %v1755
        %v1757 = vmul.f32 %v1562, 1.442695
        %v1758 = vpow.pop %v1757
        %v1759 = vmul.f32 %v1563, 1.442695
        %v1760 = vpow.pop %v1759
        %v1761 = vmul.f32 %v1564, 1.442695
        %v1762 = vpow.pop %v1761
        %v1763 = vmul.f32 %v1565, 1.442695
        %v1764 = vpow.pop %v1763
        %v1765 = vmul.f32 %v1566, 1.442695
        %v1766 = vpow.pop %v1765
        %v1767 = vmul.f32 %v1567, 1.442695
        %v1768 = vpow.pop %v1767
        %v1769 = vmul.f32 %v1568, 1.442695
        %v1770 = vpow.pop %v1769
        %v1771 = vmul.f32 %v1569, 1.442695
        %v1772 = vpow.pop %v1771
        %v1773 = vmul.f32 %v1570, 1.442695
        %v1774 = vpow.pop %v1773
        %v1775 = vmul.f32 %v1571, 1.442695
        %v1776 = vpow.pop %v1775
        %v1777 = vmul.f32 %v1572, 1.442695
        %v1778 = vpow.pop %v1777
        %v1779 = vmul.f32 %v1573, 1.442695
        %v1780 = vpow.pop %v1779
        %v1781 = vmul.f32 %v1574, 1.442695
        %v1782 = vpow.pop %v1781
        %v1783 = vmul.f32 %v1575, 1.442695
        %v1784 = vpow.pop %v1783
        %v1785 = vmul.f32 %v1576, 1.442695
        %v1786 = vpow.pop %v1785
        %v1787 = vmul.f32 %v1577, 1.442695
        %v1788 = vpow.pop %v1787
        %v1789 = vmul.f32 %v1578, 1.442695
        %v1790 = vpow.pop %v1789
        %v1791 = vmul.f32 %v1579, 1.442695
        %v1792 = vpow.pop %v1791
        %v1793 = vmul.f32 %v1580, 1.442695
        %v1794 = vpow.pop %v1793
        %v1795 = vmul.f32 %v1581, 1.442695
        %v1796 = vpow.pop %v1795
        %v1797 = vmul.f32 %v1582, 1.442695
        %v1798 = vpow.pop %v1797
        %v1799 = vmul.f32 %v1583, 1.442695
        %v1800 = vpow.pop %v1799
        %v1801 = vmul.f32 %v1584, 1.442695
        %v1802 = vpow.pop %v1801
        %v1803 = vmul.f32 %v1585, 1.442695
        %v1804 = vpow.pop %v1803
        %v1805 = vmul.f32 %v1586, 1.442695
        %v1806 = vpow.pop %v1805
        %v1807 = vmul.f32 %v1587, 1.442695
        %v1808 = vpow.pop %v1807
        %v1809 = vmul.f32 %v1588, 1.442695
        %v1810 = vpow.pop %v1809
        %v1811 = vmul.f32 %v1589, 1.442695
        %v1812 = vpow.pop %v1811
        %v1813 = vmul.f32 %v1590, 1.442695
        %v1814 = vpow.pop %v1813
        %v1815 = vmul.f32 %v1591, 1.442695
        %v1816 = vpow.pop %v1815
        %v1817 = vmul.f32 %v1592, 1.442695
        %v1818 = vpow.pop %v1817
        %v1819 = vmul.f32 %v1593, 1.442695
        %v1820 = vpow.pop %v1819
        %v1821 = vmul.f32 %v1594, 1.442695
        %v1822 = vpow.pop %v1821
        %v1823 = vmul.f32 %v1595, 1.442695
        %v1824 = vpow.pop %v1823
        %v1825 = vmul.f32 %v1596, 1.442695
        %v1826 = vpow.pop %v1825
        %v1827 = vmul.f32 %v1597, 1.442695
        %v1828 = vpow.pop %v1827
        %v1829 = vmul.f32 %v1598, 1.442695
        %v1830 = vpow.pop %v1829
        %v1831 = vmul.f32 %v1599, 1.442695
        %v1832 = vpow.pop %v1831
        %v1833 = vmul.f32 %v1600, 1.442695
        %v1834 = vpow.pop %v1833
        %v1835 = vmul.f32 %v1601, 1.442695
        %v1836 = vpow.pop %v1835
        %v1837 = vmul.f32 %v1602, 1.442695
        %v1838 = vpow.pop %v1837
        %v1839 = vmul.f32 %v1603, 1.442695
        %v1840 = vpow.pop %v1839
        %v1841 = vmul.f32 %v1604, 1.442695
        %v1842 = vpow.pop %v1841
        %v1843 = vmul.f32 %v1605, 1.442695
        %v1844 = vpow.pop %v1843
        %v1845 = vmul.f32 %v1606, 1.442695
        %v1846 = vpow.pop %v1845
        %v1847 = vmul.f32 %v1607, 1.442695
        %v1848 = vpow.pop %v1847
        %v1849 = vmul.f32 %v1608, 1.442695
        %v1850 = vpow.pop %v1849
        %v1851 = vmul.f32 %v1609, 1.442695
        %v1852 = vpow.pop %v1851
        %v1853 = vmul.f32 %v1610, 1.442695
        %v1854 = vpow.pop %v1853
        %v1855 = vmul.f32 %v1611, 1.442695
        %v1856 = vpow.pop %v1855
        %v1857 = vmul.f32 %v1612, 1.442695
        %v1858 = vpow.pop %v1857
        %v1859 = vmul.f32 %v1613, 1.442695
        %v1860 = vpow.pop %v1859
        %v1861 = vmul.f32 %v1614, 1.442695
        %v1862 = vpow.pop %v1861
        %v1863 = vmul.f32 %v1615, 1.442695
        %v1864 = vpow.pop %v1863
        %v1865 = vmul.f32 %v1616, 1.442695
        %v1866 = vpow.pop %v1865
        %v1867 = vmul.f32 %v1617, 1.442695
        %v1868 = vpow.pop %v1867
        %v1869 = vmul.f32 %v1618, 1.442695
        %v1870 = vpow.pop %v1869
        %v1871 = vmul.f32 %v1619, 1.442695
        %v1872 = vpow.pop %v1871
        %v1873 = vmul.f32 %v1620, 1.442695
        %v1874 = vpow.pop %v1873
        %v1875 = vmul.f32 %v1621, 1.442695
        %v1876 = vpow.pop %v1875
        %v1877 = vmul.f32 %v1622, 1.442695
        %v1878 = vpow.pop %v1877
        %v1879 = vmul.f32 %v1623, 1.442695
        %v1880 = vpow.pop %v1879
        %v1881 = vmul.f32 %v1624, 1.442695
        %v1882 = vpow.pop %v1881
        %v1883 = vmul.f32 %v1625, 1.442695
        %v1884 = vpow.pop %v1883
        %v1885 = vmul.f32 %v1626, 1.442695
        %v1886 = vpow.pop %v1885
        %v1887 = vmul.f32 %v1627, 1.442695
        %v1888 = vpow.pop %v1887
        %v1889 = vmul.f32 %v1628, 1.442695
        %v1890 = vpow.pop %v1889
        %v1891 = vmul.f32 %v1629, 1.442695
        %v1892 = vpow.pop %v1891
        %v1893 = vmul.f32 %v1630, 1.442695
        %v1894 = vpow.pop %v1893
        %v1895 = vmul.f32 %v1631, 1.442695
        %v1896 = vpow.pop %v1895
        %v1897 = vmul.f32 %v1632, 1.442695
        %v1898 = vpow.pop %v1897
        %v1899 = vmul.f32 %v1633, 1.442695
        %v1900 = vpow.pop %v1899
        %v1901 = vmul.f32 %v1634, 1.442695
        %v1902 = vpow.pop %v1901
        %v1903 = vmul.f32 %v1635, 1.442695
        %v1904 = vpow.pop %v1903
        %v1905 = vmul.f32 %v1636, 1.442695
        %v1906 = vpow.pop %v1905
        %v1907 = vmul.f32 %v1637, 1.442695
        %v1908 = vpow.pop %v1907
        %v1909 = vmul.f32 %v1638, 1.442695
        %v1910 = vpow.pop %v1909
        %v1911 = vmul.f32 %v1639, 1.442695
        %v1912 = vpow.pop %v1911
        %v1913 = vmul.f32 %v1640, 1.442695
        %v1914 = vpow.pop %v1913
        %v1915 = vmul.f32 %v1641, 1.442695
        %v1916 = vpow.pop %v1915
        %v1917 = vmul.f32 %v1642, 1.442695
        %v1918 = vpow.pop %v1917
        %v1919 = vmul.f32 %v1643, 1.442695
        %v1920 = vpow.pop %v1919
        %v1921 = vmul.f32 %v1644, 1.442695
        %v1922 = vpow.pop %v1921
        %v1923 = vmul.f32 %v1645, 1.442695
        %v1924 = vpow.pop %v1923
        %v1925 = vmul.f32 %v1646, 1.442695
        %v1926 = vpow.pop %v1925
        %v1927 = vmul.f32 %v1647, 1.442695
        %v1928 = vpow.pop %v1927
        %v1929 = vmul.f32 %v1648, 1.442695
        %v1930 = vpow.pop %v1929
        %v1931 = vmul.f32 %v1649, 1.442695
        %v1932 = vpow.pop %v1931
        %v1933 = vmul.f32 %v1650, 1.442695
        %v1934 = vpow.pop %v1933
        %v1935 = vmul.f32 %v1651, 1.442695
        %v1936 = vpow.pop %v1935
        %v1937 = vmul.f32 %v1652, 1.442695
        %v1938 = vpow.pop %v1937
        %v1939 = vmul.f32 %v1653, 1.442695
        %v1940 = vpow.pop %v1939
        %v1941 = vmul.f32 %v1654, 1.442695
        %v1942 = vpow.pop %v1941
        %v1943 = vmul.f32 %v1655, 1.442695
        %v1944 = vpow.pop %v1943
        %v1945 = vmul.f32 %v1656, 1.442695
        %v1946 = vpow.pop %v1945
        %v1947 = vmul.f32 %v1657, 1.442695
        %v1948 = vpow.pop %v1947
        %v1949 = vmul.f32 %v1658, 1.442695
        %v1950 = vpow.pop %v1949
        %v1951 = vmul.f32 %v1659, 1.442695
        %v1952 = vpow.pop %v1951
        %v1953 = vmul.f32 %v1660, 1.442695
        %v1954 = vpow.pop %v1953
        %v1955 = vmul.f32 %v1661, 1.442695
        %v1956 = vpow.pop %v1955
        %v1957 = vmul.f32 %v1662, 1.442695
        %v1958 = vpow.pop %v1957
        %v1959 = vmul.f32 %v1663, 1.442695
        %v1960 = vpow.pop %v1959
        %v1961 = vmul.f32 %v1664, 1.442695
        %v1962 = vpow.pop %v1961
        %v1963 = vmul.f32 %v1665, 1.442695
        %v1964 = vpow.pop %v1963
        %v1965 = vmul.f32 %v1666, 1.442695
        %v1966 = vpow.pop %v1965
        %v1967 = vmul.f32 %v1667, 1.442695
        %v1968 = vpow.pop %v1967
        %v1969 = vmul.f32 %v1668, 1.442695
        %v1970 = vpow.pop %v1969
        %v1971 = vmul.f32 %v1669, 1.442695
        %v1972 = vpow.pop %v1971
        %v1973 = vmul.f32 %v1670, 1.442695
        %v1974 = vpow.pop %v1973
        %v1975 = vmul.f32 %v1671, 1.442695
        %v1976 = vpow.pop %v1975
        %v1977 = vmul.f32 %v1672, 1.442695
        %v1978 = vpow.pop %v1977
        %v1979 = vmul.f32 %v1673, 1.442695
        %v1980 = vpow.pop %v1979
        %v1981 = vmul.f32 %v1674, 1.442695
        %v1982 = vpow.pop %v1981
        %v1983 = vmul.f32 %v1675, 1.442695
        %v1984 = vpow.pop %v1983
        %v1985 = vmul.f32 %v1676, 1.442695
        %v1986 = vpow.pop %v1985
        %v1987 = vmul.f32 %v1677, 1.442695
        %v1988 = vpow.pop %v1987
        %v1989 = vmul.f32 %v1678, 1.442695
        %v1990 = vpow.pop %v1989
        %v1991 = vmul.f32 %v1679, 1.442695
        %v1992 = vpow.pop %v1991
        %v1993 = vmul.f32 %v1680, 1.442695
        %v1994 = vpow.pop %v1993
        %v1995 = vmul.f32 %v1681, 1.442695
        %v1996 = vpow.pop %v1995
        %v1997 = vmul.f32 %v1682, 1.442695
        %v1998 = vpow.pop %v1997
        %v1999 = vmul.f32 %v1683, 1.442695
        %v2000 = vpow.pop %v1999
        %v2001 = vmul.f32 %v1684, 1.442695
        %v2002 = vpow.pop %v2001
        %v2003 = vmul.f32 %v1685, 1.442695
        %v2004 = vpow.pop %v2003
        %v2005 = vmul.f32 %v1686, 1.442695
        %v2006 = vpow.pop %v2005
        %v2007 = vpack.c.bf16 %v1690, %v1688
        %v2008 = vpack.c.bf16 %v1694, %v1692
        %v2009 = vpack.c.bf16 %v1696, %v1696
        %v2010 = vpack.c.bf16 %v1700, %v1698
        %v2011 = vpack.c.bf16 %v1704, %v1702
        %v2012 = vpack.c.bf16 %v1706, %v1706
        %v2013 = vpack.c.bf16 %v1710, %v1708
        %v2014 = vpack.c.bf16 %v1714, %v1712
        %v2015 = vpack.c.bf16 %v1716, %v1716
        %v2016 = vpack.c.bf16 %v1720, %v1718
        %v2017 = vpack.c.bf16 %v1724, %v1722
        %v2018 = vpack.c.bf16 %v1726, %v1726
        %v2019 = vpack.c.bf16 %v1730, %v1728
        %v2020 = vpack.c.bf16 %v1734, %v1732
        %v2021 = vpack.c.bf16 %v1736, %v1736
        %v2022 = vpack.c.bf16 %v1740, %v1738
        %v2023 = vpack.c.bf16 %v1744, %v1742
        %v2024 = vpack.c.bf16 %v1746, %v1746
        %v2025 = vpack.c.bf16 %v1750, %v1748
        %v2026 = vpack.c.bf16 %v1754, %v1752
        %v2027 = vpack.c.bf16 %v1756, %v1756
        %v2028 = vpack.c.bf16 %v1760, %v1758
        %v2029 = vpack.c.bf16 %v1764, %v1762
        %v2030 = vpack.c.bf16 %v1766, %v1766
        %v2031 = vpack.c.bf16 %v1770, %v1768
        %v2032 = vpack.c.bf16 %v1774, %v1772
        %v2033 = vpack.c.bf16 %v1776, %v1776
        %v2034 = vpack.c.bf16 %v1780, %v1778
        %v2035 = vpack.c.bf16 %v1784, %v1782
        %v2036 = vpack.c.bf16 %v1786, %v1786
        %v2037 = vpack.c.bf16 %v1790, %v1788
        %v2038 = vpack.c.bf16 %v1794, %v1792
        %v2039 = vpack.c.bf16 %v1796, %v1796
        %v2040 = vpack.c.bf16 %v1800, %v1798
        %v2041 = vpack.c.bf16 %v1804, %v1802
        %v2042 = vpack.c.bf16 %v1806, %v1806
        %v2043 = vpack.c.bf16 %v1810, %v1808
        %v2044 = vpack.c.bf16 %v1814, %v1812
        %v2045 = vpack.c.bf16 %v1816, %v1816
        %v2046 = vpack.c.bf16 %v1820, %v1818
        %v2047 = vpack.c.bf16 %v1824, %v1822
        %v2048 = vpack.c.bf16 %v1826, %v1826
        %v2049 = vpack.c.bf16 %v1830, %v1828
        %v2050 = vpack.c.bf16 %v1834, %v1832
        %v2051 = vpack.c.bf16 %v1836, %v1836
        %v2052 = vpack.c.bf16 %v1840, %v1838
        %v2053 = vpack.c.bf16 %v1844, %v1842
        %v2054 = vpack.c.bf16 %v1846, %v1846
        %v2055 = vpack.c.bf16 %v1850, %v1848
        %v2056 = vpack.c.bf16 %v1854, %v1852
        %v2057 = vpack.c.bf16 %v1856, %v1856
        %v2058 = vpack.c.bf16 %v1860, %v1858
        %v2059 = vpack.c.bf16 %v1864, %v1862
        %v2060 = vpack.c.bf16 %v1866, %v1866
        %v2061 = vpack.c.bf16 %v1870, %v1868
        %v2062 = vpack.c.bf16 %v1874, %v1872
        %v2063 = vpack.c.bf16 %v1876, %v1876
        %v2064 = vpack.c.bf16 %v1880, %v1878
        %v2065 = vpack.c.bf16 %v1884, %v1882
        %v2066 = vpack.c.bf16 %v1886, %v1886
        %v2067 = vpack.c.bf16 %v1890, %v1888
        %v2068 = vpack.c.bf16 %v1894, %v1892
        %v2069 = vpack.c.bf16 %v1896, %v1896
        %v2070 = vpack.c.bf16 %v1900, %v1898
        %v2071 = vpack.c.bf16 %v1904, %v1902
        %v2072 = vpack.c.bf16 %v1906, %v1906
        %v2073 = vpack.c.bf16 %v1910, %v1908
        %v2074 = vpack.c.bf16 %v1914, %v1912
        %v2075 = vpack.c.bf16 %v1916, %v1916
        %v2076 = vpack.c.bf16 %v1920, %v1918
        %v2077 = vpack.c.bf16 %v1924, %v1922
        %v2078 = vpack.c.bf16 %v1926, %v1926
        %v2079 = vpack.c.bf16 %v1930, %v1928
        %v2080 = vpack.c.bf16 %v1934, %v1932
        %v2081 = vpack.c.bf16 %v1936, %v1936
        %v2082 = vpack.c.bf16 %v1940, %v1938
        %v2083 = vpack.c.bf16 %v1944, %v1942
        %v2084 = vpack.c.bf16 %v1946, %v1946
        %v2085 = vpack.c.bf16 %v1950, %v1948
        %v2086 = vpack.c.bf16 %v1954, %v1952
        %v2087 = vpack.c.bf16 %v1956, %v1956
        %v2088 = vpack.c.bf16 %v1960, %v1958
        %v2089 = vpack.c.bf16 %v1964, %v1962
        %v2090 = vpack.c.bf16 %v1966, %v1966
        %v2091 = vpack.c.bf16 %v1970, %v1968
        %v2092 = vpack.c.bf16 %v1974, %v1972
        %v2093 = vpack.c.bf16 %v1976, %v1976
        %v2094 = vpack.c.bf16 %v1980, %v1978
        %v2095 = vpack.c.bf16 %v1984, %v1982
        %v2096 = vpack.c.bf16 %v1986, %v1986
        %v2097 = vpack.c.bf16 %v1990, %v1988
        %v2098 = vpack.c.bf16 %v1994, %v1992
        %v2099 = vpack.c.bf16 %v1996, %v1996
        %v2100 = vpack.c.bf16 %v2000, %v1998
        %v2101 = vpack.c.bf16 %v2004, %v2002
        %v2102 = vpack.c.bf16 %v2006, %v2006
        %v2103 = vunpack.c.l.bf16 %v2007
        %v2104 = vunpack.c.h.bf16 %v2007
        %v2105 = vunpack.c.l.bf16 %v2008
        %v2106 = vunpack.c.h.bf16 %v2008
        %v2107 = vunpack.c.l.bf16 %v2009
        %v2108 = vunpack.c.l.bf16 %v2010
        %v2109 = vunpack.c.h.bf16 %v2010
        %v2110 = vunpack.c.l.bf16 %v2011
        %v2111 = vunpack.c.h.bf16 %v2011
        %v2112 = vunpack.c.l.bf16 %v2012
        %v2113 = vunpack.c.l.bf16 %v2013
        %v2114 = vunpack.c.h.bf16 %v2013
        %v2115 = vunpack.c.l.bf16 %v2014
        %v2116 = vunpack.c.h.bf16 %v2014
        %v2117 = vunpack.c.l.bf16 %v2015
        %v2118 = vunpack.c.l.bf16 %v2016
        %v2119 = vunpack.c.h.bf16 %v2016
        %v2120 = vunpack.c.l.bf16 %v2017
        %v2121 = vunpack.c.h.bf16 %v2017
        %v2122 = vunpack.c.l.bf16 %v2018
        %v2123 = vunpack.c.l.bf16 %v2019
        %v2124 = vunpack.c.h.bf16 %v2019
        %v2125 = vunpack.c.l.bf16 %v2020
        %v2126 = vunpack.c.h.bf16 %v2020
        %v2127 = vunpack.c.l.bf16 %v2021
        %v2128 = vunpack.c.l.bf16 %v2022
        %v2129 = vunpack.c.h.bf16 %v2022
        %v2130 = vunpack.c.l.bf16 %v2023
        %v2131 = vunpack.c.h.bf16 %v2023
        %v2132 = vunpack.c.l.bf16 %v2024
        %v2133 = vunpack.c.l.bf16 %v2025
        %v2134 = vunpack.c.h.bf16 %v2025
        %v2135 = vunpack.c.l.bf16 %v2026
        %v2136 = vunpack.c.h.bf16 %v2026
        %v2137 = vunpack.c.l.bf16 %v2027
        %v2138 = vunpack.c.l.bf16 %v2028
        %v2139 = vunpack.c.h.bf16 %v2028
        %v2140 = vunpack.c.l.bf16 %v2029
        %v2141 = vunpack.c.h.bf16 %v2029
        %v2142 = vunpack.c.l.bf16 %v2030
        %v2143 = vunpack.c.l.bf16 %v2031
        %v2144 = vunpack.c.h.bf16 %v2031
        %v2145 = vunpack.c.l.bf16 %v2032
        %v2146 = vunpack.c.h.bf16 %v2032
        %v2147 = vunpack.c.l.bf16 %v2033
        %v2148 = vunpack.c.l.bf16 %v2034
        %v2149 = vunpack.c.h.bf16 %v2034
        %v2150 = vunpack.c.l.bf16 %v2035
        %v2151 = vunpack.c.h.bf16 %v2035
        %v2152 = vunpack.c.l.bf16 %v2036
        %v2153 = vunpack.c.l.bf16 %v2037
        %v2154 = vunpack.c.h.bf16 %v2037
        %v2155 = vunpack.c.l.bf16 %v2038
        %v2156 = vunpack.c.h.bf16 %v2038
        %v2157 = vunpack.c.l.bf16 %v2039
        %v2158 = vunpack.c.l.bf16 %v2040
        %v2159 = vunpack.c.h.bf16 %v2040
        %v2160 = vunpack.c.l.bf16 %v2041
        %v2161 = vunpack.c.h.bf16 %v2041
        %v2162 = vunpack.c.l.bf16 %v2042
        %v2163 = vunpack.c.l.bf16 %v2043
        %v2164 = vunpack.c.h.bf16 %v2043
        %v2165 = vunpack.c.l.bf16 %v2044
        %v2166 = vunpack.c.h.bf16 %v2044
        %v2167 = vunpack.c.l.bf16 %v2045
        %v2168 = vunpack.c.l.bf16 %v2046
        %v2169 = vunpack.c.h.bf16 %v2046
        %v2170 = vunpack.c.l.bf16 %v2047
        %v2171 = vunpack.c.h.bf16 %v2047
        %v2172 = vunpack.c.l.bf16 %v2048
        %v2173 = vunpack.c.l.bf16 %v2049
        %v2174 = vunpack.c.h.bf16 %v2049
        %v2175 = vunpack.c.l.bf16 %v2050
        %v2176 = vunpack.c.h.bf16 %v2050
        %v2177 = vunpack.c.l.bf16 %v2051
        %v2178 = vunpack.c.l.bf16 %v2052
        %v2179 = vunpack.c.h.bf16 %v2052
        %v2180 = vunpack.c.l.bf16 %v2053
        %v2181 = vunpack.c.h.bf16 %v2053
        %v2182 = vunpack.c.l.bf16 %v2054
        %v2183 = vunpack.c.l.bf16 %v2055
        %v2184 = vunpack.c.h.bf16 %v2055
        %v2185 = vunpack.c.l.bf16 %v2056
        %v2186 = vunpack.c.h.bf16 %v2056
        %v2187 = vunpack.c.l.bf16 %v2057
        %v2188 = vunpack.c.l.bf16 %v2058
        %v2189 = vunpack.c.h.bf16 %v2058
        %v2190 = vunpack.c.l.bf16 %v2059
        %v2191 = vunpack.c.h.bf16 %v2059
        %v2192 = vunpack.c.l.bf16 %v2060
        %v2193 = vunpack.c.l.bf16 %v2061
        %v2194 = vunpack.c.h.bf16 %v2061
        %v2195 = vunpack.c.l.bf16 %v2062
        %v2196 = vunpack.c.h.bf16 %v2062
        %v2197 = vunpack.c.l.bf16 %v2063
        %v2198 = vunpack.c.l.bf16 %v2064
        %v2199 = vunpack.c.h.bf16 %v2064
        %v2200 = vunpack.c.l.bf16 %v2065
        %v2201 = vunpack.c.h.bf16 %v2065
        %v2202 = vunpack.c.l.bf16 %v2066
        %v2203 = vunpack.c.l.bf16 %v2067
        %v2204 = vunpack.c.h.bf16 %v2067
        %v2205 = vunpack.c.l.bf16 %v2068
        %v2206 = vunpack.c.h.bf16 %v2068
        %v2207 = vunpack.c.l.bf16 %v2069
        %v2208 = vunpack.c.l.bf16 %v2070
        %v2209 = vunpack.c.h.bf16 %v2070
        %v2210 = vunpack.c.l.bf16 %v2071
        %v2211 = vunpack.c.h.bf16 %v2071
        %v2212 = vunpack.c.l.bf16 %v2072
        %v2213 = vunpack.c.l.bf16 %v2073
        %v2214 = vunpack.c.h.bf16 %v2073
        %v2215 = vunpack.c.l.bf16 %v2074
        %v2216 = vunpack.c.h.bf16 %v2074
        %v2217 = vunpack.c.l.bf16 %v2075
        %v2218 = vunpack.c.l.bf16 %v2076
        %v2219 = vunpack.c.h.bf16 %v2076
        %v2220 = vunpack.c.l.bf16 %v2077
        %v2221 = vunpack.c.h.bf16 %v2077
        %v2222 = vunpack.c.l.bf16 %v2078
        %v2223 = vunpack.c.l.bf16 %v2079
        %v2224 = vunpack.c.h.bf16 %v2079
        %v2225 = vunpack.c.l.bf16 %v2080
        %v2226 = vunpack.c.h.bf16 %v2080
        %v2227 = vunpack.c.l.bf16 %v2081
        %v2228 = vunpack.c.l.bf16 %v2082
        %v2229 = vunpack.c.h.bf16 %v2082
        %v2230 = vunpack.c.l.bf16 %v2083
        %v2231 = vunpack.c.h.bf16 %v2083
        %v2232 = vunpack.c.l.bf16 %v2084
        %v2233 = vunpack.c.l.bf16 %v2085
        %v2234 = vunpack.c.h.bf16 %v2085
        %v2235 = vunpack.c.l.bf16 %v2086
        %v2236 = vunpack.c.h.bf16 %v2086
        %v2237 = vunpack.c.l.bf16 %v2087
        %v2238 = vunpack.c.l.bf16 %v2088
        %v2239 = vunpack.c.h.bf16 %v2088
        %v2240 = vunpack.c.l.bf16 %v2089
        %v2241 = vunpack.c.h.bf16 %v2089
        %v2242 = vunpack.c.l.bf16 %v2090
        %v2243 = vunpack.c.l.bf16 %v2091
        %v2244 = vunpack.c.h.bf16 %v2091
        %v2245 = vunpack.c.l.bf16 %v2092
        %v2246 = vunpack.c.h.bf16 %v2092
        %v2247 = vunpack.c.l.bf16 %v2093
        %v2248 = vunpack.c.l.bf16 %v2094
        %v2249 = vunpack.c.h.bf16 %v2094
        %v2250 = vunpack.c.l.bf16 %v2095
        %v2251 = vunpack.c.h.bf16 %v2095
        %v2252 = vunpack.c.l.bf16 %v2096
        %v2253 = vunpack.c.l.bf16 %v2097
        %v2254 = vunpack.c.h.bf16 %v2097
        %v2255 = vunpack.c.l.bf16 %v2098
        %v2256 = vunpack.c.h.bf16 %v2098
        %v2257 = vunpack.c.l.bf16 %v2099
        %v2258 = vunpack.c.l.bf16 %v2100
        %v2259 = vunpack.c.h.bf16 %v2100
        %v2260 = vunpack.c.l.bf16 %v2101
        %v2261 = vunpack.c.h.bf16 %v2101
        %v2262 = vunpack.c.l.bf16 %v2102
        %v2263 = vadd.f32 %v2103, 1.0
        %v2264 = vadd.f32 %v2104, 1.0
        %v2265 = vadd.f32 %v2105, 1.0
        %v2266 = vadd.f32 %v2106, 1.0
        %v2267 = vadd.f32 %v2107, 1.0
        %v2268 = vadd.f32 %v2108, 1.0
        %v2269 = vadd.f32 %v2109, 1.0
        %v2270 = vadd.f32 %v2110, 1.0
        %v2271 = vadd.f32 %v2111, 1.0
        %v2272 = vadd.f32 %v2112, 1.0
        %v2273 = vadd.f32 %v2113, 1.0
        %v2274 = vadd.f32 %v2114, 1.0
        %v2275 = vadd.f32 %v2115, 1.0
        %v2276 = vadd.f32 %v2116, 1.0
        %v2277 = vadd.f32 %v2117, 1.0
        %v2278 = vadd.f32 %v2118, 1.0
        %v2279 = vadd.f32 %v2119, 1.0
        %v2280 = vadd.f32 %v2120, 1.0
        %v2281 = vadd.f32 %v2121, 1.0
        %v2282 = vadd.f32 %v2122, 1.0
        %v2283 = vadd.f32 %v2123, 1.0
        %v2284 = vadd.f32 %v2124, 1.0
        %v2285 = vadd.f32 %v2125, 1.0
        %v2286 = vadd.f32 %v2126, 1.0
        %v2287 = vadd.f32 %v2127, 1.0
        %v2288 = vadd.f32 %v2128, 1.0
        %v2289 = vadd.f32 %v2129, 1.0
        %v2290 = vadd.f32 %v2130, 1.0
        %v2291 = vadd.f32 %v2131, 1.0
        %v2292 = vadd.f32 %v2132, 1.0
        %v2293 = vadd.f32 %v2133, 1.0
        %v2294 = vadd.f32 %v2134, 1.0
        %v2295 = vadd.f32 %v2135, 1.0
        %v2296 = vadd.f32 %v2136, 1.0
        %v2297 = vadd.f32 %v2137, 1.0
        %v2298 = vadd.f32 %v2138, 1.0
        %v2299 = vadd.f32 %v2139, 1.0
        %v2300 = vadd.f32 %v2140, 1.0
        %v2301 = vadd.f32 %v2141, 1.0
        %v2302 = vadd.f32 %v2142, 1.0
        %v2303 = vadd.f32 %v2143, 1.0
        %v2304 = vadd.f32 %v2144, 1.0
        %v2305 = vadd.f32 %v2145, 1.0
        %v2306 = vadd.f32 %v2146, 1.0
        %v2307 = vadd.f32 %v2147, 1.0
        %v2308 = vadd.f32 %v2148, 1.0
        %v2309 = vadd.f32 %v2149, 1.0
        %v2310 = vadd.f32 %v2150, 1.0
        %v2311 = vadd.f32 %v2151, 1.0
        %v2312 = vadd.f32 %v2152, 1.0
        %v2313 = vadd.f32 %v2153, 1.0
        %v2314 = vadd.f32 %v2154, 1.0
        %v2315 = vadd.f32 %v2155, 1.0
        %v2316 = vadd.f32 %v2156, 1.0
        %v2317 = vadd.f32 %v2157, 1.0
        %v2318 = vadd.f32 %v2158, 1.0
        %v2319 = vadd.f32 %v2159, 1.0
        %v2320 = vadd.f32 %v2160, 1.0
        %v2321 = vadd.f32 %v2161, 1.0
        %v2322 = vadd.f32 %v2162, 1.0
        %v2323 = vadd.f32 %v2163, 1.0
        %v2324 = vadd.f32 %v2164, 1.0
        %v2325 = vadd.f32 %v2165, 1.0
        %v2326 = vadd.f32 %v2166, 1.0
        %v2327 = vadd.f32 %v2167, 1.0
        %v2328 = vadd.f32 %v2168, 1.0
        %v2329 = vadd.f32 %v2169, 1.0
        %v2330 = vadd.f32 %v2170, 1.0
        %v2331 = vadd.f32 %v2171, 1.0
        %v2332 = vadd.f32 %v2172, 1.0
        %v2333 = vadd.f32 %v2173, 1.0
        %v2334 = vadd.f32 %v2174, 1.0
        %v2335 = vadd.f32 %v2175, 1.0
        %v2336 = vadd.f32 %v2176, 1.0
        %v2337 = vadd.f32 %v2177, 1.0
        %v2338 = vadd.f32 %v2178, 1.0
        %v2339 = vadd.f32 %v2179, 1.0
        %v2340 = vadd.f32 %v2180, 1.0
        %v2341 = vadd.f32 %v2181, 1.0
        %v2342 = vadd.f32 %v2182, 1.0
        %v2343 = vadd.f32 %v2183, 1.0
        %v2344 = vadd.f32 %v2184, 1.0
        %v2345 = vadd.f32 %v2185, 1.0
        %v2346 = vadd.f32 %v2186, 1.0
        %v2347 = vadd.f32 %v2187, 1.0
        %v2348 = vadd.f32 %v2188, 1.0
        %v2349 = vadd.f32 %v2189, 1.0
        %v2350 = vadd.f32 %v2190, 1.0
        %v2351 = vadd.f32 %v2191, 1.0
        %v2352 = vadd.f32 %v2192, 1.0
        %v2353 = vadd.f32 %v2193, 1.0
        %v2354 = vadd.f32 %v2194, 1.0
        %v2355 = vadd.f32 %v2195, 1.0
        %v2356 = vadd.f32 %v2196, 1.0
        %v2357 = vadd.f32 %v2197, 1.0
        %v2358 = vadd.f32 %v2198, 1.0
        %v2359 = vadd.f32 %v2199, 1.0
        %v2360 = vadd.f32 %v2200, 1.0
        %v2361 = vadd.f32 %v2201, 1.0
        %v2362 = vadd.f32 %v2202, 1.0
        %v2363 = vadd.f32 %v2203, 1.0
        %v2364 = vadd.f32 %v2204, 1.0
        %v2365 = vadd.f32 %v2205, 1.0
        %v2366 = vadd.f32 %v2206, 1.0
        %v2367 = vadd.f32 %v2207, 1.0
        %v2368 = vadd.f32 %v2208, 1.0
        %v2369 = vadd.f32 %v2209, 1.0
        %v2370 = vadd.f32 %v2210, 1.0
        %v2371 = vadd.f32 %v2211, 1.0
        %v2372 = vadd.f32 %v2212, 1.0
        %v2373 = vadd.f32 %v2213, 1.0
        %v2374 = vadd.f32 %v2214, 1.0
        %v2375 = vadd.f32 %v2215, 1.0
        %v2376 = vadd.f32 %v2216, 1.0
        %v2377 = vadd.f32 %v2217, 1.0
        %v2378 = vadd.f32 %v2218, 1.0
        %v2379 = vadd.f32 %v2219, 1.0
        %v2380 = vadd.f32 %v2220, 1.0
        %v2381 = vadd.f32 %v2221, 1.0
        %v2382 = vadd.f32 %v2222, 1.0
        %v2383 = vadd.f32 %v2223, 1.0
        %v2384 = vadd.f32 %v2224, 1.0
        %v2385 = vadd.f32 %v2225, 1.0
        %v2386 = vadd.f32 %v2226, 1.0
        %v2387 = vadd.f32 %v2227, 1.0
        %v2388 = vadd.f32 %v2228, 1.0
        %v2389 = vadd.f32 %v2229, 1.0
        %v2390 = vadd.f32 %v2230, 1.0
        %v2391 = vadd.f32 %v2231, 1.0
        %v2392 = vadd.f32 %v2232, 1.0
        %v2393 = vadd.f32 %v2233, 1.0
        %v2394 = vadd.f32 %v2234, 1.0
        %v2395 = vadd.f32 %v2235, 1.0
        %v2396 = vadd.f32 %v2236, 1.0
        %v2397 = vadd.f32 %v2237, 1.0
        %v2398 = vadd.f32 %v2238, 1.0
        %v2399 = vadd.f32 %v2239, 1.0
        %v2400 = vadd.f32 %v2240, 1.0
        %v2401 = vadd.f32 %v2241, 1.0
        %v2402 = vadd.f32 %v2242, 1.0
        %v2403 = vadd.f32 %v2243, 1.0
        %v2404 = vadd.f32 %v2244, 1.0
        %v2405 = vadd.f32 %v2245, 1.0
        %v2406 = vadd.f32 %v2246, 1.0
        %v2407 = vadd.f32 %v2247, 1.0
        %v2408 = vadd.f32 %v2248, 1.0
        %v2409 = vadd.f32 %v2249, 1.0
        %v2410 = vadd.f32 %v2250, 1.0
        %v2411 = vadd.f32 %v2251, 1.0
        %v2412 = vadd.f32 %v2252, 1.0
        %v2413 = vadd.f32 %v2253, 1.0
        %v2414 = vadd.f32 %v2254, 1.0
        %v2415 = vadd.f32 %v2255, 1.0
        %v2416 = vadd.f32 %v2256, 1.0
        %v2417 = vadd.f32 %v2257, 1.0
        %v2418 = vadd.f32 %v2258, 1.0
        %v2419 = vadd.f32 %v2259, 1.0
        %v2420 = vadd.f32 %v2260, 1.0
        %v2421 = vadd.f32 %v2261, 1.0
        %v2422 = vadd.f32 %v2262, 1.0
        %v2423 = vpack.c.bf16 %v2264, %v2263
        %v2424 = vpack.c.bf16 %v2266, %v2265
        %v2425 = vpack.c.bf16 %v2267, %v2267
        %v2426 = vpack.c.bf16 %v2269, %v2268
        %v2427 = vpack.c.bf16 %v2271, %v2270
        %v2428 = vpack.c.bf16 %v2272, %v2272
        %v2429 = vpack.c.bf16 %v2274, %v2273
        %v2430 = vpack.c.bf16 %v2276, %v2275
        %v2431 = vpack.c.bf16 %v2277, %v2277
        %v2432 = vpack.c.bf16 %v2279, %v2278
        %v2433 = vpack.c.bf16 %v2281, %v2280
        %v2434 = vpack.c.bf16 %v2282, %v2282
        %v2435 = vpack.c.bf16 %v2284, %v2283
        %v2436 = vpack.c.bf16 %v2286, %v2285
        %v2437 = vpack.c.bf16 %v2287, %v2287
        %v2438 = vpack.c.bf16 %v2289, %v2288
        %v2439 = vpack.c.bf16 %v2291, %v2290
        %v2440 = vpack.c.bf16 %v2292, %v2292
        %v2441 = vpack.c.bf16 %v2294, %v2293
        %v2442 = vpack.c.bf16 %v2296, %v2295
        %v2443 = vpack.c.bf16 %v2297, %v2297
        %v2444 = vpack.c.bf16 %v2299, %v2298
        %v2445 = vpack.c.bf16 %v2301, %v2300
        %v2446 = vpack.c.bf16 %v2302, %v2302
        %v2447 = vpack.c.bf16 %v2304, %v2303
        %v2448 = vpack.c.bf16 %v2306, %v2305
        %v2449 = vpack.c.bf16 %v2307, %v2307
        %v2450 = vpack.c.bf16 %v2309, %v2308
        %v2451 = vpack.c.bf16 %v2311, %v2310
        %v2452 = vpack.c.bf16 %v2312, %v2312
        %v2453 = vpack.c.bf16 %v2314, %v2313
        %v2454 = vpack.c.bf16 %v2316, %v2315
        %v2455 = vpack.c.bf16 %v2317, %v2317
        %v2456 = vpack.c.bf16 %v2319, %v2318
        %v2457 = vpack.c.bf16 %v2321, %v2320
        %v2458 = vpack.c.bf16 %v2322, %v2322
        %v2459 = vpack.c.bf16 %v2324, %v2323
        %v2460 = vpack.c.bf16 %v2326, %v2325
        %v2461 = vpack.c.bf16 %v2327, %v2327
        %v2462 = vpack.c.bf16 %v2329, %v2328
        %v2463 = vpack.c.bf16 %v2331, %v2330
        %v2464 = vpack.c.bf16 %v2332, %v2332
        %v2465 = vpack.c.bf16 %v2334, %v2333
        %v2466 = vpack.c.bf16 %v2336, %v2335
        %v2467 = vpack.c.bf16 %v2337, %v2337
        %v2468 = vpack.c.bf16 %v2339, %v2338
        %v2469 = vpack.c.bf16 %v2341, %v2340
        %v2470 = vpack.c.bf16 %v2342, %v2342
        %v2471 = vpack.c.bf16 %v2344, %v2343
        %v2472 = vpack.c.bf16 %v2346, %v2345
        %v2473 = vpack.c.bf16 %v2347, %v2347
        %v2474 = vpack.c.bf16 %v2349, %v2348
        %v2475 = vpack.c.bf16 %v2351, %v2350
        %v2476 = vpack.c.bf16 %v2352, %v2352
        %v2477 = vpack.c.bf16 %v2354, %v2353
        %v2478 = vpack.c.bf16 %v2356, %v2355
        %v2479 = vpack.c.bf16 %v2357, %v2357
        %v2480 = vpack.c.bf16 %v2359, %v2358
        %v2481 = vpack.c.bf16 %v2361, %v2360
        %v2482 = vpack.c.bf16 %v2362, %v2362
        %v2483 = vpack.c.bf16 %v2364, %v2363
        %v2484 = vpack.c.bf16 %v2366, %v2365
        %v2485 = vpack.c.bf16 %v2367, %v2367
        %v2486 = vpack.c.bf16 %v2369, %v2368
        %v2487 = vpack.c.bf16 %v2371, %v2370
        %v2488 = vpack.c.bf16 %v2372, %v2372
        %v2489 = vpack.c.bf16 %v2374, %v2373
        %v2490 = vpack.c.bf16 %v2376, %v2375
        %v2491 = vpack.c.bf16 %v2377, %v2377
        %v2492 = vpack.c.bf16 %v2379, %v2378
        %v2493 = vpack.c.bf16 %v2381, %v2380
        %v2494 = vpack.c.bf16 %v2382, %v2382
        %v2495 = vpack.c.bf16 %v2384, %v2383
        %v2496 = vpack.c.bf16 %v2386, %v2385
        %v2497 = vpack.c.bf16 %v2387, %v2387
        %v2498 = vpack.c.bf16 %v2389, %v2388
        %v2499 = vpack.c.bf16 %v2391, %v2390
        %v2500 = vpack.c.bf16 %v2392, %v2392
        %v2501 = vpack.c.bf16 %v2394, %v2393
        %v2502 = vpack.c.bf16 %v2396, %v2395
        %v2503 = vpack.c.bf16 %v2397, %v2397
        %v2504 = vpack.c.bf16 %v2399, %v2398
        %v2505 = vpack.c.bf16 %v2401, %v2400
        %v2506 = vpack.c.bf16 %v2402, %v2402
        %v2507 = vpack.c.bf16 %v2404, %v2403
        %v2508 = vpack.c.bf16 %v2406, %v2405
        %v2509 = vpack.c.bf16 %v2407, %v2407
        %v2510 = vpack.c.bf16 %v2409, %v2408
        %v2511 = vpack.c.bf16 %v2411, %v2410
        %v2512 = vpack.c.bf16 %v2412, %v2412
        %v2513 = vpack.c.bf16 %v2414, %v2413
        %v2514 = vpack.c.bf16 %v2416, %v2415
        %v2515 = vpack.c.bf16 %v2417, %v2417
        %v2516 = vpack.c.bf16 %v2419, %v2418
        %v2517 = vpack.c.bf16 %v2421, %v2420
        %v2518 = vpack.c.bf16 %v2422, %v2422
        %v2519 = vunpack.c.h.bf16 1065369472
        %v2520 = vunpack.c.l.bf16 1065369472
        %v2521 = vunpack.c.h.bf16 %v2423
        %v2522 = vunpack.c.l.bf16 %v2423
        %v2523 = vrcp.pop %v2521
        %v2524 = vmul.f32 %v2519, %v2523
        %v2525 = vrcp.pop %v2522
        %v2526 = vmul.f32 %v2520, %v2525
        %v2527 = vpack.c.bf16 %v2524, %v2526
        %v2528 = vunpack.c.h.bf16 %v2424
        %v2529 = vunpack.c.l.bf16 %v2424
        %v2530 = vrcp.pop %v2528
        %v2531 = vmul.f32 %v2519, %v2530
        %v2532 = vrcp.pop %v2529
        %v2533 = vmul.f32 %v2520, %v2532
        %v2534 = vpack.c.bf16 %v2531, %v2533
        %v2535 = vunpack.c.h.bf16 %v2425
        %v2536 = vunpack.c.l.bf16 %v2425
        %v2537 = vrcp.pop %v2535
        %v2538 = vmul.f32 %v2519, %v2537
        %v2539 = vrcp.pop %v2536
        %v2540 = vmul.f32 %v2520, %v2539
        %v2541 = vpack.c.bf16 %v2538, %v2540
        %v2542 = vunpack.c.h.bf16 %v2426
        %v2543 = vunpack.c.l.bf16 %v2426
        %v2544 = vrcp.pop %v2542
        %v2545 = vmul.f32 %v2519, %v2544
        %v2546 = vrcp.pop %v2543
        %v2547 = vmul.f32 %v2520, %v2546
        %v2548 = vpack.c.bf16 %v2545, %v2547
        %v2549 = vunpack.c.h.bf16 %v2427
        %v2550 = vunpack.c.l.bf16 %v2427
        %v2551 = vrcp.pop %v2549
        %v2552 = vmul.f32 %v2519, %v2551
        %v2553 = vrcp.pop %v2550
        %v2554 = vmul.f32 %v2520, %v2553
        %v2555 = vpack.c.bf16 %v2552, %v2554
        %v2556 = vunpack.c.h.bf16 %v2428
        %v2557 = vunpack.c.l.bf16 %v2428
        %v2558 = vrcp.pop %v2556
        %v2559 = vmul.f32 %v2519, %v2558
        %v2560 = vrcp.pop %v2557
        %v2561 = vmul.f32 %v2520, %v2560
        %v2562 = vpack.c.bf16 %v2559, %v2561
        %v2563 = vunpack.c.h.bf16 %v2429
        %v2564 = vunpack.c.l.bf16 %v2429
        %v2565 = vrcp.pop %v2563
        %v2566 = vmul.f32 %v2519, %v2565
        %v2567 = vrcp.pop %v2564
        %v2568 = vmul.f32 %v2520, %v2567
        %v2569 = vpack.c.bf16 %v2566, %v2568
        %v2570 = vunpack.c.h.bf16 %v2430
        %v2571 = vunpack.c.l.bf16 %v2430
        %v2572 = vrcp.pop %v2570
        %v2573 = vmul.f32 %v2519, %v2572
        %v2574 = vrcp.pop %v2571
        %v2575 = vmul.f32 %v2520, %v2574
        %v2576 = vpack.c.bf16 %v2573, %v2575
        %v2577 = vunpack.c.h.bf16 %v2431
        %v2578 = vunpack.c.l.bf16 %v2431
        %v2579 = vrcp.pop %v2577
        %v2580 = vmul.f32 %v2519, %v2579
        %v2581 = vrcp.pop %v2578
        %v2582 = vmul.f32 %v2520, %v2581
        %v2583 = vpack.c.bf16 %v2580, %v2582
        %v2584 = vunpack.c.h.bf16 %v2432
        %v2585 = vunpack.c.l.bf16 %v2432
        %v2586 = vrcp.pop %v2584
        %v2587 = vmul.f32 %v2519, %v2586
        %v2588 = vrcp.pop %v2585
        %v2589 = vmul.f32 %v2520, %v2588
        %v2590 = vpack.c.bf16 %v2587, %v2589
        %v2591 = vunpack.c.h.bf16 %v2433
        %v2592 = vunpack.c.l.bf16 %v2433
        %v2593 = vrcp.pop %v2591
        %v2594 = vmul.f32 %v2519, %v2593
        %v2595 = vrcp.pop %v2592
        %v2596 = vmul.f32 %v2520, %v2595
        %v2597 = vpack.c.bf16 %v2594, %v2596
        %v2598 = vunpack.c.h.bf16 %v2434
        %v2599 = vunpack.c.l.bf16 %v2434
        %v2600 = vrcp.pop %v2598
        %v2601 = vmul.f32 %v2519, %v2600
        %v2602 = vrcp.pop %v2599
        %v2603 = vmul.f32 %v2520, %v2602
        %v2604 = vpack.c.bf16 %v2601, %v2603
        %v2605 = vunpack.c.h.bf16 %v2435
        %v2606 = vunpack.c.l.bf16 %v2435
        %v2607 = vrcp.pop %v2605
        %v2608 = vmul.f32 %v2519, %v2607
        %v2609 = vrcp.pop %v2606
        %v2610 = vmul.f32 %v2520, %v2609
        %v2611 = vpack.c.bf16 %v2608, %v2610
        %v2612 = vunpack.c.h.bf16 %v2436
        %v2613 = vunpack.c.l.bf16 %v2436
        %v2614 = vrcp.pop %v2612
        %v2615 = vmul.f32 %v2519, %v2614
        %v2616 = vrcp.pop %v2613
        %v2617 = vmul.f32 %v2520, %v2616
        %v2618 = vpack.c.bf16 %v2615, %v2617
        %v2619 = vunpack.c.h.bf16 %v2437
        %v2620 = vunpack.c.l.bf16 %v2437
        %v2621 = vrcp.pop %v2619
        %v2622 = vmul.f32 %v2519, %v2621
        %v2623 = vrcp.pop %v2620
        %v2624 = vmul.f32 %v2520, %v2623
        %v2625 = vpack.c.bf16 %v2622, %v2624
        %v2626 = vunpack.c.h.bf16 %v2438
        %v2627 = vunpack.c.l.bf16 %v2438
        %v2628 = vrcp.pop %v2626
        %v2629 = vmul.f32 %v2519, %v2628
        %v2630 = vrcp.pop %v2627
        %v2631 = vmul.f32 %v2520, %v2630
        %v2632 = vpack.c.bf16 %v2629, %v2631
        %v2633 = vunpack.c.h.bf16 %v2439
        %v2634 = vunpack.c.l.bf16 %v2439
        %v2635 = vrcp.pop %v2633
        %v2636 = vmul.f32 %v2519, %v2635
        %v2637 = vrcp.pop %v2634
        %v2638 = vmul.f32 %v2520, %v2637
        %v2639 = vpack.c.bf16 %v2636, %v2638
        %v2640 = vunpack.c.h.bf16 %v2440
        %v2641 = vunpack.c.l.bf16 %v2440
        %v2642 = vrcp.pop %v2640
        %v2643 = vmul.f32 %v2519, %v2642
        %v2644 = vrcp.pop %v2641
        %v2645 = vmul.f32 %v2520, %v2644
        %v2646 = vpack.c.bf16 %v2643, %v2645
        %v2647 = vunpack.c.h.bf16 %v2441
        %v2648 = vunpack.c.l.bf16 %v2441
        %v2649 = vrcp.pop %v2647
        %v2650 = vmul.f32 %v2519, %v2649
        %v2651 = vrcp.pop %v2648
        %v2652 = vmul.f32 %v2520, %v2651
        %v2653 = vpack.c.bf16 %v2650, %v2652
        %v2654 = vunpack.c.h.bf16 %v2442
        %v2655 = vunpack.c.l.bf16 %v2442
        %v2656 = vrcp.pop %v2654
        %v2657 = vmul.f32 %v2519, %v2656
        %v2658 = vrcp.pop %v2655
        %v2659 = vmul.f32 %v2520, %v2658
        %v2660 = vpack.c.bf16 %v2657, %v2659
        %v2661 = vunpack.c.h.bf16 %v2443
        %v2662 = vunpack.c.l.bf16 %v2443
        %v2663 = vrcp.pop %v2661
        %v2664 = vmul.f32 %v2519, %v2663
        %v2665 = vrcp.pop %v2662
        %v2666 = vmul.f32 %v2520, %v2665
        %v2667 = vpack.c.bf16 %v2664, %v2666
        %v2668 = vunpack.c.h.bf16 %v2444
        %v2669 = vunpack.c.l.bf16 %v2444
        %v2670 = vrcp.pop %v2668
        %v2671 = vmul.f32 %v2519, %v2670
        %v2672 = vrcp.pop %v2669
        %v2673 = vmul.f32 %v2520, %v2672
        %v2674 = vpack.c.bf16 %v2671, %v2673
        %v2675 = vunpack.c.h.bf16 %v2445
        %v2676 = vunpack.c.l.bf16 %v2445
        %v2677 = vrcp.pop %v2675
        %v2678 = vmul.f32 %v2519, %v2677
        %v2679 = vrcp.pop %v2676
        %v2680 = vmul.f32 %v2520, %v2679
        %v2681 = vpack.c.bf16 %v2678, %v2680
        %v2682 = vunpack.c.h.bf16 %v2446
        %v2683 = vunpack.c.l.bf16 %v2446
        %v2684 = vrcp.pop %v2682
        %v2685 = vmul.f32 %v2519, %v2684
        %v2686 = vrcp.pop %v2683
        %v2687 = vmul.f32 %v2520, %v2686
        %v2688 = vpack.c.bf16 %v2685, %v2687
        %v2689 = vunpack.c.h.bf16 %v2447
        %v2690 = vunpack.c.l.bf16 %v2447
        %v2691 = vrcp.pop %v2689
        %v2692 = vmul.f32 %v2519, %v2691
        %v2693 = vrcp.pop %v2690
        %v2694 = vmul.f32 %v2520, %v2693
        %v2695 = vpack.c.bf16 %v2692, %v2694
        %v2696 = vunpack.c.h.bf16 %v2448
        %v2697 = vunpack.c.l.bf16 %v2448
        %v2698 = vrcp.pop %v2696
        %v2699 = vmul.f32 %v2519, %v2698
        %v2700 = vrcp.pop %v2697
        %v2701 = vmul.f32 %v2520, %v2700
        %v2702 = vpack.c.bf16 %v2699, %v2701
        %v2703 = vunpack.c.h.bf16 %v2449
        %v2704 = vunpack.c.l.bf16 %v2449
        %v2705 = vrcp.pop %v2703
        %v2706 = vmul.f32 %v2519, %v2705
        %v2707 = vrcp.pop %v2704
        %v2708 = vmul.f32 %v2520, %v2707
        %v2709 = vpack.c.bf16 %v2706, %v2708
        %v2710 = vunpack.c.h.bf16 %v2450
        %v2711 = vunpack.c.l.bf16 %v2450
        %v2712 = vrcp.pop %v2710
        %v2713 = vmul.f32 %v2519, %v2712
        %v2714 = vrcp.pop %v2711
        %v2715 = vmul.f32 %v2520, %v2714
        %v2716 = vpack.c.bf16 %v2713, %v2715
        %v2717 = vunpack.c.h.bf16 %v2451
        %v2718 = vunpack.c.l.bf16 %v2451
        %v2719 = vrcp.pop %v2717
        %v2720 = vmul.f32 %v2519, %v2719
        %v2721 = vrcp.pop %v2718
        %v2722 = vmul.f32 %v2520, %v2721
        %v2723 = vpack.c.bf16 %v2720, %v2722
        %v2724 = vunpack.c.h.bf16 %v2452
        %v2725 = vunpack.c.l.bf16 %v2452
        %v2726 = vrcp.pop %v2724
        %v2727 = vmul.f32 %v2519, %v2726
        %v2728 = vrcp.pop %v2725
        %v2729 = vmul.f32 %v2520, %v2728
        %v2730 = vpack.c.bf16 %v2727, %v2729
        %v2731 = vunpack.c.h.bf16 %v2453
        %v2732 = vunpack.c.l.bf16 %v2453
        %v2733 = vrcp.pop %v2731
        %v2734 = vmul.f32 %v2519, %v2733
        %v2735 = vrcp.pop %v2732
        %v2736 = vmul.f32 %v2520, %v2735
        %v2737 = vpack.c.bf16 %v2734, %v2736
        %v2738 = vunpack.c.h.bf16 %v2454
        %v2739 = vunpack.c.l.bf16 %v2454
        %v2740 = vrcp.pop %v2738
        %v2741 = vmul.f32 %v2519, %v2740
        %v2742 = vrcp.pop %v2739
        %v2743 = vmul.f32 %v2520, %v2742
        %v2744 = vpack.c.bf16 %v2741, %v2743
        %v2745 = vunpack.c.h.bf16 %v2455
        %v2746 = vunpack.c.l.bf16 %v2455
        %v2747 = vrcp.pop %v2745
        %v2748 = vmul.f32 %v2519, %v2747
        %v2749 = vrcp.pop %v2746
        %v2750 = vmul.f32 %v2520, %v2749
        %v2751 = vpack.c.bf16 %v2748, %v2750
        %v2752 = vunpack.c.h.bf16 %v2456
        %v2753 = vunpack.c.l.bf16 %v2456
        %v2754 = vrcp.pop %v2752
        %v2755 = vmul.f32 %v2519, %v2754
        %v2756 = vrcp.pop %v2753
        %v2757 = vmul.f32 %v2520, %v2756
        %v2758 = vpack.c.bf16 %v2755, %v2757
        %v2759 = vunpack.c.h.bf16 %v2457
        %v2760 = vunpack.c.l.bf16 %v2457
        %v2761 = vrcp.pop %v2759
        %v2762 = vmul.f32 %v2519, %v2761
        %v2763 = vrcp.pop %v2760
        %v2764 = vmul.f32 %v2520, %v2763
        %v2765 = vpack.c.bf16 %v2762, %v2764
        %v2766 = vunpack.c.h.bf16 %v2458
        %v2767 = vunpack.c.l.bf16 %v2458
        %v2768 = vrcp.pop %v2766
        %v2769 = vmul.f32 %v2519, %v2768
        %v2770 = vrcp.pop %v2767
        %v2771 = vmul.f32 %v2520, %v2770
        %v2772 = vpack.c.bf16 %v2769, %v2771
        %v2773 = vunpack.c.h.bf16 %v2459
        %v2774 = vunpack.c.l.bf16 %v2459
        %v2775 = vrcp.pop %v2773
        %v2776 = vmul.f32 %v2519, %v2775
        %v2777 = vrcp.pop %v2774
        %v2778 = vmul.f32 %v2520, %v2777
        %v2779 = vpack.c.bf16 %v2776, %v2778
        %v2780 = vunpack.c.h.bf16 %v2460
        %v2781 = vunpack.c.l.bf16 %v2460
        %v2782 = vrcp.pop %v2780
        %v2783 = vmul.f32 %v2519, %v2782
        %v2784 = vrcp.pop %v2781
        %v2785 = vmul.f32 %v2520, %v2784
        %v2786 = vpack.c.bf16 %v2783, %v2785
        %v2787 = vunpack.c.h.bf16 %v2461
        %v2788 = vunpack.c.l.bf16 %v2461
        %v2789 = vrcp.pop %v2787
        %v2790 = vmul.f32 %v2519, %v2789
        %v2791 = vrcp.pop %v2788
        %v2792 = vmul.f32 %v2520, %v2791
        %v2793 = vpack.c.bf16 %v2790, %v2792
        %v2794 = vunpack.c.h.bf16 %v2462
        %v2795 = vunpack.c.l.bf16 %v2462
        %v2796 = vrcp.pop %v2794
        %v2797 = vmul.f32 %v2519, %v2796
        %v2798 = vrcp.pop %v2795
        %v2799 = vmul.f32 %v2520, %v2798
        %v2800 = vpack.c.bf16 %v2797, %v2799
        %v2801 = vunpack.c.h.bf16 %v2463
        %v2802 = vunpack.c.l.bf16 %v2463
        %v2803 = vrcp.pop %v2801
        %v2804 = vmul.f32 %v2519, %v2803
        %v2805 = vrcp.pop %v2802
        %v2806 = vmul.f32 %v2520, %v2805
        %v2807 = vpack.c.bf16 %v2804, %v2806
        %v2808 = vunpack.c.h.bf16 %v2464
        %v2809 = vunpack.c.l.bf16 %v2464
        %v2810 = vrcp.pop %v2808
        %v2811 = vmul.f32 %v2519, %v2810
        %v2812 = vrcp.pop %v2809
        %v2813 = vmul.f32 %v2520, %v2812
        %v2814 = vpack.c.bf16 %v2811, %v2813
        %v2815 = vunpack.c.h.bf16 %v2465
        %v2816 = vunpack.c.l.bf16 %v2465
        %v2817 = vrcp.pop %v2815
        %v2818 = vmul.f32 %v2519, %v2817
        %v2819 = vrcp.pop %v2816
        %v2820 = vmul.f32 %v2520, %v2819
        %v2821 = vpack.c.bf16 %v2818, %v2820
        %v2822 = vunpack.c.h.bf16 %v2466
        %v2823 = vunpack.c.l.bf16 %v2466
        %v2824 = vrcp.pop %v2822
        %v2825 = vmul.f32 %v2519, %v2824
        %v2826 = vrcp.pop %v2823
        %v2827 = vmul.f32 %v2520, %v2826
        %v2828 = vpack.c.bf16 %v2825, %v2827
        %v2829 = vunpack.c.h.bf16 %v2467
        %v2830 = vunpack.c.l.bf16 %v2467
        %v2831 = vrcp.pop %v2829
        %v2832 = vmul.f32 %v2519, %v2831
        %v2833 = vrcp.pop %v2830
        %v2834 = vmul.f32 %v2520, %v2833
        %v2835 = vpack.c.bf16 %v2832, %v2834
        %v2836 = vunpack.c.h.bf16 %v2468
        %v2837 = vunpack.c.l.bf16 %v2468
        %v2838 = vrcp.pop %v2836
        %v2839 = vmul.f32 %v2519, %v2838
        %v2840 = vrcp.pop %v2837
        %v2841 = vmul.f32 %v2520, %v2840
        %v2842 = vpack.c.bf16 %v2839, %v2841
        %v2843 = vunpack.c.h.bf16 %v2469
        %v2844 = vunpack.c.l.bf16 %v2469
        %v2845 = vrcp.pop %v2843
        %v2846 = vmul.f32 %v2519, %v2845
        %v2847 = vrcp.pop %v2844
        %v2848 = vmul.f32 %v2520, %v2847
        %v2849 = vpack.c.bf16 %v2846, %v2848
        %v2850 = vunpack.c.h.bf16 %v2470
        %v2851 = vunpack.c.l.bf16 %v2470
        %v2852 = vrcp.pop %v2850
        %v2853 = vmul.f32 %v2519, %v2852
        %v2854 = vrcp.pop %v2851
        %v2855 = vmul.f32 %v2520, %v2854
        %v2856 = vpack.c.bf16 %v2853, %v2855
        %v2857 = vunpack.c.h.bf16 %v2471
        %v2858 = vunpack.c.l.bf16 %v2471
        %v2859 = vrcp.pop %v2857
        %v2860 = vmul.f32 %v2519, %v2859
        %v2861 = vrcp.pop %v2858
        %v2862 = vmul.f32 %v2520, %v2861
        %v2863 = vpack.c.bf16 %v2860, %v2862
        %v2864 = vunpack.c.h.bf16 %v2472
        %v2865 = vunpack.c.l.bf16 %v2472
        %v2866 = vrcp.pop %v2864
        %v2867 = vmul.f32 %v2519, %v2866
        %v2868 = vrcp.pop %v2865
        %v2869 = vmul.f32 %v2520, %v2868
        %v2870 = vpack.c.bf16 %v2867, %v2869
        %v2871 = vunpack.c.h.bf16 %v2473
        %v2872 = vunpack.c.l.bf16 %v2473
        %v2873 = vrcp.pop %v2871
        %v2874 = vmul.f32 %v2519, %v2873
        %v2875 = vrcp.pop %v2872
        %v2876 = vmul.f32 %v2520, %v2875
        %v2877 = vpack.c.bf16 %v2874, %v2876
        %v2878 = vunpack.c.h.bf16 %v2474
        %v2879 = vunpack.c.l.bf16 %v2474
        %v2880 = vrcp.pop %v2878
        %v2881 = vmul.f32 %v2519, %v2880
        %v2882 = vrcp.pop %v2879
        %v2883 = vmul.f32 %v2520, %v2882
        %v2884 = vpack.c.bf16 %v2881, %v2883
        %v2885 = vunpack.c.h.bf16 %v2475
        %v2886 = vunpack.c.l.bf16 %v2475
        %v2887 = vrcp.pop %v2885
        %v2888 = vmul.f32 %v2519, %v2887
        %v2889 = vrcp.pop %v2886
        %v2890 = vmul.f32 %v2520, %v2889
        %v2891 = vpack.c.bf16 %v2888, %v2890
        %v2892 = vunpack.c.h.bf16 %v2476
        %v2893 = vunpack.c.l.bf16 %v2476
        %v2894 = vrcp.pop %v2892
        %v2895 = vmul.f32 %v2519, %v2894
        %v2896 = vrcp.pop %v2893
        %v2897 = vmul.f32 %v2520, %v2896
        %v2898 = vpack.c.bf16 %v2895, %v2897
        %v2899 = vunpack.c.h.bf16 %v2477
        %v2900 = vunpack.c.l.bf16 %v2477
        %v2901 = vrcp.pop %v2899
        %v2902 = vmul.f32 %v2519, %v2901
        %v2903 = vrcp.pop %v2900
        %v2904 = vmul.f32 %v2520, %v2903
        %v2905 = vpack.c.bf16 %v2902, %v2904
        %v2906 = vunpack.c.h.bf16 %v2478
        %v2907 = vunpack.c.l.bf16 %v2478
        %v2908 = vrcp.pop %v2906
        %v2909 = vmul.f32 %v2519, %v2908
        %v2910 = vrcp.pop %v2907
        %v2911 = vmul.f32 %v2520, %v2910
        %v2912 = vpack.c.bf16 %v2909, %v2911
        %v2913 = vunpack.c.h.bf16 %v2479
        %v2914 = vunpack.c.l.bf16 %v2479
        %v2915 = vrcp.pop %v2913
        %v2916 = vmul.f32 %v2519, %v2915
        %v2917 = vrcp.pop %v2914
        %v2918 = vmul.f32 %v2520, %v2917
        %v2919 = vpack.c.bf16 %v2916, %v2918
        %v2920 = vunpack.c.h.bf16 %v2480
        %v2921 = vunpack.c.l.bf16 %v2480
        %v2922 = vrcp.pop %v2920
        %v2923 = vmul.f32 %v2519, %v2922
        %v2924 = vrcp.pop %v2921
        %v2925 = vmul.f32 %v2520, %v2924
        %v2926 = vpack.c.bf16 %v2923, %v2925
        %v2927 = vunpack.c.h.bf16 %v2481
        %v2928 = vunpack.c.l.bf16 %v2481
        %v2929 = vrcp.pop %v2927
        %v2930 = vmul.f32 %v2519, %v2929
        %v2931 = vrcp.pop %v2928
        %v2932 = vmul.f32 %v2520, %v2931
        %v2933 = vpack.c.bf16 %v2930, %v2932
        %v2934 = vunpack.c.h.bf16 %v2482
        %v2935 = vunpack.c.l.bf16 %v2482
        %v2936 = vrcp.pop %v2934
        %v2937 = vmul.f32 %v2519, %v2936
        %v2938 = vrcp.pop %v2935
        %v2939 = vmul.f32 %v2520, %v2938
        %v2940 = vpack.c.bf16 %v2937, %v2939
        %v2941 = vunpack.c.h.bf16 %v2483
        %v2942 = vunpack.c.l.bf16 %v2483
        %v2943 = vrcp.pop %v2941
        %v2944 = vmul.f32 %v2519, %v2943
        %v2945 = vrcp.pop %v2942
        %v2946 = vmul.f32 %v2520, %v2945
        %v2947 = vpack.c.bf16 %v2944, %v2946
        %v2948 = vunpack.c.h.bf16 %v2484
        %v2949 = vunpack.c.l.bf16 %v2484
        %v2950 = vrcp.pop %v2948
        %v2951 = vmul.f32 %v2519, %v2950
        %v2952 = vrcp.pop %v2949
        %v2953 = vmul.f32 %v2520, %v2952
        %v2954 = vpack.c.bf16 %v2951, %v2953
        %v2955 = vunpack.c.h.bf16 %v2485
        %v2956 = vunpack.c.l.bf16 %v2485
        %v2957 = vrcp.pop %v2955
        %v2958 = vmul.f32 %v2519, %v2957
        %v2959 = vrcp.pop %v2956
        %v2960 = vmul.f32 %v2520, %v2959
        %v2961 = vpack.c.bf16 %v2958, %v2960
        %v2962 = vunpack.c.h.bf16 %v2486
        %v2963 = vunpack.c.l.bf16 %v2486
        %v2964 = vrcp.pop %v2962
        %v2965 = vmul.f32 %v2519, %v2964
        %v2966 = vrcp.pop %v2963
        %v2967 = vmul.f32 %v2520, %v2966
        %v2968 = vpack.c.bf16 %v2965, %v2967
        %v2969 = vunpack.c.h.bf16 %v2487
        %v2970 = vunpack.c.l.bf16 %v2487
        %v2971 = vrcp.pop %v2969
        %v2972 = vmul.f32 %v2519, %v2971
        %v2973 = vrcp.pop %v2970
        %v2974 = vmul.f32 %v2520, %v2973
        %v2975 = vpack.c.bf16 %v2972, %v2974
        %v2976 = vunpack.c.h.bf16 %v2488
        %v2977 = vunpack.c.l.bf16 %v2488
        %v2978 = vrcp.pop %v2976
        %v2979 = vmul.f32 %v2519, %v2978
        %v2980 = vrcp.pop %v2977
        %v2981 = vmul.f32 %v2520, %v2980
        %v2982 = vpack.c.bf16 %v2979, %v2981
        %v2983 = vunpack.c.h.bf16 %v2489
        %v2984 = vunpack.c.l.bf16 %v2489
        %v2985 = vrcp.pop %v2983
        %v2986 = vmul.f32 %v2519, %v2985
        %v2987 = vrcp.pop %v2984
        %v2988 = vmul.f32 %v2520, %v2987
        %v2989 = vpack.c.bf16 %v2986, %v2988
        %v2990 = vunpack.c.h.bf16 %v2490
        %v2991 = vunpack.c.l.bf16 %v2490
        %v2992 = vrcp.pop %v2990
        %v2993 = vmul.f32 %v2519, %v2992
        %v2994 = vrcp.pop %v2991
        %v2995 = vmul.f32 %v2520, %v2994
        %v2996 = vpack.c.bf16 %v2993, %v2995
        %v2997 = vunpack.c.h.bf16 %v2491
        %v2998 = vunpack.c.l.bf16 %v2491
        %v2999 = vrcp.pop %v2997
        %v3000 = vmul.f32 %v2519, %v2999
        %v3001 = vrcp.pop %v2998
        %v3002 = vmul.f32 %v2520, %v3001
        %v3003 = vpack.c.bf16 %v3000, %v3002
        %v3004 = vunpack.c.h.bf16 %v2492
        %v3005 = vunpack.c.l.bf16 %v2492
        %v3006 = vrcp.pop %v3004
        %v3007 = vmul.f32 %v2519, %v3006
        %v3008 = vrcp.pop %v3005
        %v3009 = vmul.f32 %v2520, %v3008
        %v3010 = vpack.c.bf16 %v3007, %v3009
        %v3011 = vunpack.c.h.bf16 %v2493
        %v3012 = vunpack.c.l.bf16 %v2493
        %v3013 = vrcp.pop %v3011
        %v3014 = vmul.f32 %v2519, %v3013
        %v3015 = vrcp.pop %v3012
        %v3016 = vmul.f32 %v2520, %v3015
        %v3017 = vpack.c.bf16 %v3014, %v3016
        %v3018 = vunpack.c.h.bf16 %v2494
        %v3019 = vunpack.c.l.bf16 %v2494
        %v3020 = vrcp.pop %v3018
        %v3021 = vmul.f32 %v2519, %v3020
        %v3022 = vrcp.pop %v3019
        %v3023 = vmul.f32 %v2520, %v3022
        %v3024 = vpack.c.bf16 %v3021, %v3023
        %v3025 = vunpack.c.h.bf16 %v2495
        %v3026 = vunpack.c.l.bf16 %v2495
        %v3027 = vrcp.pop %v3025
        %v3028 = vmul.f32 %v2519, %v3027
        %v3029 = vrcp.pop %v3026
        %v3030 = vmul.f32 %v2520, %v3029
        %v3031 = vpack.c.bf16 %v3028, %v3030
        %v3032 = vunpack.c.h.bf16 %v2496
        %v3033 = vunpack.c.l.bf16 %v2496
        %v3034 = vrcp.pop %v3032
        %v3035 = vmul.f32 %v2519, %v3034
        %v3036 = vrcp.pop %v3033
        %v3037 = vmul.f32 %v2520, %v3036
        %v3038 = vpack.c.bf16 %v3035, %v3037
        %v3039 = vunpack.c.h.bf16 %v2497
        %v3040 = vunpack.c.l.bf16 %v2497
        %v3041 = vrcp.pop %v3039
        %v3042 = vmul.f32 %v2519, %v3041
        %v3043 = vrcp.pop %v3040
        %v3044 = vmul.f32 %v2520, %v3043
        %v3045 = vpack.c.bf16 %v3042, %v3044
        %v3046 = vunpack.c.h.bf16 %v2498
        %v3047 = vunpack.c.l.bf16 %v2498
        %v3048 = vrcp.pop %v3046
        %v3049 = vmul.f32 %v2519, %v3048
        %v3050 = vrcp.pop %v3047
        %v3051 = vmul.f32 %v2520, %v3050
        %v3052 = vpack.c.bf16 %v3049, %v3051
        %v3053 = vunpack.c.h.bf16 %v2499
        %v3054 = vunpack.c.l.bf16 %v2499
        %v3055 = vrcp.pop %v3053
        %v3056 = vmul.f32 %v2519, %v3055
        %v3057 = vrcp.pop %v3054
        %v3058 = vmul.f32 %v2520, %v3057
        %v3059 = vpack.c.bf16 %v3056, %v3058
        %v3060 = vunpack.c.h.bf16 %v2500
        %v3061 = vunpack.c.l.bf16 %v2500
        %v3062 = vrcp.pop %v3060
        %v3063 = vmul.f32 %v2519, %v3062
        %v3064 = vrcp.pop %v3061
        %v3065 = vmul.f32 %v2520, %v3064
        %v3066 = vpack.c.bf16 %v3063, %v3065
        %v3067 = vunpack.c.h.bf16 %v2501
        %v3068 = vunpack.c.l.bf16 %v2501
        %v3069 = vrcp.pop %v3067
        %v3070 = vmul.f32 %v2519, %v3069
        %v3071 = vrcp.pop %v3068
        %v3072 = vmul.f32 %v2520, %v3071
        %v3073 = vpack.c.bf16 %v3070, %v3072
        %v3074 = vunpack.c.h.bf16 %v2502
        %v3075 = vunpack.c.l.bf16 %v2502
        %v3076 = vrcp.pop %v3074
        %v3077 = vmul.f32 %v2519, %v3076
        %v3078 = vrcp.pop %v3075
        %v3079 = vmul.f32 %v2520, %v3078
        %v3080 = vpack.c.bf16 %v3077, %v3079
        %v3081 = vunpack.c.h.bf16 %v2503
        %v3082 = vunpack.c.l.bf16 %v2503
        %v3083 = vrcp.pop %v3081
        %v3084 = vmul.f32 %v2519, %v3083
        %v3085 = vrcp.pop %v3082
        %v3086 = vmul.f32 %v2520, %v3085
        %v3087 = vpack.c.bf16 %v3084, %v3086
        %v3088 = vunpack.c.h.bf16 %v2504
        %v3089 = vunpack.c.l.bf16 %v2504
        %v3090 = vrcp.pop %v3088
        %v3091 = vmul.f32 %v2519, %v3090
        %v3092 = vrcp.pop %v3089
        %v3093 = vmul.f32 %v2520, %v3092
        %v3094 = vpack.c.bf16 %v3091, %v3093
        %v3095 = vunpack.c.h.bf16 %v2505
        %v3096 = vunpack.c.l.bf16 %v2505
        %v3097 = vrcp.pop %v3095
        %v3098 = vmul.f32 %v2519, %v3097
        %v3099 = vrcp.pop %v3096
        %v3100 = vmul.f32 %v2520, %v3099
        %v3101 = vpack.c.bf16 %v3098, %v3100
        %v3102 = vunpack.c.h.bf16 %v2506
        %v3103 = vunpack.c.l.bf16 %v2506
        %v3104 = vrcp.pop %v3102
        %v3105 = vmul.f32 %v2519, %v3104
        %v3106 = vrcp.pop %v3103
        %v3107 = vmul.f32 %v2520, %v3106
        %v3108 = vpack.c.bf16 %v3105, %v3107
        %v3109 = vunpack.c.h.bf16 %v2507
        %v3110 = vunpack.c.l.bf16 %v2507
        %v3111 = vrcp.pop %v3109
        %v3112 = vmul.f32 %v2519, %v3111
        %v3113 = vrcp.pop %v3110
        %v3114 = vmul.f32 %v2520, %v3113
        %v3115 = vpack.c.bf16 %v3112, %v3114
        %v3116 = vunpack.c.h.bf16 %v2508
        %v3117 = vunpack.c.l.bf16 %v2508
        %v3118 = vrcp.pop %v3116
        %v3119 = vmul.f32 %v2519, %v3118
        %v3120 = vrcp.pop %v3117
        %v3121 = vmul.f32 %v2520, %v3120
        %v3122 = vpack.c.bf16 %v3119, %v3121
        %v3123 = vunpack.c.h.bf16 %v2509
        %v3124 = vunpack.c.l.bf16 %v2509
        %v3125 = vrcp.pop %v3123
        %v3126 = vmul.f32 %v2519, %v3125
        %v3127 = vrcp.pop %v3124
        %v3128 = vmul.f32 %v2520, %v3127
        %v3129 = vpack.c.bf16 %v3126, %v3128
        %v3130 = vunpack.c.h.bf16 %v2510
        %v3131 = vunpack.c.l.bf16 %v2510
        %v3132 = vrcp.pop %v3130
        %v3133 = vmul.f32 %v2519, %v3132
        %v3134 = vrcp.pop %v3131
        %v3135 = vmul.f32 %v2520, %v3134
        %v3136 = vpack.c.bf16 %v3133, %v3135
        %v3137 = vunpack.c.h.bf16 %v2511
        %v3138 = vunpack.c.l.bf16 %v2511
        %v3139 = vrcp.pop %v3137
        %v3140 = vmul.f32 %v2519, %v3139
        %v3141 = vrcp.pop %v3138
        %v3142 = vmul.f32 %v2520, %v3141
        %v3143 = vpack.c.bf16 %v3140, %v3142
        %v3144 = vunpack.c.h.bf16 %v2512
        %v3145 = vunpack.c.l.bf16 %v2512
        %v3146 = vrcp.pop %v3144
        %v3147 = vmul.f32 %v2519, %v3146
        %v3148 = vrcp.pop %v3145
        %v3149 = vmul.f32 %v2520, %v3148
        %v3150 = vpack.c.bf16 %v3147, %v3149
        %v3151 = vunpack.c.h.bf16 %v2513
        %v3152 = vunpack.c.l.bf16 %v2513
        %v3153 = vrcp.pop %v3151
        %v3154 = vmul.f32 %v2519, %v3153
        %v3155 = vrcp.pop %v3152
        %v3156 = vmul.f32 %v2520, %v3155
        %v3157 = vpack.c.bf16 %v3154, %v3156
        %v3158 = vunpack.c.h.bf16 %v2514
        %v3159 = vunpack.c.l.bf16 %v2514
        %v3160 = vrcp.pop %v3158
        %v3161 = vmul.f32 %v2519, %v3160
        %v3162 = vrcp.pop %v3159
        %v3163 = vmul.f32 %v2520, %v3162
        %v3164 = vpack.c.bf16 %v3161, %v3163
        %v3165 = vunpack.c.h.bf16 %v2515
        %v3166 = vunpack.c.l.bf16 %v2515
        %v3167 = vrcp.pop %v3165
        %v3168 = vmul.f32 %v2519, %v3167
        %v3169 = vrcp.pop %v3166
        %v3170 = vmul.f32 %v2520, %v3169
        %v3171 = vpack.c.bf16 %v3168, %v3170
        %v3172 = vunpack.c.h.bf16 %v2516
        %v3173 = vunpack.c.l.bf16 %v2516
        %v3174 = vrcp.pop %v3172
        %v3175 = vmul.f32 %v2519, %v3174
        %v3176 = vrcp.pop %v3173
        %v3177 = vmul.f32 %v2520, %v3176
        %v3178 = vpack.c.bf16 %v3175, %v3177
        %v3179 = vunpack.c.h.bf16 %v2517
        %v3180 = vunpack.c.l.bf16 %v2517
        %v3181 = vrcp.pop %v3179
        %v3182 = vmul.f32 %v2519, %v3181
        %v3183 = vrcp.pop %v3180
        %v3184 = vmul.f32 %v2520, %v3183
        %v3185 = vpack.c.bf16 %v3182, %v3184
        %v3186 = vunpack.c.h.bf16 %v2518
        %v3187 = vunpack.c.l.bf16 %v2518
        %v3188 = vrcp.pop %v3186
        %v3189 = vmul.f32 %v2519, %v3188
        %v3190 = vrcp.pop %v3187
        %v3191 = vmul.f32 %v2520, %v3190
        %v3192 = vpack.c.bf16 %v3189, %v3191
        %v3193 = vunpack.c.l.bf16 %v1335
        %v3194 = vunpack.c.h.bf16 %v1335
        %v3195 = vunpack.c.l.bf16 %v1336
        %v3196 = vunpack.c.h.bf16 %v1336
        %v3197 = vunpack.c.l.bf16 %v1337
        %v3198 = vunpack.c.l.bf16 %v1338
        %v3199 = vunpack.c.h.bf16 %v1338
        %v3200 = vunpack.c.l.bf16 %v1339
        %v3201 = vunpack.c.h.bf16 %v1339
        %v3202 = vunpack.c.l.bf16 %v1340
        %v3203 = vunpack.c.l.bf16 %v1341
        %v3204 = vunpack.c.h.bf16 %v1341
        %v3205 = vunpack.c.l.bf16 %v1342
        %v3206 = vunpack.c.h.bf16 %v1342
        %v3207 = vunpack.c.l.bf16 %v1343
        %v3208 = vunpack.c.l.bf16 %v1344
        %v3209 = vunpack.c.h.bf16 %v1344
        %v3210 = vunpack.c.l.bf16 %v1345
        %v3211 = vunpack.c.h.bf16 %v1345
        %v3212 = vunpack.c.l.bf16 %v1346
        %v3213 = vunpack.c.l.bf16 %v1347
        %v3214 = vunpack.c.h.bf16 %v1347
        %v3215 = vunpack.c.l.bf16 %v1348
        %v3216 = vunpack.c.h.bf16 %v1348
        %v3217 = vunpack.c.l.bf16 %v1349
        %v3218 = vunpack.c.l.bf16 %v1350
        %v3219 = vunpack.c.h.bf16 %v1350
        %v3220 = vunpack.c.l.bf16 %v1351
        %v3221 = vunpack.c.h.bf16 %v1351
        %v3222 = vunpack.c.l.bf16 %v1352
        %v3223 = vunpack.c.l.bf16 %v1353
        %v3224 = vunpack.c.h.bf16 %v1353
        %v3225 = vunpack.c.l.bf16 %v1354
        %v3226 = vunpack.c.h.bf16 %v1354
        %v3227 = vunpack.c.l.bf16 %v1355
        %v3228 = vunpack.c.l.bf16 %v1356
        %v3229 = vunpack.c.h.bf16 %v1356
        %v3230 = vunpack.c.l.bf16 %v1357
        %v3231 = vunpack.c.h.bf16 %v1357
        %v3232 = vunpack.c.l.bf16 %v1358
        %v3233 = vunpack.c.l.bf16 %v1359
        %v3234 = vunpack.c.h.bf16 %v1359
        %v3235 = vunpack.c.l.bf16 %v1360
        %v3236 = vunpack.c.h.bf16 %v1360
        %v3237 = vunpack.c.l.bf16 %v1361
        %v3238 = vunpack.c.l.bf16 %v1362
        %v3239 = vunpack.c.h.bf16 %v1362
        %v3240 = vunpack.c.l.bf16 %v1363
        %v3241 = vunpack.c.h.bf16 %v1363
        %v3242 = vunpack.c.l.bf16 %v1364
        %v3243 = vunpack.c.l.bf16 %v1365
        %v3244 = vunpack.c.h.bf16 %v1365
        %v3245 = vunpack.c.l.bf16 %v1366
        %v3246 = vunpack.c.h.bf16 %v1366
        %v3247 = vunpack.c.l.bf16 %v1367
        %v3248 = vunpack.c.l.bf16 %v1368
        %v3249 = vunpack.c.h.bf16 %v1368
        %v3250 = vunpack.c.l.bf16 %v1369
        %v3251 = vunpack.c.h.bf16 %v1369
        %v3252 = vunpack.c.l.bf16 %v1370
        %v3253 = vunpack.c.l.bf16 %v1371
        %v3254 = vunpack.c.h.bf16 %v1371
        %v3255 = vunpack.c.l.bf16 %v1372
        %v3256 = vunpack.c.h.bf16 %v1372
        %v3257 = vunpack.c.l.bf16 %v1373
        %v3258 = vunpack.c.l.bf16 %v1374
        %v3259 = vunpack.c.h.bf16 %v1374
        %v3260 = vunpack.c.l.bf16 %v1375
        %v3261 = vunpack.c.h.bf16 %v1375
        %v3262 = vunpack.c.l.bf16 %v1376
        %v3263 = vunpack.c.l.bf16 %v1377
        %v3264 = vunpack.c.h.bf16 %v1377
        %v3265 = vunpack.c.l.bf16 %v1378
        %v3266 = vunpack.c.h.bf16 %v1378
        %v3267 = vunpack.c.l.bf16 %v1379
        %v3268 = vunpack.c.l.bf16 %v1380
        %v3269 = vunpack.c.h.bf16 %v1380
        %v3270 = vunpack.c.l.bf16 %v1381
        %v3271 = vunpack.c.h.bf16 %v1381
        %v3272 = vunpack.c.l.bf16 %v1382
        %v3273 = vunpack.c.l.bf16 %v1383
        %v3274 = vunpack.c.h.bf16 %v1383
        %v3275 = vunpack.c.l.bf16 %v1384
        %v3276 = vunpack.c.h.bf16 %v1384
        %v3277 = vunpack.c.l.bf16 %v1385
        %v3278 = vunpack.c.l.bf16 %v1386
        %v3279 = vunpack.c.h.bf16 %v1386
        %v3280 = vunpack.c.l.bf16 %v1387
        %v3281 = vunpack.c.h.bf16 %v1387
        %v3282 = vunpack.c.l.bf16 %v1388
        %v3283 = vunpack.c.l.bf16 %v1389
        %v3284 = vunpack.c.h.bf16 %v1389
        %v3285 = vunpack.c.l.bf16 %v1390
        %v3286 = vunpack.c.h.bf16 %v1390
        %v3287 = vunpack.c.l.bf16 %v1391
        %v3288 = vunpack.c.l.bf16 %v1392
        %v3289 = vunpack.c.h.bf16 %v1392
        %v3290 = vunpack.c.l.bf16 %v1393
        %v3291 = vunpack.c.h.bf16 %v1393
        %v3292 = vunpack.c.l.bf16 %v1394
        %v3293 = vunpack.c.l.bf16 %v1395
        %v3294 = vunpack.c.h.bf16 %v1395
        %v3295 = vunpack.c.l.bf16 %v1396
        %v3296 = vunpack.c.h.bf16 %v1396
        %v3297 = vunpack.c.l.bf16 %v1397
        %v3298 = vunpack.c.l.bf16 %v1398
        %v3299 = vunpack.c.h.bf16 %v1398
        %v3300 = vunpack.c.l.bf16 %v1399
        %v3301 = vunpack.c.h.bf16 %v1399
        %v3302 = vunpack.c.l.bf16 %v1400
        %v3303 = vunpack.c.l.bf16 %v1401
        %v3304 = vunpack.c.h.bf16 %v1401
        %v3305 = vunpack.c.l.bf16 %v1402
        %v3306 = vunpack.c.h.bf16 %v1402
        %v3307 = vunpack.c.l.bf16 %v1403
        %v3308 = vunpack.c.l.bf16 %v1404
        %v3309 = vunpack.c.h.bf16 %v1404
        %v3310 = vunpack.c.l.bf16 %v1405
        %v3311 = vunpack.c.h.bf16 %v1405
        %v3312 = vunpack.c.l.bf16 %v1406
        %v3313 = vunpack.c.l.bf16 %v1407
        %v3314 = vunpack.c.h.bf16 %v1407
        %v3315 = vunpack.c.l.bf16 %v1408
        %v3316 = vunpack.c.h.bf16 %v1408
        %v3317 = vunpack.c.l.bf16 %v1409
        %v3318 = vunpack.c.l.bf16 %v1410
        %v3319 = vunpack.c.h.bf16 %v1410
        %v3320 = vunpack.c.l.bf16 %v1411
        %v3321 = vunpack.c.h.bf16 %v1411
        %v3322 = vunpack.c.l.bf16 %v1412
        %v3323 = vunpack.c.l.bf16 %v1413
        %v3324 = vunpack.c.h.bf16 %v1413
        %v3325 = vunpack.c.l.bf16 %v1414
        %v3326 = vunpack.c.h.bf16 %v1414
        %v3327 = vunpack.c.l.bf16 %v1415
        %v3328 = vunpack.c.l.bf16 %v1416
        %v3329 = vunpack.c.h.bf16 %v1416
        %v3330 = vunpack.c.l.bf16 %v1417
        %v3331 = vunpack.c.h.bf16 %v1417
        %v3332 = vunpack.c.l.bf16 %v1418
        %v3333 = vunpack.c.l.bf16 %v1419
        %v3334 = vunpack.c.h.bf16 %v1419
        %v3335 = vunpack.c.l.bf16 %v1420
        %v3336 = vunpack.c.h.bf16 %v1420
        %v3337 = vunpack.c.l.bf16 %v1421
        %v3338 = vunpack.c.l.bf16 %v1422
        %v3339 = vunpack.c.h.bf16 %v1422
        %v3340 = vunpack.c.l.bf16 %v1423
        %v3341 = vunpack.c.h.bf16 %v1423
        %v3342 = vunpack.c.l.bf16 %v1424
        %v3343 = vunpack.c.l.bf16 %v1425
        %v3344 = vunpack.c.h.bf16 %v1425
        %v3345 = vunpack.c.l.bf16 %v1426
        %v3346 = vunpack.c.h.bf16 %v1426
        %v3347 = vunpack.c.l.bf16 %v1427
        %v3348 = vunpack.c.l.bf16 %v1428
        %v3349 = vunpack.c.h.bf16 %v1428
        %v3350 = vunpack.c.l.bf16 %v1429
        %v3351 = vunpack.c.h.bf16 %v1429
        %v3352 = vunpack.c.l.bf16 %v1430
        %v3353 = vunpack.c.l.bf16 %v2527
        %v3354 = vunpack.c.h.bf16 %v2527
        %v3355 = vunpack.c.l.bf16 %v2534
        %v3356 = vunpack.c.h.bf16 %v2534
        %v3357 = vunpack.c.l.bf16 %v2541
        %v3358 = vunpack.c.l.bf16 %v2548
        %v3359 = vunpack.c.h.bf16 %v2548
        %v3360 = vunpack.c.l.bf16 %v2555
        %v3361 = vunpack.c.h.bf16 %v2555
        %v3362 = vunpack.c.l.bf16 %v2562
        %v3363 = vunpack.c.l.bf16 %v2569
        %v3364 = vunpack.c.h.bf16 %v2569
        %v3365 = vunpack.c.l.bf16 %v2576
        %v3366 = vunpack.c.h.bf16 %v2576
        %v3367 = vunpack.c.l.bf16 %v2583
        %v3368 = vunpack.c.l.bf16 %v2590
        %v3369 = vunpack.c.h.bf16 %v2590
        %v3370 = vunpack.c.l.bf16 %v2597
        %v3371 = vunpack.c.h.bf16 %v2597
        %v3372 = vunpack.c.l.bf16 %v2604
        %v3373 = vunpack.c.l.bf16 %v2611
        %v3374 = vunpack.c.h.bf16 %v2611
        %v3375 = vunpack.c.l.bf16 %v2618
        %v3376 = vunpack.c.h.bf16 %v2618
        %v3377 = vunpack.c.l.bf16 %v2625
        %v3378 = vunpack.c.l.bf16 %v2632
        %v3379 = vunpack.c.h.bf16 %v2632
        %v3380 = vunpack.c.l.bf16 %v2639
        %v3381 = vunpack.c.h.bf16 %v2639
        %v3382 = vunpack.c.l.bf16 %v2646
        %v3383 = vunpack.c.l.bf16 %v2653
        %v3384 = vunpack.c.h.bf16 %v2653
        %v3385 = vunpack.c.l.bf16 %v2660
        %v3386 = vunpack.c.h.bf16 %v2660
        %v3387 = vunpack.c.l.bf16 %v2667
        %v3388 = vunpack.c.l.bf16 %v2674
        %v3389 = vunpack.c.h.bf16 %v2674
        %v3390 = vunpack.c.l.bf16 %v2681
        %v3391 = vunpack.c.h.bf16 %v2681
        %v3392 = vunpack.c.l.bf16 %v2688
        %v3393 = vunpack.c.l.bf16 %v2695
        %v3394 = vunpack.c.h.bf16 %v2695
        %v3395 = vunpack.c.l.bf16 %v2702
        %v3396 = vunpack.c.h.bf16 %v2702
        %v3397 = vunpack.c.l.bf16 %v2709
        %v3398 = vunpack.c.l.bf16 %v2716
        %v3399 = vunpack.c.h.bf16 %v2716
        %v3400 = vunpack.c.l.bf16 %v2723
        %v3401 = vunpack.c.h.bf16 %v2723
        %v3402 = vunpack.c.l.bf16 %v2730
        %v3403 = vunpack.c.l.bf16 %v2737
        %v3404 = vunpack.c.h.bf16 %v2737
        %v3405 = vunpack.c.l.bf16 %v2744
        %v3406 = vunpack.c.h.bf16 %v2744
        %v3407 = vunpack.c.l.bf16 %v2751
        %v3408 = vunpack.c.l.bf16 %v2758
        %v3409 = vunpack.c.h.bf16 %v2758
        %v3410 = vunpack.c.l.bf16 %v2765
        %v3411 = vunpack.c.h.bf16 %v2765
        %v3412 = vunpack.c.l.bf16 %v2772
        %v3413 = vunpack.c.l.bf16 %v2779
        %v3414 = vunpack.c.h.bf16 %v2779
        %v3415 = vunpack.c.l.bf16 %v2786
        %v3416 = vunpack.c.h.bf16 %v2786
        %v3417 = vunpack.c.l.bf16 %v2793
        %v3418 = vunpack.c.l.bf16 %v2800
        %v3419 = vunpack.c.h.bf16 %v2800
        %v3420 = vunpack.c.l.bf16 %v2807
        %v3421 = vunpack.c.h.bf16 %v2807
        %v3422 = vunpack.c.l.bf16 %v2814
        %v3423 = vunpack.c.l.bf16 %v2821
        %v3424 = vunpack.c.h.bf16 %v2821
        %v3425 = vunpack.c.l.bf16 %v2828
        %v3426 = vunpack.c.h.bf16 %v2828
        %v3427 = vunpack.c.l.bf16 %v2835
        %v3428 = vunpack.c.l.bf16 %v2842
        %v3429 = vunpack.c.h.bf16 %v2842
        %v3430 = vunpack.c.l.bf16 %v2849
        %v3431 = vunpack.c.h.bf16 %v2849
        %v3432 = vunpack.c.l.bf16 %v2856
        %v3433 = vunpack.c.l.bf16 %v2863
        %v3434 = vunpack.c.h.bf16 %v2863
        %v3435 = vunpack.c.l.bf16 %v2870
        %v3436 = vunpack.c.h.bf16 %v2870
        %v3437 = vunpack.c.l.bf16 %v2877
        %v3438 = vunpack.c.l.bf16 %v2884
        %v3439 = vunpack.c.h.bf16 %v2884
        %v3440 = vunpack.c.l.bf16 %v2891
        %v3441 = vunpack.c.h.bf16 %v2891
        %v3442 = vunpack.c.l.bf16 %v2898
        %v3443 = vunpack.c.l.bf16 %v2905
        %v3444 = vunpack.c.h.bf16 %v2905
        %v3445 = vunpack.c.l.bf16 %v2912
        %v3446 = vunpack.c.h.bf16 %v2912
        %v3447 = vunpack.c.l.bf16 %v2919
        %v3448 = vunpack.c.l.bf16 %v2926
        %v3449 = vunpack.c.h.bf16 %v2926
        %v3450 = vunpack.c.l.bf16 %v2933
        %v3451 = vunpack.c.h.bf16 %v2933
        %v3452 = vunpack.c.l.bf16 %v2940
        %v3453 = vunpack.c.l.bf16 %v2947
        %v3454 = vunpack.c.h.bf16 %v2947
        %v3455 = vunpack.c.l.bf16 %v2954
        %v3456 = vunpack.c.h.bf16 %v2954
        %v3457 = vunpack.c.l.bf16 %v2961
        %v3458 = vunpack.c.l.bf16 %v2968
        %v3459 = vunpack.c.h.bf16 %v2968
        %v3460 = vunpack.c.l.bf16 %v2975
        %v3461 = vunpack.c.h.bf16 %v2975
        %v3462 = vunpack.c.l.bf16 %v2982
        %v3463 = vunpack.c.l.bf16 %v2989
        %v3464 = vunpack.c.h.bf16 %v2989
        %v3465 = vunpack.c.l.bf16 %v2996
        %v3466 = vunpack.c.h.bf16 %v2996
        %v3467 = vunpack.c.l.bf16 %v3003
        %v3468 = vunpack.c.l.bf16 %v3010
        %v3469 = vunpack.c.h.bf16 %v3010
        %v3470 = vunpack.c.l.bf16 %v3017
        %v3471 = vunpack.c.h.bf16 %v3017
        %v3472 = vunpack.c.l.bf16 %v3024
        %v3473 = vunpack.c.l.bf16 %v3031
        %v3474 = vunpack.c.h.bf16 %v3031
        %v3475 = vunpack.c.l.bf16 %v3038
        %v3476 = vunpack.c.h.bf16 %v3038
        %v3477 = vunpack.c.l.bf16 %v3045
        %v3478 = vunpack.c.l.bf16 %v3052
        %v3479 = vunpack.c.h.bf16 %v3052
        %v3480 = vunpack.c.l.bf16 %v3059
        %v3481 = vunpack.c.h.bf16 %v3059
        %v3482 = vunpack.c.l.bf16 %v3066
        %v3483 = vunpack.c.l.bf16 %v3073
        %v3484 = vunpack.c.h.bf16 %v3073
        %v3485 = vunpack.c.l.bf16 %v3080
        %v3486 = vunpack.c.h.bf16 %v3080
        %v3487 = vunpack.c.l.bf16 %v3087
        %v3488 = vunpack.c.l.bf16 %v3094
        %v3489 = vunpack.c.h.bf16 %v3094
        %v3490 = vunpack.c.l.bf16 %v3101
        %v3491 = vunpack.c.h.bf16 %v3101
        %v3492 = vunpack.c.l.bf16 %v3108
        %v3493 = vunpack.c.l.bf16 %v3115
        %v3494 = vunpack.c.h.bf16 %v3115
        %v3495 = vunpack.c.l.bf16 %v3122
        %v3496 = vunpack.c.h.bf16 %v3122
        %v3497 = vunpack.c.l.bf16 %v3129
        %v3498 = vunpack.c.l.bf16 %v3136
        %v3499 = vunpack.c.h.bf16 %v3136
        %v3500 = vunpack.c.l.bf16 %v3143
        %v3501 = vunpack.c.h.bf16 %v3143
        %v3502 = vunpack.c.l.bf16 %v3150
        %v3503 = vunpack.c.l.bf16 %v3157
        %v3504 = vunpack.c.h.bf16 %v3157
        %v3505 = vunpack.c.l.bf16 %v3164
        %v3506 = vunpack.c.h.bf16 %v3164
        %v3507 = vunpack.c.l.bf16 %v3171
        %v3508 = vunpack.c.l.bf16 %v3178
        %v3509 = vunpack.c.h.bf16 %v3178
        %v3510 = vunpack.c.l.bf16 %v3185
        %v3511 = vunpack.c.h.bf16 %v3185
        %v3512 = vunpack.c.l.bf16 %v3192
        %v3513 = vmul.f32 %v3193, %v3353
        %v3514 = vmul.f32 %v3194, %v3354
        %v3515 = vmul.f32 %v3195, %v3355
        %v3516 = vmul.f32 %v3196, %v3356
        %v3517 = vmul.f32 %v3197, %v3357
        %v3518 = vmul.f32 %v3198, %v3358
        %v3519 = vmul.f32 %v3199, %v3359
        %v3520 = vmul.f32 %v3200, %v3360
        %v3521 = vmul.f32 %v3201, %v3361
        %v3522 = vmul.f32 %v3202, %v3362
        %v3523 = vmul.f32 %v3203, %v3363
        %v3524 = vmul.f32 %v3204, %v3364
        %v3525 = vmul.f32 %v3205, %v3365
        %v3526 = vmul.f32 %v3206, %v3366
        %v3527 = vmul.f32 %v3207, %v3367
        %v3528 = vmul.f32 %v3208, %v3368
        %v3529 = vmul.f32 %v3209, %v3369
        %v3530 = vmul.f32 %v3210, %v3370
        %v3531 = vmul.f32 %v3211, %v3371
        %v3532 = vmul.f32 %v3212, %v3372
        %v3533 = vmul.f32 %v3213, %v3373
        %v3534 = vmul.f32 %v3214, %v3374
        %v3535 = vmul.f32 %v3215, %v3375
        %v3536 = vmul.f32 %v3216, %v3376
        %v3537 = vmul.f32 %v3217, %v3377
        %v3538 = vmul.f32 %v3218, %v3378
        %v3539 = vmul.f32 %v3219, %v3379
        %v3540 = vmul.f32 %v3220, %v3380
        %v3541 = vmul.f32 %v3221, %v3381
        %v3542 = vmul.f32 %v3222, %v3382
        %v3543 = vmul.f32 %v3223, %v3383
        %v3544 = vmul.f32 %v3224, %v3384
        %v3545 = vmul.f32 %v3225, %v3385
        %v3546 = vmul.f32 %v3226, %v3386
        %v3547 = vmul.f32 %v3227, %v3387
        %v3548 = vmul.f32 %v3228, %v3388
        %v3549 = vmul.f32 %v3229, %v3389
        %v3550 = vmul.f32 %v3230, %v3390
        %v3551 = vmul.f32 %v3231, %v3391
        %v3552 = vmul.f32 %v3232, %v3392
        %v3553 = vmul.f32 %v3233, %v3393
        %v3554 = vmul.f32 %v3234, %v3394
        %v3555 = vmul.f32 %v3235, %v3395
        %v3556 = vmul.f32 %v3236, %v3396
        %v3557 = vmul.f32 %v3237, %v3397
        %v3558 = vmul.f32 %v3238, %v3398
        %v3559 = vmul.f32 %v3239, %v3399
        %v3560 = vmul.f32 %v3240, %v3400
        %v3561 = vmul.f32 %v3241, %v3401
        %v3562 = vmul.f32 %v3242, %v3402
        %v3563 = vmul.f32 %v3243, %v3403
        %v3564 = vmul.f32 %v3244, %v3404
        %v3565 = vmul.f32 %v3245, %v3405
        %v3566 = vmul.f32 %v3246, %v3406
        %v3567 = vmul.f32 %v3247, %v3407
        %v3568 = vmul.f32 %v3248, %v3408
        %v3569 = vmul.f32 %v3249, %v3409
        %v3570 = vmul.f32 %v3250, %v3410
        %v3571 = vmul.f32 %v3251, %v3411
        %v3572 = vmul.f32 %v3252, %v3412
        %v3573 = vmul.f32 %v3253, %v3413
        %v3574 = vmul.f32 %v3254, %v3414
        %v3575 = vmul.f32 %v3255, %v3415
        %v3576 = vmul.f32 %v3256, %v3416
        %v3577 = vmul.f32 %v3257, %v3417
        %v3578 = vmul.f32 %v3258, %v3418
        %v3579 = vmul.f32 %v3259, %v3419
        %v3580 = vmul.f32 %v3260, %v3420
        %v3581 = vmul.f32 %v3261, %v3421
        %v3582 = vmul.f32 %v3262, %v3422
        %v3583 = vmul.f32 %v3263, %v3423
        %v3584 = vmul.f32 %v3264, %v3424
        %v3585 = vmul.f32 %v3265, %v3425
        %v3586 = vmul.f32 %v3266, %v3426
        %v3587 = vmul.f32 %v3267, %v3427
        %v3588 = vmul.f32 %v3268, %v3428
        %v3589 = vmul.f32 %v3269, %v3429
        %v3590 = vmul.f32 %v3270, %v3430
        %v3591 = vmul.f32 %v3271, %v3431
        %v3592 = vmul.f32 %v3272, %v3432
        %v3593 = vmul.f32 %v3273, %v3433
        %v3594 = vmul.f32 %v3274, %v3434
        %v3595 = vmul.f32 %v3275, %v3435
        %v3596 = vmul.f32 %v3276, %v3436
        %v3597 = vmul.f32 %v3277, %v3437
        %v3598 = vmul.f32 %v3278, %v3438
        %v3599 = vmul.f32 %v3279, %v3439
        %v3600 = vmul.f32 %v3280, %v3440
        %v3601 = vmul.f32 %v3281, %v3441
        %v3602 = vmul.f32 %v3282, %v3442
        %v3603 = vmul.f32 %v3283, %v3443
        %v3604 = vmul.f32 %v3284, %v3444
        %v3605 = vmul.f32 %v3285, %v3445
        %v3606 = vmul.f32 %v3286, %v3446
        %v3607 = vmul.f32 %v3287, %v3447
        %v3608 = vmul.f32 %v3288, %v3448
        %v3609 = vmul.f32 %v3289, %v3449
        %v3610 = vmul.f32 %v3290, %v3450
        %v3611 = vmul.f32 %v3291, %v3451
        %v3612 = vmul.f32 %v3292, %v3452
        %v3613 = vmul.f32 %v3293, %v3453
        %v3614 = vmul.f32 %v3294, %v3454
        %v3615 = vmul.f32 %v3295, %v3455
        %v3616 = vmul.f32 %v3296, %v3456
        %v3617 = vmul.f32 %v3297, %v3457
        %v3618 = vmul.f32 %v3298, %v3458
        %v3619 = vmul.f32 %v3299, %v3459
        %v3620 = vmul.f32 %v3300, %v3460
        %v3621 = vmul.f32 %v3301, %v3461
        %v3622 = vmul.f32 %v3302, %v3462
        %v3623 = vmul.f32 %v3303, %v3463
        %v3624 = vmul.f32 %v3304, %v3464
        %v3625 = vmul.f32 %v3305, %v3465
        %v3626 = vmul.f32 %v3306, %v3466
        %v3627 = vmul.f32 %v3307, %v3467
        %v3628 = vmul.f32 %v3308, %v3468
        %v3629 = vmul.f32 %v3309, %v3469
        %v3630 = vmul.f32 %v3310, %v3470
        %v3631 = vmul.f32 %v3311, %v3471
        %v3632 = vmul.f32 %v3312, %v3472
        %v3633 = vmul.f32 %v3313, %v3473
        %v3634 = vmul.f32 %v3314, %v3474
        %v3635 = vmul.f32 %v3315, %v3475
        %v3636 = vmul.f32 %v3316, %v3476
        %v3637 = vmul.f32 %v3317, %v3477
        %v3638 = vmul.f32 %v3318, %v3478
        %v3639 = vmul.f32 %v3319, %v3479
        %v3640 = vmul.f32 %v3320, %v3480
        %v3641 = vmul.f32 %v3321, %v3481
        %v3642 = vmul.f32 %v3322, %v3482
        %v3643 = vmul.f32 %v3323, %v3483
        %v3644 = vmul.f32 %v3324, %v3484
        %v3645 = vmul.f32 %v3325, %v3485
        %v3646 = vmul.f32 %v3326, %v3486
        %v3647 = vmul.f32 %v3327, %v3487
        %v3648 = vmul.f32 %v3328, %v3488
        %v3649 = vmul.f32 %v3329, %v3489
        %v3650 = vmul.f32 %v3330, %v3490
        %v3651 = vmul.f32 %v3331, %v3491
        %v3652 = vmul.f32 %v3332, %v3492
        %v3653 = vmul.f32 %v3333, %v3493
        %v3654 = vmul.f32 %v3334, %v3494
        %v3655 = vmul.f32 %v3335, %v3495
        %v3656 = vmul.f32 %v3336, %v3496
        %v3657 = vmul.f32 %v3337, %v3497
        %v3658 = vmul.f32 %v3338, %v3498
        %v3659 = vmul.f32 %v3339, %v3499
        %v3660 = vmul.f32 %v3340, %v3500
        %v3661 = vmul.f32 %v3341, %v3501
        %v3662 = vmul.f32 %v3342, %v3502
        %v3663 = vmul.f32 %v3343, %v3503
        %v3664 = vmul.f32 %v3344, %v3504
        %v3665 = vmul.f32 %v3345, %v3505
        %v3666 = vmul.f32 %v3346, %v3506
        %v3667 = vmul.f32 %v3347, %v3507
        %v3668 = vmul.f32 %v3348, %v3508
        %v3669 = vmul.f32 %v3349, %v3509
        %v3670 = vmul.f32 %v3350, %v3510
        %v3671 = vmul.f32 %v3351, %v3511
        %v3672 = vmul.f32 %v3352, %v3512
        %v3673 = vpack.c.bf16 %v3514, %v3513
        %v3674 = vpack.c.bf16 %v3516, %v3515
        %v3675 = vpack.c.bf16 %v3517, %v3517
        %v3676 = vpack.c.bf16 %v3519, %v3518
        %v3677 = vpack.c.bf16 %v3521, %v3520
        %v3678 = vpack.c.bf16 %v3522, %v3522
        %v3679 = vpack.c.bf16 %v3524, %v3523
        %v3680 = vpack.c.bf16 %v3526, %v3525
        %v3681 = vpack.c.bf16 %v3527, %v3527
        %v3682 = vpack.c.bf16 %v3529, %v3528
        %v3683 = vpack.c.bf16 %v3531, %v3530
        %v3684 = vpack.c.bf16 %v3532, %v3532
        %v3685 = vpack.c.bf16 %v3534, %v3533
        %v3686 = vpack.c.bf16 %v3536, %v3535
        %v3687 = vpack.c.bf16 %v3537, %v3537
        %v3688 = vpack.c.bf16 %v3539, %v3538
        %v3689 = vpack.c.bf16 %v3541, %v3540
        %v3690 = vpack.c.bf16 %v3542, %v3542
        %v3691 = vpack.c.bf16 %v3544, %v3543
        %v3692 = vpack.c.bf16 %v3546, %v3545
        %v3693 = vpack.c.bf16 %v3547, %v3547
        %v3694 = vpack.c.bf16 %v3549, %v3548
        %v3695 = vpack.c.bf16 %v3551, %v3550
        %v3696 = vpack.c.bf16 %v3552, %v3552
        %v3697 = vpack.c.bf16 %v3554, %v3553
        %v3698 = vpack.c.bf16 %v3556, %v3555
        %v3699 = vpack.c.bf16 %v3557, %v3557
        %v3700 = vpack.c.bf16 %v3559, %v3558
        %v3701 = vpack.c.bf16 %v3561, %v3560
        %v3702 = vpack.c.bf16 %v3562, %v3562
        %v3703 = vpack.c.bf16 %v3564, %v3563
        %v3704 = vpack.c.bf16 %v3566, %v3565
        %v3705 = vpack.c.bf16 %v3567, %v3567
        %v3706 = vpack.c.bf16 %v3569, %v3568
        %v3707 = vpack.c.bf16 %v3571, %v3570
        %v3708 = vpack.c.bf16 %v3572, %v3572
        %v3709 = vpack.c.bf16 %v3574, %v3573
        %v3710 = vpack.c.bf16 %v3576, %v3575
        %v3711 = vpack.c.bf16 %v3577, %v3577
        %v3712 = vpack.c.bf16 %v3579, %v3578
        %v3713 = vpack.c.bf16 %v3581, %v3580
        %v3714 = vpack.c.bf16 %v3582, %v3582
        %v3715 = vpack.c.bf16 %v3584, %v3583
        %v3716 = vpack.c.bf16 %v3586, %v3585
        %v3717 = vpack.c.bf16 %v3587, %v3587
        %v3718 = vpack.c.bf16 %v3589, %v3588
        %v3719 = vpack.c.bf16 %v3591, %v3590
        %v3720 = vpack.c.bf16 %v3592, %v3592
        %v3721 = vpack.c.bf16 %v3594, %v3593
        %v3722 = vpack.c.bf16 %v3596, %v3595
        %v3723 = vpack.c.bf16 %v3597, %v3597
        %v3724 = vpack.c.bf16 %v3599, %v3598
        %v3725 = vpack.c.bf16 %v3601, %v3600
        %v3726 = vpack.c.bf16 %v3602, %v3602
        %v3727 = vpack.c.bf16 %v3604, %v3603
        %v3728 = vpack.c.bf16 %v3606, %v3605
        %v3729 = vpack.c.bf16 %v3607, %v3607
        %v3730 = vpack.c.bf16 %v3609, %v3608
        %v3731 = vpack.c.bf16 %v3611, %v3610
        %v3732 = vpack.c.bf16 %v3612, %v3612
        %v3733 = vpack.c.bf16 %v3614, %v3613
        %v3734 = vpack.c.bf16 %v3616, %v3615
        %v3735 = vpack.c.bf16 %v3617, %v3617
        %v3736 = vpack.c.bf16 %v3619, %v3618
        %v3737 = vpack.c.bf16 %v3621, %v3620
        %v3738 = vpack.c.bf16 %v3622, %v3622
        %v3739 = vpack.c.bf16 %v3624, %v3623
        %v3740 = vpack.c.bf16 %v3626, %v3625
        %v3741 = vpack.c.bf16 %v3627, %v3627
        %v3742 = vpack.c.bf16 %v3629, %v3628
        %v3743 = vpack.c.bf16 %v3631, %v3630
        %v3744 = vpack.c.bf16 %v3632, %v3632
        %v3745 = vpack.c.bf16 %v3634, %v3633
        %v3746 = vpack.c.bf16 %v3636, %v3635
        %v3747 = vpack.c.bf16 %v3637, %v3637
        %v3748 = vpack.c.bf16 %v3639, %v3638
        %v3749 = vpack.c.bf16 %v3641, %v3640
        %v3750 = vpack.c.bf16 %v3642, %v3642
        %v3751 = vpack.c.bf16 %v3644, %v3643
        %v3752 = vpack.c.bf16 %v3646, %v3645
        %v3753 = vpack.c.bf16 %v3647, %v3647
        %v3754 = vpack.c.bf16 %v3649, %v3648
        %v3755 = vpack.c.bf16 %v3651, %v3650
        %v3756 = vpack.c.bf16 %v3652, %v3652
        %v3757 = vpack.c.bf16 %v3654, %v3653
        %v3758 = vpack.c.bf16 %v3656, %v3655
        %v3759 = vpack.c.bf16 %v3657, %v3657
        %v3760 = vpack.c.bf16 %v3659, %v3658
        %v3761 = vpack.c.bf16 %v3661, %v3660
        %v3762 = vpack.c.bf16 %v3662, %v3662
        %v3763 = vpack.c.bf16 %v3664, %v3663
        %v3764 = vpack.c.bf16 %v3666, %v3665
        %v3765 = vpack.c.bf16 %v3667, %v3667
        %v3766 = vpack.c.bf16 %v3669, %v3668
        %v3767 = vpack.c.bf16 %v3671, %v3670
        %v3768 = vpack.c.bf16 %v3672, %v3672
        %v3769 = vunpack.c.l.bf16 %v3675
        %v3770 = vunpack.c.l.bf16 %v3678
        %v3771 = vunpack.c.l.bf16 %v3681
        %v3772 = vunpack.c.l.bf16 %v3684
        %v3773 = vunpack.c.l.bf16 %v3687
        %v3774 = vunpack.c.l.bf16 %v3690
        %v3775 = vunpack.c.l.bf16 %v3693
        %v3776 = vunpack.c.l.bf16 %v3696
        %v3777 = vunpack.c.l.bf16 %v3699
        %v3778 = vunpack.c.l.bf16 %v3702
        %v3779 = vunpack.c.l.bf16 %v3705
        %v3780 = vunpack.c.l.bf16 %v3708
        %v3781 = vunpack.c.l.bf16 %v3711
        %v3782 = vunpack.c.l.bf16 %v3714
        %v3783 = vunpack.c.l.bf16 %v3717
        %v3784 = vunpack.c.l.bf16 %v3720
        %v3785 = vunpack.c.l.bf16 %v3723
        %v3786 = vunpack.c.l.bf16 %v3726
        %v3787 = vunpack.c.l.bf16 %v3729
        %v3788 = vunpack.c.l.bf16 %v3732
        %v3789 = vunpack.c.l.bf16 %v3735
        %v3790 = vunpack.c.l.bf16 %v3738
        %v3791 = vunpack.c.l.bf16 %v3741
        %v3792 = vunpack.c.l.bf16 %v3744
        %v3793 = vunpack.c.l.bf16 %v3747
        %v3794 = vunpack.c.l.bf16 %v3750
        %v3795 = vunpack.c.l.bf16 %v3753
        %v3796 = vunpack.c.l.bf16 %v3756
        %v3797 = vunpack.c.l.bf16 %v3759
        %v3798 = vunpack.c.l.bf16 %v3762
        %v3799 = vunpack.c.l.bf16 %v3765
        %v3800 = vunpack.c.l.bf16 %v3768
        %v3801 = vld [vmem:[%s3] sm:$0x1]
        %v3803 = vperm.slane %v3801, 0
        %v3805 = vmul.f32 %v3769, %v3803
        %v3806 = vmul.f32 %v3770, %v3803
        %v3807 = vmul.f32 %v3771, %v3803
        %v3808 = vmul.f32 %v3772, %v3803
        %v3809 = vmul.f32 %v3773, %v3803
        %v3810 = vmul.f32 %v3774, %v3803
        %v3811 = vmul.f32 %v3775, %v3803
        %v3812 = vmul.f32 %v3776, %v3803
        %v3813 = vmul.f32 %v3777, %v3803
        %v3814 = vmul.f32 %v3778, %v3803
        %v3815 = vmul.f32 %v3779, %v3803
        %v3816 = vmul.f32 %v3780, %v3803
        %v3817 = vmul.f32 %v3781, %v3803
        %v3818 = vmul.f32 %v3782, %v3803
        %v3819 = vmul.f32 %v3783, %v3803
        %v3820 = vmul.f32 %v3784, %v3803
        %v3821 = vmul.f32 %v3785, %v3803
        %v3822 = vmul.f32 %v3786, %v3803
        %v3823 = vmul.f32 %v3787, %v3803
        %v3824 = vmul.f32 %v3788, %v3803
        %v3825 = vmul.f32 %v3789, %v3803
        %v3826 = vmul.f32 %v3790, %v3803
        %v3827 = vmul.f32 %v3791, %v3803
        %v3828 = vmul.f32 %v3792, %v3803
        %v3829 = vmul.f32 %v3793, %v3803
        %v3830 = vmul.f32 %v3794, %v3803
        %v3831 = vmul.f32 %v3795, %v3803
        %v3832 = vmul.f32 %v3796, %v3803
        %v3833 = vmul.f32 %v3797, %v3803
        %v3834 = vmul.f32 %v3798, %v3803
        %v3835 = vmul.f32 %v3799, %v3803
        %v3836 = vmul.f32 %v3800, %v3803
        %v3837 = vld [vmem:[%s4] sm:$0x1]
        %v3839 = vperm.slane %v3837, 0
        %v3841 = vadd.f32 %v3805, %v3839
        %v3842 = vadd.f32 %v3806, %v3839
        %v3843 = vadd.f32 %v3807, %v3839
        %v3844 = vadd.f32 %v3808, %v3839
        %v3845 = vadd.f32 %v3809, %v3839
        %v3846 = vadd.f32 %v3810, %v3839
        %v3847 = vadd.f32 %v3811, %v3839
        %v3848 = vadd.f32 %v3812, %v3839
        %v3849 = vadd.f32 %v3813, %v3839
        %v3850 = vadd.f32 %v3814, %v3839
        %v3851 = vadd.f32 %v3815, %v3839
        %v3852 = vadd.f32 %v3816, %v3839
        %v3853 = vadd.f32 %v3817, %v3839
        %v3854 = vadd.f32 %v3818, %v3839
        %v3855 = vadd.f32 %v3819, %v3839
        %v3856 = vadd.f32 %v3820, %v3839
        %v3857 = vadd.f32 %v3821, %v3839
        %v3858 = vadd.f32 %v3822, %v3839
        %v3859 = vadd.f32 %v3823, %v3839
        %v3860 = vadd.f32 %v3824, %v3839
        %v3861 = vadd.f32 %v3825, %v3839
        %v3862 = vadd.f32 %v3826, %v3839
        %v3863 = vadd.f32 %v3827, %v3839
        %v3864 = vadd.f32 %v3828, %v3839
        %v3865 = vadd.f32 %v3829, %v3839
        %v3866 = vadd.f32 %v3830, %v3839
        %v3867 = vadd.f32 %v3831, %v3839
        %v3868 = vadd.f32 %v3832, %v3839
        %v3869 = vadd.f32 %v3833, %v3839
        %v3870 = vadd.f32 %v3834, %v3839
        %v3871 = vadd.f32 %v3835, %v3839
        %v3872 = vadd.f32 %v3836, %v3839
        %v3873 = vld [vmem:[%s5] sm:$0x1]
        %v3875 = vperm.slane %v3873, 0
        %v3877 = vmul.f32 %v3769, %v3875
        %v3878 = vmul.f32 %v3770, %v3875
        %v3879 = vmul.f32 %v3771, %v3875
        %v3880 = vmul.f32 %v3772, %v3875
        %v3881 = vmul.f32 %v3773, %v3875
        %v3882 = vmul.f32 %v3774, %v3875
        %v3883 = vmul.f32 %v3775, %v3875
        %v3884 = vmul.f32 %v3776, %v3875
        %v3885 = vmul.f32 %v3777, %v3875
        %v3886 = vmul.f32 %v3778, %v3875
        %v3887 = vmul.f32 %v3779, %v3875
        %v3888 = vmul.f32 %v3780, %v3875
        %v3889 = vmul.f32 %v3781, %v3875
        %v3890 = vmul.f32 %v3782, %v3875
        %v3891 = vmul.f32 %v3783, %v3875
        %v3892 = vmul.f32 %v3784, %v3875
        %v3893 = vmul.f32 %v3785, %v3875
        %v3894 = vmul.f32 %v3786, %v3875
        %v3895 = vmul.f32 %v3787, %v3875
        %v3896 = vmul.f32 %v3788, %v3875
        %v3897 = vmul.f32 %v3789, %v3875
        %v3898 = vmul.f32 %v3790, %v3875
        %v3899 = vmul.f32 %v3791, %v3875
        %v3900 = vmul.f32 %v3792, %v3875
        %v3901 = vmul.f32 %v3793, %v3875
        %v3902 = vmul.f32 %v3794, %v3875
        %v3903 = vmul.f32 %v3795, %v3875
        %v3904 = vmul.f32 %v3796, %v3875
        %v3905 = vmul.f32 %v3797, %v3875
        %v3906 = vmul.f32 %v3798, %v3875
        %v3907 = vmul.f32 %v3799, %v3875
        %v3908 = vmul.f32 %v3800, %v3875
        %v3909 = vld [vmem:[%s6] sm:$0x1]
        %v3911 = vperm.slane %v3909, 0
        %v3913 = vadd.f32 %v3877, %v3911
        %v3914 = vadd.f32 %v3878, %v3911
        %v3915 = vadd.f32 %v3879, %v3911
        %v3916 = vadd.f32 %v3880, %v3911
        %v3917 = vadd.f32 %v3881, %v3911
        %v3918 = vadd.f32 %v3882, %v3911
        %v3919 = vadd.f32 %v3883, %v3911
        %v3920 = vadd.f32 %v3884, %v3911
        %v3921 = vadd.f32 %v3885, %v3911
        %v3922 = vadd.f32 %v3886, %v3911
        %v3923 = vadd.f32 %v3887, %v3911
        %v3924 = vadd.f32 %v3888, %v3911
        %v3925 = vadd.f32 %v3889, %v3911
        %v3926 = vadd.f32 %v3890, %v3911
        %v3927 = vadd.f32 %v3891, %v3911
        %v3928 = vadd.f32 %v3892, %v3911
        %v3929 = vadd.f32 %v3893, %v3911
        %v3930 = vadd.f32 %v3894, %v3911
        %v3931 = vadd.f32 %v3895, %v3911
        %v3932 = vadd.f32 %v3896, %v3911
        %v3933 = vadd.f32 %v3897, %v3911
        %v3934 = vadd.f32 %v3898, %v3911
        %v3935 = vadd.f32 %v3899, %v3911
        %v3936 = vadd.f32 %v3900, %v3911
        %v3937 = vadd.f32 %v3901, %v3911
        %v3938 = vadd.f32 %v3902, %v3911
        %v3939 = vadd.f32 %v3903, %v3911
        %v3940 = vadd.f32 %v3904, %v3911
        %v3941 = vadd.f32 %v3905, %v3911
        %v3942 = vadd.f32 %v3906, %v3911
        %v3943 = vadd.f32 %v3907, %v3911
        %v3944 = vadd.f32 %v3908, %v3911
        %v3945 = vld [vmem:[#allocation8] sm:$0xff]
        %v3946 = vld [vmem:[#allocation8 + $0x8] sm:$0xff]
        %v3947 = vld [vmem:[#allocation8 + $0x10] sm:$0xff]
        %v3948 = vld [vmem:[#allocation8 + $0x18] sm:$0xff]
        %v3949 = vld [vmem:[#allocation8 + $0x20] sm:$0xff]
        %v3950 = vld [vmem:[#allocation8 + $0x28] sm:$0xff]
        %v3951 = vld [vmem:[#allocation8 + $0x30] sm:$0xff]
        %v3952 = vld [vmem:[#allocation8 + $0x38] sm:$0xff]
        %v3953 = vld [vmem:[#allocation8 + $0x40] sm:$0xff]
        %v3954 = vld [vmem:[#allocation8 + $0x48] sm:$0xff]
        %v3955 = vld [vmem:[#allocation8 + $0x50] sm:$0xff]
        %v3956 = vld [vmem:[#allocation8 + $0x58] sm:$0xff]
        %v3957 = vld [vmem:[#allocation8 + $0x60] sm:$0xff]
        %v3958 = vld [vmem:[#allocation8 + $0x68] sm:$0xff]
        %v3959 = vld [vmem:[#allocation8 + $0x70] sm:$0xff]
        %v3960 = vld [vmem:[#allocation8 + $0x78] sm:$0xff]
        %v3961 = vld [vmem:[#allocation8 + $0x80] sm:$0xff]
        %v3962 = vld [vmem:[#allocation8 + $0x88] sm:$0xff]
        %v3963 = vld [vmem:[#allocation8 + $0x90] sm:$0xff]
        %v3964 = vld [vmem:[#allocation8 + $0x98] sm:$0xff]
        %v3965 = vld [vmem:[#allocation8 + $0xa0] sm:$0xff]
        %v3966 = vld [vmem:[#allocation8 + $0xa8] sm:$0xff]
        %v3967 = vld [vmem:[#allocation8 + $0xb0] sm:$0xff]
        %v3968 = vld [vmem:[#allocation8 + $0xb8] sm:$0xff]
        %v3969 = vld [vmem:[#allocation8 + $0xc0] sm:$0xff]
        %v3970 = vld [vmem:[#allocation8 + $0xc8] sm:$0xff]
        %v3971 = vld [vmem:[#allocation8 + $0xd0] sm:$0xff]
        %v3972 = vld [vmem:[#allocation8 + $0xd8] sm:$0xff]
        %v3973 = vld [vmem:[#allocation8 + $0xe0] sm:$0xff]
        %v3974 = vld [vmem:[#allocation8 + $0xe8] sm:$0xff]
        %v3975 = vld [vmem:[#allocation8 + $0xf0] sm:$0xff]
        %v3976 = vld [vmem:[#allocation8 + $0xf8] sm:$0xff]
        %v3977 = vld [vmem:[#allocation10] sm:$0xff]
        %v3978 = vld [vmem:[#allocation10 + $0x8] sm:$0xff]
        %v3979 = vld [vmem:[#allocation10 + $0x10] sm:$0xff]
        %v3980 = vld [vmem:[#allocation10 + $0x18] sm:$0xff]
        %v3981 = vld [vmem:[#allocation10 + $0x20] sm:$0xff]
        %v3982 = vld [vmem:[#allocation10 + $0x28] sm:$0xff]
        %v3983 = vld [vmem:[#allocation10 + $0x30] sm:$0xff]
        %v3984 = vld [vmem:[#allocation10 + $0x38] sm:$0xff]
        %v3985 = vld [vmem:[#allocation10 + $0x40] sm:$0xff]
        %v3986 = vld [vmem:[#allocation10 + $0x48] sm:$0xff]
        %v3987 = vld [vmem:[#allocation10 + $0x50] sm:$0xff]
        %v3988 = vld [vmem:[#allocation10 + $0x58] sm:$0xff]
        %v3989 = vld [vmem:[#allocation10 + $0x60] sm:$0xff]
        %v3990 = vld [vmem:[#allocation10 + $0x68] sm:$0xff]
        %v3991 = vld [vmem:[#allocation10 + $0x70] sm:$0xff]
        %v3992 = vld [vmem:[#allocation10 + $0x78] sm:$0xff]
        %v3993 = vld [vmem:[#allocation10 + $0x80] sm:$0xff]
        %v3994 = vld [vmem:[#allocation10 + $0x88] sm:$0xff]
        %v3995 = vld [vmem:[#allocation10 + $0x90] sm:$0xff]
        %v3996 = vld [vmem:[#allocation10 + $0x98] sm:$0xff]
        %v3997 = vld [vmem:[#allocation10 + $0xa0] sm:$0xff]
        %v3998 = vld [vmem:[#allocation10 + $0xa8] sm:$0xff]
        %v3999 = vld [vmem:[#allocation10 + $0xb0] sm:$0xff]
        %v4000 = vld [vmem:[#allocation10 + $0xb8] sm:$0xff]
        %v4001 = vld [vmem:[#allocation10 + $0xc0] sm:$0xff]
        %v4002 = vld [vmem:[#allocation10 + $0xc8] sm:$0xff]
        %v4003 = vld [vmem:[#allocation10 + $0xd0] sm:$0xff]
        %v4004 = vld [vmem:[#allocation10 + $0xd8] sm:$0xff]
        %v4005 = vld [vmem:[#allocation10 + $0xe0] sm:$0xff]
        %v4006 = vld [vmem:[#allocation10 + $0xe8] sm:$0xff]
        %v4007 = vld [vmem:[#allocation10 + $0xf0] sm:$0xff]
        %v4008 = vld [vmem:[#allocation10 + $0xf8] sm:$0xff]
        %v4009 = vmul.f32 %v3841, %v3945
        %v4010 = vmul.f32 %v3842, %v3946
        %v4011 = vmul.f32 %v3843, %v3947
        %v4012 = vmul.f32 %v3844, %v3948
        %v4013 = vmul.f32 %v3845, %v3949
        %v4014 = vmul.f32 %v3846, %v3950
        %v4015 = vmul.f32 %v3847, %v3951
        %v4016 = vmul.f32 %v3848, %v3952
        %v4017 = vmul.f32 %v3849, %v3953
        %v4018 = vmul.f32 %v3850, %v3954
        %v4019 = vmul.f32 %v3851, %v3955
        %v4020 = vmul.f32 %v3852, %v3956
        %v4021 = vmul.f32 %v3853, %v3957
        %v4022 = vmul.f32 %v3854, %v3958
        %v4023 = vmul.f32 %v3855, %v3959
        %v4024 = vmul.f32 %v3856, %v3960
        %v4025 = vmul.f32 %v3857, %v3961
        %v4026 = vmul.f32 %v3858, %v3962
        %v4027 = vmul.f32 %v3859, %v3963
        %v4028 = vmul.f32 %v3860, %v3964
        %v4029 = vmul.f32 %v3861, %v3965
        %v4030 = vmul.f32 %v3862, %v3966
        %v4031 = vmul.f32 %v3863, %v3967
        %v4032 = vmul.f32 %v3864, %v3968
        %v4033 = vmul.f32 %v3865, %v3969
        %v4034 = vmul.f32 %v3866, %v3970
        %v4035 = vmul.f32 %v3867, %v3971
        %v4036 = vmul.f32 %v3868, %v3972
        %v4037 = vmul.f32 %v3869, %v3973
        %v4038 = vmul.f32 %v3870, %v3974
        %v4039 = vmul.f32 %v3871, %v3975
        %v4040 = vmul.f32 %v3872, %v3976
        %4041 = vrot.lane.b32.xlu0 %v3841, 64
        %v4042 = vpop.permute.xlu0 %4041
        %4043 = vrot.lane.b32.xlu0 %v3842, 64
        %v4044 = vpop.permute.xlu0 %4043
        %4045 = vrot.lane.b32.xlu0 %v3843, 64
        %v4046 = vpop.permute.xlu0 %4045
        %4047 = vrot.lane.b32.xlu0 %v3844, 64
        %v4048 = vpop.permute.xlu0 %4047
        %4049 = vrot.lane.b32.xlu0 %v3845, 64
        %v4050 = vpop.permute.xlu0 %4049
        %4051 = vrot.lane.b32.xlu0 %v3846, 64
        %v4052 = vpop.permute.xlu0 %4051
        %4053 = vrot.lane.b32.xlu0 %v3847, 64
        %v4054 = vpop.permute.xlu0 %4053
        %4055 = vrot.lane.b32.xlu0 %v3848, 64
        %v4056 = vpop.permute.xlu0 %4055
        %4057 = vrot.lane.b32.xlu0 %v3849, 64
        %v4058 = vpop.permute.xlu0 %4057
        %4059 = vrot.lane.b32.xlu0 %v3850, 64
        %v4060 = vpop.permute.xlu0 %4059
        %4061 = vrot.lane.b32.xlu0 %v3851, 64
        %v4062 = vpop.permute.xlu0 %4061
        %4063 = vrot.lane.b32.xlu0 %v3852, 64
        %v4064 = vpop.permute.xlu0 %4063
        %4065 = vrot.lane.b32.xlu0 %v3853, 64
        %v4066 = vpop.permute.xlu0 %4065
        %4067 = vrot.lane.b32.xlu0 %v3854, 64
        %v4068 = vpop.permute.xlu0 %4067
        %4069 = vrot.lane.b32.xlu0 %v3855, 64
        %v4070 = vpop.permute.xlu0 %4069
        %4071 = vrot.lane.b32.xlu0 %v3856, 64
        %v4072 = vpop.permute.xlu0 %4071
        %4073 = vrot.lane.b32.xlu0 %v3857, 64
        %v4074 = vpop.permute.xlu0 %4073
        %4075 = vrot.lane.b32.xlu0 %v3858, 64
        %v4076 = vpop.permute.xlu0 %4075
        %4077 = vrot.lane.b32.xlu0 %v3859, 64
        %v4078 = vpop.permute.xlu0 %4077
        %4079 = vrot.lane.b32.xlu0 %v3860, 64
        %v4080 = vpop.permute.xlu0 %4079
        %4081 = vrot.lane.b32.xlu0 %v3861, 64
        %v4082 = vpop.permute.xlu0 %4081
        %4083 = vrot.lane.b32.xlu0 %v3862, 64
        %v4084 = vpop.permute.xlu0 %4083
        %4085 = vrot.lane.b32.xlu0 %v3863, 64
        %v4086 = vpop.permute.xlu0 %4085
        %4087 = vrot.lane.b32.xlu0 %v3864, 64
        %v4088 = vpop.permute.xlu0 %4087
        %4089 = vrot.lane.b32.xlu0 %v3865, 64
        %v4090 = vpop.permute.xlu0 %4089
        %4091 = vrot.lane.b32.xlu0 %v3866, 64
        %v4092 = vpop.permute.xlu0 %4091
        %4093 = vrot.lane.b32.xlu0 %v3867, 64
        %v4094 = vpop.permute.xlu0 %4093
        %4095 = vrot.lane.b32.xlu0 %v3868, 64
        %v4096 = vpop.permute.xlu0 %4095
        %4097 = vrot.lane.b32.xlu0 %v3869, 64
        %v4098 = vpop.permute.xlu0 %4097
        %4099 = vrot.lane.b32.xlu0 %v3870, 64
        %v4100 = vpop.permute.xlu0 %4099
        %4101 = vrot.lane.b32.xlu0 %v3871, 64
        %v4102 = vpop.permute.xlu0 %4101
        %4103 = vrot.lane.b32.xlu0 %v3872, 64
        %v4104 = vpop.permute.xlu0 %4103
        %v4105 = vmul.f32 %v4042, %v3977
        %v4106 = vmul.f32 %v4044, %v3978
        %v4107 = vmul.f32 %v4046, %v3979
        %v4108 = vmul.f32 %v4048, %v3980
        %v4109 = vmul.f32 %v4050, %v3981
        %v4110 = vmul.f32 %v4052, %v3982
        %v4111 = vmul.f32 %v4054, %v3983
        %v4112 = vmul.f32 %v4056, %v3984
        %v4113 = vmul.f32 %v4058, %v3985
        %v4114 = vmul.f32 %v4060, %v3986
        %v4115 = vmul.f32 %v4062, %v3987
        %v4116 = vmul.f32 %v4064, %v3988
        %v4117 = vmul.f32 %v4066, %v3989
        %v4118 = vmul.f32 %v4068, %v3990
        %v4119 = vmul.f32 %v4070, %v3991
        %v4120 = vmul.f32 %v4072, %v3992
        %v4121 = vmul.f32 %v4074, %v3993
        %v4122 = vmul.f32 %v4076, %v3994
        %v4123 = vmul.f32 %v4078, %v3995
        %v4124 = vmul.f32 %v4080, %v3996
        %v4125 = vmul.f32 %v4082, %v3997
        %v4126 = vmul.f32 %v4084, %v3998
        %v4127 = vmul.f32 %v4086, %v3999
        %v4128 = vmul.f32 %v4088, %v4000
        %v4129 = vmul.f32 %v4090, %v4001
        %v4130 = vmul.f32 %v4092, %v4002
        %v4131 = vmul.f32 %v4094, %v4003
        %v4132 = vmul.f32 %v4096, %v4004
        %v4133 = vmul.f32 %v4098, %v4005
        %v4134 = vmul.f32 %v4100, %v4006
        %v4135 = vmul.f32 %v4102, %v4007
        %v4136 = vmul.f32 %v4104, %v4008
        %v4137 = vadd.f32 %v4009, %v4105
        %v4138 = vadd.f32 %v4010, %v4106
        %v4139 = vadd.f32 %v4011, %v4107
        %v4140 = vadd.f32 %v4012, %v4108
        %v4141 = vadd.f32 %v4013, %v4109
        %v4142 = vadd.f32 %v4014, %v4110
        %v4143 = vadd.f32 %v4015, %v4111
        %v4144 = vadd.f32 %v4016, %v4112
        %v4145 = vadd.f32 %v4017, %v4113
        %v4146 = vadd.f32 %v4018, %v4114
        %v4147 = vadd.f32 %v4019, %v4115
        %v4148 = vadd.f32 %v4020, %v4116
        %v4149 = vadd.f32 %v4021, %v4117
        %v4150 = vadd.f32 %v4022, %v4118
        %v4151 = vadd.f32 %v4023, %v4119
        %v4152 = vadd.f32 %v4024, %v4120
        %v4153 = vadd.f32 %v4025, %v4121
        %v4154 = vadd.f32 %v4026, %v4122
        %v4155 = vadd.f32 %v4027, %v4123
        %v4156 = vadd.f32 %v4028, %v4124
        %v4157 = vadd.f32 %v4029, %v4125
        %v4158 = vadd.f32 %v4030, %v4126
        %v4159 = vadd.f32 %v4031, %v4127
        %v4160 = vadd.f32 %v4032, %v4128
        %v4161 = vadd.f32 %v4033, %v4129
        %v4162 = vadd.f32 %v4034, %v4130
        %v4163 = vadd.f32 %v4035, %v4131
        %v4164 = vadd.f32 %v4036, %v4132
        %v4165 = vadd.f32 %v4037, %v4133
        %v4166 = vadd.f32 %v4038, %v4134
        %v4167 = vadd.f32 %v4039, %v4135
        %v4168 = vadd.f32 %v4040, %v4136
        %v4169 = vpack.c.bf16 %v4137, %v4137
        %v4170 = vpack.c.bf16 %v4138, %v4138
        %v4171 = vpack.c.bf16 %v4139, %v4139
        %v4172 = vpack.c.bf16 %v4140, %v4140
        %v4173 = vpack.c.bf16 %v4141, %v4141
        %v4174 = vpack.c.bf16 %v4142, %v4142
        %v4175 = vpack.c.bf16 %v4143, %v4143
        %v4176 = vpack.c.bf16 %v4144, %v4144
        %v4177 = vpack.c.bf16 %v4145, %v4145
        %v4178 = vpack.c.bf16 %v4146, %v4146
        %v4179 = vpack.c.bf16 %v4147, %v4147
        %v4180 = vpack.c.bf16 %v4148, %v4148
        %v4181 = vpack.c.bf16 %v4149, %v4149
        %v4182 = vpack.c.bf16 %v4150, %v4150
        %v4183 = vpack.c.bf16 %v4151, %v4151
        %v4184 = vpack.c.bf16 %v4152, %v4152
        %v4185 = vpack.c.bf16 %v4153, %v4153
        %v4186 = vpack.c.bf16 %v4154, %v4154
        %v4187 = vpack.c.bf16 %v4155, %v4155
        %v4188 = vpack.c.bf16 %v4156, %v4156
        %v4189 = vpack.c.bf16 %v4157, %v4157
        %v4190 = vpack.c.bf16 %v4158, %v4158
        %v4191 = vpack.c.bf16 %v4159, %v4159
        %v4192 = vpack.c.bf16 %v4160, %v4160
        %v4193 = vpack.c.bf16 %v4161, %v4161
        %v4194 = vpack.c.bf16 %v4162, %v4162
        %v4195 = vpack.c.bf16 %v4163, %v4163
        %v4196 = vpack.c.bf16 %v4164, %v4164
        %v4197 = vpack.c.bf16 %v4165, %v4165
        %v4198 = vpack.c.bf16 %v4166, %v4166
        %v4199 = vpack.c.bf16 %v4167, %v4167
        %v4200 = vpack.c.bf16 %v4168, %v4168
        %4201 = vst [vmem:[%s544] sm:$0xf] %v4169
        %4202 = vst [vmem:[%s544 + $0x4] sm:$0xf] %v4170
        %4203 = vst [vmem:[%s544 + $0x8] sm:$0xf] %v4171
        %4204 = vst [vmem:[%s544 + $0xc] sm:$0xf] %v4172
        %4205 = vst [vmem:[%s544 + $0x10] sm:$0xf] %v4173
        %4206 = vst [vmem:[%s544 + $0x14] sm:$0xf] %v4174
        %4207 = vst [vmem:[%s544 + $0x18] sm:$0xf] %v4175
        %4208 = vst [vmem:[%s544 + $0x1c] sm:$0xf] %v4176
        %4209 = vst [vmem:[%s544 + $0x20] sm:$0xf] %v4177
        %4210 = vst [vmem:[%s544 + $0x24] sm:$0xf] %v4178
        %4211 = vst [vmem:[%s544 + $0x28] sm:$0xf] %v4179
        %4212 = vst [vmem:[%s544 + $0x2c] sm:$0xf] %v4180
        %4213 = vst [vmem:[%s544 + $0x30] sm:$0xf] %v4181
        %4214 = vst [vmem:[%s544 + $0x34] sm:$0xf] %v4182
        %4215 = vst [vmem:[%s544 + $0x38] sm:$0xf] %v4183
        %4216 = vst [vmem:[%s544 + $0x3c] sm:$0xf] %v4184
        %4217 = vst [vmem:[%s544 + $0x40] sm:$0xf] %v4185
        %4218 = vst [vmem:[%s544 + $0x44] sm:$0xf] %v4186
        %4219 = vst [vmem:[%s544 + $0x48] sm:$0xf] %v4187
        %4220 = vst [vmem:[%s544 + $0x4c] sm:$0xf] %v4188
        %4221 = vst [vmem:[%s544 + $0x50] sm:$0xf] %v4189
        %4222 = vst [vmem:[%s544 + $0x54] sm:$0xf] %v4190
        %4223 = vst [vmem:[%s544 + $0x58] sm:$0xf] %v4191
        %4224 = vst [vmem:[%s544 + $0x5c] sm:$0xf] %v4192
        %4225 = vst [vmem:[%s544 + $0x60] sm:$0xf] %v4193
        %4226 = vst [vmem:[%s544 + $0x64] sm:$0xf] %v4194
        %4227 = vst [vmem:[%s544 + $0x68] sm:$0xf] %v4195
        %4228 = vst [vmem:[%s544 + $0x6c] sm:$0xf] %v4196
        %4229 = vst [vmem:[%s544 + $0x70] sm:$0xf] %v4197
        %4230 = vst [vmem:[%s544 + $0x74] sm:$0xf] %v4198
        %4231 = vst [vmem:[%s544 + $0x78] sm:$0xf] %v4199
        %4232 = vst [vmem:[%s544 + $0x7c] sm:$0xf] %v4200
        %v4233 = vmul.f32 %v3913, %v3945
        %v4234 = vmul.f32 %v3914, %v3946
        %v4235 = vmul.f32 %v3915, %v3947
        %v4236 = vmul.f32 %v3916, %v3948
        %v4237 = vmul.f32 %v3917, %v3949
        %v4238 = vmul.f32 %v3918, %v3950
        %v4239 = vmul.f32 %v3919, %v3951
        %v4240 = vmul.f32 %v3920, %v3952
        %v4241 = vmul.f32 %v3921, %v3953
        %v4242 = vmul.f32 %v3922, %v3954
        %v4243 = vmul.f32 %v3923, %v3955
        %v4244 = vmul.f32 %v3924, %v3956
        %v4245 = vmul.f32 %v3925, %v3957
        %v4246 = vmul.f32 %v3926, %v3958
        %v4247 = vmul.f32 %v3927, %v3959
        %v4248 = vmul.f32 %v3928, %v3960
        %v4249 = vmul.f32 %v3929, %v3961
        %v4250 = vmul.f32 %v3930, %v3962
        %v4251 = vmul.f32 %v3931, %v3963
        %v4252 = vmul.f32 %v3932, %v3964
        %v4253 = vmul.f32 %v3933, %v3965
        %v4254 = vmul.f32 %v3934, %v3966
        %v4255 = vmul.f32 %v3935, %v3967
        %v4256 = vmul.f32 %v3936, %v3968
        %v4257 = vmul.f32 %v3937, %v3969
        %v4258 = vmul.f32 %v3938, %v3970
        %v4259 = vmul.f32 %v3939, %v3971
        %v4260 = vmul.f32 %v3940, %v3972
        %v4261 = vmul.f32 %v3941, %v3973
        %v4262 = vmul.f32 %v3942, %v3974
        %v4263 = vmul.f32 %v3943, %v3975
        %v4264 = vmul.f32 %v3944, %v3976
        %4265 = vrot.lane.b32.xlu0 %v3913, 64
        %v4266 = vpop.permute.xlu0 %4265
        %4267 = vrot.lane.b32.xlu0 %v3914, 64
        %v4268 = vpop.permute.xlu0 %4267
        %4269 = vrot.lane.b32.xlu0 %v3915, 64
        %v4270 = vpop.permute.xlu0 %4269
        %4271 = vrot.lane.b32.xlu0 %v3916, 64
        %v4272 = vpop.permute.xlu0 %4271
        %4273 = vrot.lane.b32.xlu0 %v3917, 64
        %v4274 = vpop.permute.xlu0 %4273
        %4275 = vrot.lane.b32.xlu0 %v3918, 64
        %v4276 = vpop.permute.xlu0 %4275
        %4277 = vrot.lane.b32.xlu0 %v3919, 64
        %v4278 = vpop.permute.xlu0 %4277
        %4279 = vrot.lane.b32.xlu0 %v3920, 64
        %v4280 = vpop.permute.xlu0 %4279
        %4281 = vrot.lane.b32.xlu0 %v3921, 64
        %v4282 = vpop.permute.xlu0 %4281
        %4283 = vrot.lane.b32.xlu0 %v3922, 64
        %v4284 = vpop.permute.xlu0 %4283
        %4285 = vrot.lane.b32.xlu0 %v3923, 64
        %v4286 = vpop.permute.xlu0 %4285
        %4287 = vrot.lane.b32.xlu0 %v3924, 64
        %v4288 = vpop.permute.xlu0 %4287
        %4289 = vrot.lane.b32.xlu0 %v3925, 64
        %v4290 = vpop.permute.xlu0 %4289
        %4291 = vrot.lane.b32.xlu0 %v3926, 64
        %v4292 = vpop.permute.xlu0 %4291
        %4293 = vrot.lane.b32.xlu0 %v3927, 64
        %v4294 = vpop.permute.xlu0 %4293
        %4295 = vrot.lane.b32.xlu0 %v3928, 64
        %v4296 = vpop.permute.xlu0 %4295
        %4297 = vrot.lane.b32.xlu0 %v3929, 64
        %v4298 = vpop.permute.xlu0 %4297
        %4299 = vrot.lane.b32.xlu0 %v3930, 64
        %v4300 = vpop.permute.xlu0 %4299
        %4301 = vrot.lane.b32.xlu0 %v3931, 64
        %v4302 = vpop.permute.xlu0 %4301
        %4303 = vrot.lane.b32.xlu0 %v3932, 64
        %v4304 = vpop.permute.xlu0 %4303
        %4305 = vrot.lane.b32.xlu0 %v3933, 64
        %v4306 = vpop.permute.xlu0 %4305
        %4307 = vrot.lane.b32.xlu0 %v3934, 64
        %v4308 = vpop.permute.xlu0 %4307
        %4309 = vrot.lane.b32.xlu0 %v3935, 64
        %v4310 = vpop.permute.xlu0 %4309
        %4311 = vrot.lane.b32.xlu0 %v3936, 64
        %v4312 = vpop.permute.xlu0 %4311
        %4313 = vrot.lane.b32.xlu0 %v3937, 64
        %v4314 = vpop.permute.xlu0 %4313
        %4315 = vrot.lane.b32.xlu0 %v3938, 64
        %v4316 = vpop.permute.xlu0 %4315
        %4317 = vrot.lane.b32.xlu0 %v3939, 64
        %v4318 = vpop.permute.xlu0 %4317
        %4319 = vrot.lane.b32.xlu0 %v3940, 64
        %v4320 = vpop.permute.xlu0 %4319
        %4321 = vrot.lane.b32.xlu0 %v3941, 64
        %v4322 = vpop.permute.xlu0 %4321
        %4323 = vrot.lane.b32.xlu0 %v3942, 64
        %v4324 = vpop.permute.xlu0 %4323
        %4325 = vrot.lane.b32.xlu0 %v3943, 64
        %v4326 = vpop.permute.xlu0 %4325
        %4327 = vrot.lane.b32.xlu0 %v3944, 64
        %v4328 = vpop.permute.xlu0 %4327
        %v4329 = vmul.f32 %v4266, %v3977
        %v4330 = vmul.f32 %v4268, %v3978
        %v4331 = vmul.f32 %v4270, %v3979
        %v4332 = vmul.f32 %v4272, %v3980
        %v4333 = vmul.f32 %v4274, %v3981
        %v4334 = vmul.f32 %v4276, %v3982
        %v4335 = vmul.f32 %v4278, %v3983
        %v4336 = vmul.f32 %v4280, %v3984
        %v4337 = vmul.f32 %v4282, %v3985
        %v4338 = vmul.f32 %v4284, %v3986
        %v4339 = vmul.f32 %v4286, %v3987
        %v4340 = vmul.f32 %v4288, %v3988
        %v4341 = vmul.f32 %v4290, %v3989
        %v4342 = vmul.f32 %v4292, %v3990
        %v4343 = vmul.f32 %v4294, %v3991
        %v4344 = vmul.f32 %v4296, %v3992
        %v4345 = vmul.f32 %v4298, %v3993
        %v4346 = vmul.f32 %v4300, %v3994
        %v4347 = vmul.f32 %v4302, %v3995
        %v4348 = vmul.f32 %v4304, %v3996
        %v4349 = vmul.f32 %v4306, %v3997
        %v4350 = vmul.f32 %v4308, %v3998
        %v4351 = vmul.f32 %v4310, %v3999
        %v4352 = vmul.f32 %v4312, %v4000
        %v4353 = vmul.f32 %v4314, %v4001
        %v4354 = vmul.f32 %v4316, %v4002
        %v4355 = vmul.f32 %v4318, %v4003
        %v4356 = vmul.f32 %v4320, %v4004
        %v4357 = vmul.f32 %v4322, %v4005
        %v4358 = vmul.f32 %v4324, %v4006
        %v4359 = vmul.f32 %v4326, %v4007
        %v4360 = vmul.f32 %v4328, %v4008
        %v4361 = vadd.f32 %v4233, %v4329
        %v4362 = vadd.f32 %v4234, %v4330
        %v4363 = vadd.f32 %v4235, %v4331
        %v4364 = vadd.f32 %v4236, %v4332
        %v4365 = vadd.f32 %v4237, %v4333
        %v4366 = vadd.f32 %v4238, %v4334
        %v4367 = vadd.f32 %v4239, %v4335
        %v4368 = vadd.f32 %v4240, %v4336
        %v4369 = vadd.f32 %v4241, %v4337
        %v4370 = vadd.f32 %v4242, %v4338
        %v4371 = vadd.f32 %v4243, %v4339
        %v4372 = vadd.f32 %v4244, %v4340
        %v4373 = vadd.f32 %v4245, %v4341
        %v4374 = vadd.f32 %v4246, %v4342
        %v4375 = vadd.f32 %v4247, %v4343
        %v4376 = vadd.f32 %v4248, %v4344
        %v4377 = vadd.f32 %v4249, %v4345
        %v4378 = vadd.f32 %v4250, %v4346
        %v4379 = vadd.f32 %v4251, %v4347
        %v4380 = vadd.f32 %v4252, %v4348
        %v4381 = vadd.f32 %v4253, %v4349
        %v4382 = vadd.f32 %v4254, %v4350
        %v4383 = vadd.f32 %v4255, %v4351
        %v4384 = vadd.f32 %v4256, %v4352
        %v4385 = vadd.f32 %v4257, %v4353
        %v4386 = vadd.f32 %v4258, %v4354
        %v4387 = vadd.f32 %v4259, %v4355
        %v4388 = vadd.f32 %v4260, %v4356
        %v4389 = vadd.f32 %v4261, %v4357
        %v4390 = vadd.f32 %v4262, %v4358
        %v4391 = vadd.f32 %v4263, %v4359
        %v4392 = vadd.f32 %v4264, %v4360
        %v4393 = vpack.c.bf16 %v4361, %v4361
        %v4394 = vpack.c.bf16 %v4362, %v4362
        %v4395 = vpack.c.bf16 %v4363, %v4363
        %v4396 = vpack.c.bf16 %v4364, %v4364
        %v4397 = vpack.c.bf16 %v4365, %v4365
        %v4398 = vpack.c.bf16 %v4366, %v4366
        %v4399 = vpack.c.bf16 %v4367, %v4367
        %v4400 = vpack.c.bf16 %v4368, %v4368
        %v4401 = vpack.c.bf16 %v4369, %v4369
        %v4402 = vpack.c.bf16 %v4370, %v4370
        %v4403 = vpack.c.bf16 %v4371, %v4371
        %v4404 = vpack.c.bf16 %v4372, %v4372
        %v4405 = vpack.c.bf16 %v4373, %v4373
        %v4406 = vpack.c.bf16 %v4374, %v4374
        %v4407 = vpack.c.bf16 %v4375, %v4375
        %v4408 = vpack.c.bf16 %v4376, %v4376
        %v4409 = vpack.c.bf16 %v4377, %v4377
        %v4410 = vpack.c.bf16 %v4378, %v4378
        %v4411 = vpack.c.bf16 %v4379, %v4379
        %v4412 = vpack.c.bf16 %v4380, %v4380
        %v4413 = vpack.c.bf16 %v4381, %v4381
        %v4414 = vpack.c.bf16 %v4382, %v4382
        %v4415 = vpack.c.bf16 %v4383, %v4383
        %v4416 = vpack.c.bf16 %v4384, %v4384
        %v4417 = vpack.c.bf16 %v4385, %v4385
        %v4418 = vpack.c.bf16 %v4386, %v4386
        %v4419 = vpack.c.bf16 %v4387, %v4387
        %v4420 = vpack.c.bf16 %v4388, %v4388
        %v4421 = vpack.c.bf16 %v4389, %v4389
        %v4422 = vpack.c.bf16 %v4390, %v4390
        %v4423 = vpack.c.bf16 %v4391, %v4391
        %v4424 = vpack.c.bf16 %v4392, %v4392
        %4425 = vst [vmem:[%s551] sm:$0xf] %v4393
        %4426 = vst [vmem:[%s551 + $0x4] sm:$0xf] %v4394
        %4427 = vst [vmem:[%s551 + $0x8] sm:$0xf] %v4395
        %4428 = vst [vmem:[%s551 + $0xc] sm:$0xf] %v4396
        %4429 = vst [vmem:[%s551 + $0x10] sm:$0xf] %v4397
        %4430 = vst [vmem:[%s551 + $0x14] sm:$0xf] %v4398
        %4431 = vst [vmem:[%s551 + $0x18] sm:$0xf] %v4399
        %4432 = vst [vmem:[%s551 + $0x1c] sm:$0xf] %v4400
        %4433 = vst [vmem:[%s551 + $0x20] sm:$0xf] %v4401
        %4434 = vst [vmem:[%s551 + $0x24] sm:$0xf] %v4402
        %4435 = vst [vmem:[%s551 + $0x28] sm:$0xf] %v4403
        %4436 = vst [vmem:[%s551 + $0x2c] sm:$0xf] %v4404
        %4437 = vst [vmem:[%s551 + $0x30] sm:$0xf] %v4405
        %4438 = vst [vmem:[%s551 + $0x34] sm:$0xf] %v4406
        %4439 = vst [vmem:[%s551 + $0x38] sm:$0xf] %v4407
        %4440 = vst [vmem:[%s551 + $0x3c] sm:$0xf] %v4408
        %4441 = vst [vmem:[%s551 + $0x40] sm:$0xf] %v4409
        %4442 = vst [vmem:[%s551 + $0x44] sm:$0xf] %v4410
        %4443 = vst [vmem:[%s551 + $0x48] sm:$0xf] %v4411
        %4444 = vst [vmem:[%s551 + $0x4c] sm:$0xf] %v4412
        %4445 = vst [vmem:[%s551 + $0x50] sm:$0xf] %v4413
        %4446 = vst [vmem:[%s551 + $0x54] sm:$0xf] %v4414
        %4447 = vst [vmem:[%s551 + $0x58] sm:$0xf] %v4415
        %4448 = vst [vmem:[%s551 + $0x5c] sm:$0xf] %v4416
        %4449 = vst [vmem:[%s551 + $0x60] sm:$0xf] %v4417
        %4450 = vst [vmem:[%s551 + $0x64] sm:$0xf] %v4418
        %4451 = vst [vmem:[%s551 + $0x68] sm:$0xf] %v4419
        %4452 = vst [vmem:[%s551 + $0x6c] sm:$0xf] %v4420
        %4453 = vst [vmem:[%s551 + $0x70] sm:$0xf] %v4421
        %4454 = vst [vmem:[%s551 + $0x74] sm:$0xf] %v4422
        %4455 = vst [vmem:[%s551 + $0x78] sm:$0xf] %v4423
        %4456 = vst [vmem:[%s551 + $0x7c] sm:$0xf] %v4424
        %4457 = vst [vmem:[%s558] sm:$0xff] %v3674
        %4458 = vst [vmem:[%s558 + $0x8] sm:$0xff] %v3677
        %4459 = vst [vmem:[%s558 + $0x10] sm:$0xff] %v3680
        %4460 = vst [vmem:[%s558 + $0x18] sm:$0xff] %v3683
        %4461 = vst [vmem:[%s558 + $0x20] sm:$0xff] %v3686
        %4462 = vst [vmem:[%s558 + $0x28] sm:$0xff] %v3689
        %4463 = vst [vmem:[%s558 + $0x30] sm:$0xff] %v3692
        %4464 = vst [vmem:[%s558 + $0x38] sm:$0xff] %v3695
        %4465 = vst [vmem:[%s558 + $0x40] sm:$0xff] %v3698
        %4466 = vst [vmem:[%s558 + $0x48] sm:$0xff] %v3701
        %4467 = vst [vmem:[%s558 + $0x50] sm:$0xff] %v3704
        %4468 = vst [vmem:[%s558 + $0x58] sm:$0xff] %v3707
        %4469 = vst [vmem:[%s558 + $0x60] sm:$0xff] %v3710
        %4470 = vst [vmem:[%s558 + $0x68] sm:$0xff] %v3713
        %4471 = vst [vmem:[%s558 + $0x70] sm:$0xff] %v3716
        %4472 = vst [vmem:[%s558 + $0x78] sm:$0xff] %v3719
        %4473 = vst [vmem:[%s558 + $0x80] sm:$0xff] %v3722
        %4474 = vst [vmem:[%s558 + $0x88] sm:$0xff] %v3725
        %4475 = vst [vmem:[%s558 + $0x90] sm:$0xff] %v3728
        %4476 = vst [vmem:[%s558 + $0x98] sm:$0xff] %v3731
        %4477 = vst [vmem:[%s558 + $0xa0] sm:$0xff] %v3734
        %4478 = vst [vmem:[%s558 + $0xa8] sm:$0xff] %v3737
        %4479 = vst [vmem:[%s558 + $0xb0] sm:$0xff] %v3740
        %4480 = vst [vmem:[%s558 + $0xb8] sm:$0xff] %v3743
        %4481 = vst [vmem:[%s558 + $0xc0] sm:$0xff] %v3746
        %4482 = vst [vmem:[%s558 + $0xc8] sm:$0xff] %v3749
        %4483 = vst [vmem:[%s558 + $0xd0] sm:$0xff] %v3752
        %4484 = vst [vmem:[%s558 + $0xd8] sm:$0xff] %v3755
        %4485 = vst [vmem:[%s558 + $0xe0] sm:$0xff] %v3758
        %4486 = vst [vmem:[%s558 + $0xe8] sm:$0xff] %v3761
        %4487 = vst [vmem:[%s558 + $0xf0] sm:$0xff] %v3764
        %4488 = vst [vmem:[%s558 + $0xf8] sm:$0xff] %v3767
        %4489 = vst [vmem:[%s565] sm:$0xff] %v3673
        %4490 = vst [vmem:[%s565 + $0x8] sm:$0xff] %v3676
        %4491 = vst [vmem:[%s565 + $0x10] sm:$0xff] %v3679
        %4492 = vst [vmem:[%s565 + $0x18] sm:$0xff] %v3682
        %4493 = vst [vmem:[%s565 + $0x20] sm:$0xff] %v3685
        %4494 = vst [vmem:[%s565 + $0x28] sm:$0xff] %v3688
        %4495 = vst [vmem:[%s565 + $0x30] sm:$0xff] %v3691
        %4496 = vst [vmem:[%s565 + $0x38] sm:$0xff] %v3694
        %4497 = vst [vmem:[%s565 + $0x40] sm:$0xff] %v3697
        %4498 = vst [vmem:[%s565 + $0x48] sm:$0xff] %v3700
        %4499 = vst [vmem:[%s565 + $0x50] sm:$0xff] %v3703
        %4500 = vst [vmem:[%s565 + $0x58] sm:$0xff] %v3706
        %4501 = vst [vmem:[%s565 + $0x60] sm:$0xff] %v3709
        %4502 = vst [vmem:[%s565 + $0x68] sm:$0xff] %v3712
        %4503 = vst [vmem:[%s565 + $0x70] sm:$0xff] %v3715
        %4504 = vst [vmem:[%s565 + $0x78] sm:$0xff] %v3718
        %4505 = vst [vmem:[%s565 + $0x80] sm:$0xff] %v3721
        %4506 = vst [vmem:[%s565 + $0x88] sm:$0xff] %v3724
        %4507 = vst [vmem:[%s565 + $0x90] sm:$0xff] %v3727
        %4508 = vst [vmem:[%s565 + $0x98] sm:$0xff] %v3730
        %4509 = vst [vmem:[%s565 + $0xa0] sm:$0xff] %v3733
        %4510 = vst [vmem:[%s565 + $0xa8] sm:$0xff] %v3736
        %4511 = vst [vmem:[%s565 + $0xb0] sm:$0xff] %v3739
        %4512 = vst [vmem:[%s565 + $0xb8] sm:$0xff] %v3742
        %4513 = vst [vmem:[%s565 + $0xc0] sm:$0xff] %v3745
        %4514 = vst [vmem:[%s565 + $0xc8] sm:$0xff] %v3748
        %4515 = vst [vmem:[%s565 + $0xd0] sm:$0xff] %v3751
        %4516 = vst [vmem:[%s565 + $0xd8] sm:$0xff] %v3754
        %4517 = vst [vmem:[%s565 + $0xe0] sm:$0xff] %v3757
        %4518 = vst [vmem:[%s565 + $0xe8] sm:$0xff] %v3760
        %4519 = vst [vmem:[%s565 + $0xf0] sm:$0xff] %v3763
        %4520 = vst [vmem:[%s565 + $0xf8] sm:$0xff] %v3766
        %s4521 = sand.u32 %s266, 1
        %s4522 = scalar_lea.sflag [#allocation4], %s4521
        %s4523 = sand.u32 %s266, 1
        %s4524 = smul.addr %s4523, 128
        %s4525 = scalar_lea.vmem [#allocation11], %s4524
        %s4526 = sand.u32 %s38, 1
        %s4527 = scalar_lea.sflag [#allocation13], %s4526
        %s4528 = sand.u32 %s294, 1
        %s4529 = smul.addr %s4528, 128
        %s4530 = scalar_lea.vmem [#allocation12], %s4529
        %s4531 = sand.u32 %s38, 1
        %s4532 = scalar_lea.sflag [#allocation13], %s4531
        %s4533 = sand.u32 %s322, 1
        %s4534 = smul.addr %s4533, 256
        %s4535 = scalar_lea.vmem [#allocation14], %s4534
        %s4536 = sand.u32 %s350, 1
        %s4537 = scalar_lea.sflag [#allocation16], %s4536
        %s4538 = sand.u32 %s350, 1
        %s4539 = smul.addr %s4538, 256
        %s4540 = scalar_lea.vmem [#allocation15], %s4539
        // Predicated region
        $region77: #{tpu_custom_call.1} parent=55 // pred_check
          %p4541 = pneg %p276
        $region78: #{tpu_custom_call.1} parent=55 // pred_check_branch
          %4543 = sbr.rel (%p4541) target = $region80
        $region79: #{tpu_custom_call.1} parent=55 // pred_region
          %s4544 = smul.u32 32, %s43
          %4546 = vsyncadd %s4522, 0
          %s4547 = smul.addr %s42, 32
          %s4548 = sadd.s32 %s4544, %s4547
          %s4549 = smul.addr %s4548, 4
          %s4550 = scalar_lea.hbm %s9, %s4549
          %s4551 = sshll.u32 %s4525, 4
          %s4552 = int_to_ptr.vmem [resolvable:$true] %s4551
          %s4553 = sshll.u32 %s4550, 4
          %s4554 = int_to_ptr.hbm [resolvable:$true] %s4553
          %4559 = dma.vmem_to_hbm [thread:$0]  %s4552, 2048, %s4554, %s4522, 64, 64, 4
        $region80: #{tpu_custom_call.1} parent=55 // pred_fallthru
          _
        // Predicated region
        $region81: #{tpu_custom_call.1} parent=55 // pred_check
          %p4560 = pneg %p304
        $region82: #{tpu_custom_call.1} parent=55 // pred_check_branch
          %4562 = sbr.rel (%p4560) target = $region84
        $region83: #{tpu_custom_call.1} parent=55 // pred_region
          %s4563 = smul.u32 32, %s43
          %4565 = vsyncadd %s4527, 0
          %s4566 = smul.addr %s42, 32
          %s4567 = sadd.s32 %s4563, %s4566
          %s4568 = smul.addr %s4567, 4
          %s4569 = scalar_lea.hbm %s10, %s4568
          %s4570 = sshll.u32 %s4530, 4
          %s4571 = int_to_ptr.vmem [resolvable:$true] %s4570
          %s4572 = sshll.u32 %s4569, 4
          %s4573 = int_to_ptr.hbm [resolvable:$true] %s4572
          %4578 = dma.vmem_to_hbm [thread:$0]  %s4571, 2048, %s4573, %s4527, 64, 64, 4
        $region84: #{tpu_custom_call.1} parent=55 // pred_fallthru
          _
        // Predicated region
        $region85: #{tpu_custom_call.1} parent=55 // pred_check
          %p4579 = pneg %p332
        $region86: #{tpu_custom_call.1} parent=55 // pred_check_branch
          %4581 = sbr.rel (%p4579) target = $region88
        $region87: #{tpu_custom_call.1} parent=55 // pred_region
          %s4582 = smul.u32 32, %s43
          %4584 = vsyncadd %s4532, 0
          %s4585 = smul.addr %s4582, 2
          %s4586 = smul.addr %s42, 64
          %s4587 = sadd.s32 %s4585, %s4586
          %s4588 = smul.addr %s4587, 4
          %s4589 = scalar_lea.hbm %s11, %s4588
          %s4590 = sshll.u32 %s4535, 4
          %s4591 = int_to_ptr.vmem [resolvable:$true] %s4590
          %s4592 = sshll.u32 %s4589, 4
          %s4593 = int_to_ptr.hbm [resolvable:$true] %s4592
          %4598 = dma.vmem_to_hbm [thread:$0]  %s4591, 4096, %s4593, %s4532, 128, 128, 8
        $region88: #{tpu_custom_call.1} parent=55 // pred_fallthru
          _
        // Predicated region
        $region89: #{tpu_custom_call.1} parent=55 // pred_check
          %p4599 = pneg %p360
        $region90: #{tpu_custom_call.1} parent=55 // pred_check_branch
          %4601 = sbr.rel (%p4599) target = $region92
        $region91: #{tpu_custom_call.1} parent=55 // pred_region
          %s4602 = smul.u32 32, %s43
          %4604 = vsyncadd %s4537, 0
          %s4605 = smul.addr %s4602, 2
          %s4606 = smul.addr %s42, 64
          %s4607 = sadd.s32 %s4605, %s4606
          %s4608 = smul.addr %s4607, 4
          %s4609 = scalar_lea.hbm %s12, %s4608
          %s4610 = sshll.u32 %s4540, 4
          %s4611 = int_to_ptr.vmem [resolvable:$true] %s4610
          %s4612 = sshll.u32 %s4609, 4
          %s4613 = int_to_ptr.hbm [resolvable:$true] %s4612
          %4618 = dma.vmem_to_hbm [thread:$0]  %s4611, 4096, %s4613, %s4537, 128, 128, 8
        $region92: #{tpu_custom_call.1} parent=55 // pred_fallthru
          _
      $region56: #{tpu_custom_call.1} parent=5 // pred_fallthru
        _
      %p4619 = scmp.le.s32.totalorder 2, %s33
      // Predicated region
      $region93: #{tpu_custom_call.1} parent=5 // pred_check
        %p4620 = pneg %p4619
      $region94: #{tpu_custom_call.1} parent=5 // pred_check_branch
        %4622 = sbr.rel (%p4620) target = $region96
      $region95: #{tpu_custom_call.1} parent=5 // pred_region
        %s4623 = ssub.s32 %s33, 2
        // Predicated region
        $region97: #{tpu_custom_call.1} parent=95 // pred_check
          %p4624 = pneg %p282
        $region98: #{tpu_custom_call.1} parent=95 // pred_check_branch
          %4626 = sbr.rel (%p4624) target = $region100
        $region99: #{tpu_custom_call.1} parent=95 // pred_region
          %s4627 = sand.u32 %s267, 1
          %s4628 = scalar_lea.sflag [#allocation4], %s4627
          %s4629 = sand.u32 %s267, 1
          %s4630 = smul.addr %s4629, 128
          %s4631 = scalar_lea.vmem [#allocation11], %s4630
          %4633 = dma.done %s4628, 2048
        $region100: #{tpu_custom_call.1} parent=95 // pred_fallthru
          _
        // Predicated region
        $region101: #{tpu_custom_call.1} parent=95 // pred_check
          %p4634 = pneg %p310
        $region102: #{tpu_custom_call.1} parent=95 // pred_check_branch
          %4636 = sbr.rel (%p4634) target = $region104
        $region103: #{tpu_custom_call.1} parent=95 // pred_region
          %s4637 = sand.u32 %s39, 1
          %s4638 = scalar_lea.sflag [#allocation13], %s4637
          %s4639 = sand.u32 %s295, 1
          %s4640 = smul.addr %s4639, 128
          %s4641 = scalar_lea.vmem [#allocation12], %s4640
          %4643 = dma.done %s4638, 2048
        $region104: #{tpu_custom_call.1} parent=95 // pred_fallthru
          _
        // Predicated region
        $region105: #{tpu_custom_call.1} parent=95 // pred_check
          %p4644 = pneg %p338
        $region106: #{tpu_custom_call.1} parent=95 // pred_check_branch
          %4646 = sbr.rel (%p4644) target = $region108
        $region107: #{tpu_custom_call.1} parent=95 // pred_region
          %s4647 = sand.u32 %s39, 1
          %s4648 = scalar_lea.sflag [#allocation13], %s4647
          %s4649 = sand.u32 %s323, 1
          %s4650 = smul.addr %s4649, 256
          %s4651 = scalar_lea.vmem [#allocation14], %s4650
          %4653 = dma.done %s4648, 4096
        $region108: #{tpu_custom_call.1} parent=95 // pred_fallthru
          _
        // Predicated region
        $region109: #{tpu_custom_call.1} parent=95 // pred_check
          %p4654 = pneg %p366
        $region110: #{tpu_custom_call.1} parent=95 // pred_check_branch
          %4656 = sbr.rel (%p4654) target = $region112
        $region111: #{tpu_custom_call.1} parent=95 // pred_region
          %s4657 = sand.u32 %s351, 1
          %s4658 = scalar_lea.sflag [#allocation16], %s4657
          %s4659 = sand.u32 %s351, 1
          %s4660 = smul.addr %s4659, 256
          %s4661 = scalar_lea.vmem [#allocation15], %s4660
          %4663 = dma.done %s4658, 4096
        $region112: #{tpu_custom_call.1} parent=95 // pred_fallthru
          _
      $region96: #{tpu_custom_call.1} parent=5 // pred_fallthru
        _
    $region6: #{tpu_custom_call.1} parent=1 // loop_footer
      %s37 = sadd.s32 1, %s33
    $region7: #{tpu_custom_call.1} parent=1 // loop_footer_branch
      %32 = sbr.rel target = $region3
    $region8: #{tpu_custom_call.1} parent=1 // loop_exit
      _
    %4664 = vsyncpa [#allocation3], 1
    %s4665 = scalar_lea.sflag [#allocation3], 1
    %4666 = vsyncpa %s4665, 1
    %4667 = vsyncpa [#allocation6], 1
    %4668 = vsyncpa [#allocation9], 1
    %4669 = vsyncpa [#allocation4], 1
    %s4670 = scalar_lea.sflag [#allocation4], 1
    %4671 = vsyncpa %s4670, 1
    %4672 = vsyncpa [#allocation13], 1
    %s4673 = scalar_lea.sflag [#allocation13], 1
    %4674 = vsyncpa %s4673, 1
    %4675 = vsyncpa [#allocation16], 1
    %s4676 = scalar_lea.sflag [#allocation16], 1
    %4677 = vsyncpa %s4676, 1

</llo_original>
